<compile_context>
chip_gen: v7x
topology: tpu7x:2x2x1
jax: 0.10.0
libtpu: 0.0.40
codegen_flags: <defaults>
</compile_context>

<pallas_src>
import functools

import jax
import jax.numpy as jnp
from jax.experimental import pallas as pl
from jax.experimental.pallas import tpu as pltpu


# ----------------------------------------------------------------------------
# Config / parameters (mirrors CombinedDecoder.__init__)
# ----------------------------------------------------------------------------
def make_config(*, latent_size, dims, num_class, norm_layers=(), latent_in=(),
                use_tanh=False, use_classifier=False, head_pad=128):
    dims_full = [latent_size + 3] + list(dims) + [2]
    num_layers = len(dims_full)
    assert head_pad % 128 == 0
    assert head_pad >= 2 + (num_class if use_classifier else 0)
    assert (num_layers - 2) not in latent_in, "latent skip into last layer unsupported"
    return dict(dims_full=tuple(dims_full), num_layers=num_layers,
                latent_in=tuple(latent_in), norm_layers=tuple(norm_layers),
                num_class=num_class, use_tanh=use_tanh,
                use_classifier=use_classifier, head_pad=head_pad)


def _init_linear(key, din, dout):
    # nn.Linear default init: U(-1/sqrt(fan_in), 1/sqrt(fan_in))
    k1, k2 = jax.random.split(key)
    lim = 1.0 / (din ** 0.5)
    w = jax.random.uniform(k1, (din, dout), jnp.float32, -lim, lim)
    b = jax.random.uniform(k2, (dout,), jnp.float32, -lim, lim)
    return w, b


def make_params(key, cfg):
    L = cfg["num_layers"]
    dims_full = cfg["dims_full"]
    keys = jax.random.split(key, L)
    params = {}
    for layer in range(L - 1):
        if layer + 1 in cfg["latent_in"]:
            out_dim = dims_full[layer + 1] - dims_full[0]
        else:
            out_dim = dims_full[layer + 1]
        params[f"lin{layer}"] = _init_linear(keys[layer], dims_full[layer], out_dim)
        if layer in cfg["norm_layers"] and layer < L - 2:
            # nn.LayerNorm default affine init (ones / zeros)
            params[f"bn{layer}"] = (jnp.ones((out_dim,), jnp.float32),
                                    jnp.zeros((out_dim,), jnp.float32))
    if cfg["use_classifier"]:
        params["classifier_head"] = _init_linear(keys[L - 1], dims_full[L - 2],
                                                 cfg["num_class"])
    return params


def pack_params_for_kernel(params, cfg, *, weight_dtype=jnp.bfloat16):
    """Flatten params in the exact order the fused kernel consumes them.

    - Weights are cast to bf16 (single-pass MXU); biases / LN params stay f32.
    - latent_in layers: weight split into (W_x, W_in) so the kernel never
      materializes torch.cat([x, input], 1).
    - last layer: lin_last + classifier fused into one 128-lane-padded head.
    """
    L = cfg["num_layers"]
    d0 = cfg["dims_full"][0]
    flat = []
    for layer in range(L - 1):
        w, b = params[f"lin{layer}"]
        if layer == L - 2:
            d_pen = w.shape[0]
            head_w = jnp.zeros((d_pen, cfg["head_pad"]), jnp.float32)
            head_b = jnp.zeros((1, cfg["head_pad"]), jnp.float32)
            head_w = head_w.at[:, 0:2].set(w)
            head_b = head_b.at[0, 0:2].set(b)
            if cfg["use_classifier"]:
                cw, cb = params["classifier_head"]
                head_w = head_w.at[:, 2:2 + cfg["num_class"]].set(cw)
                head_b = head_b.at[0, 2:2 + cfg["num_class"]].set(cb)
            flat += [head_w.astype(weight_dtype), head_b]
        else:
            if layer in cfg["latent_in"]:
                x_dim = w.shape[0] - d0
                flat += [w[:x_dim, :].astype(weight_dtype),
                         w[x_dim:, :].astype(weight_dtype),
                         b.reshape(1, -1)]
            else:
                flat += [w.astype(weight_dtype), b.reshape(1, -1)]
            if layer in cfg["norm_layers"]:
                g, bt = params[f"bn{layer}"]
                flat += [g.reshape(1, -1), bt.reshape(1, -1)]
    return flat


# ----------------------------------------------------------------------------
# Fused Pallas kernel (entire CombinedDecoder.forward for a row tile)
# ----------------------------------------------------------------------------
def make_combined_decoder_kernel(cfg):
    num_layers = cfg["num_layers"]
    latent_in = set(cfg["latent_in"])
    norm_layers = set(cfg["norm_layers"])
    use_tanh = cfg["use_tanh"]

    def kernel(*refs):
        x_ref, o_ref = refs[0], refs[-1]
        prm = iter(refs[1:-1])

        inp = x_ref[...].astype(jnp.float32)                # [TM, latent+3]
        inp_bf = inp.astype(jnp.bfloat16)                   # dot operand only
        x = inp
        for layer in range(num_layers - 1):
            x_bf = x.astype(jnp.bfloat16)                   # MXU operand (bf16 x bf16 -> f32)
            if layer == num_layers - 2:
                # Fused [lin_last(2) | classifier(num_class) | zero pad] head:
                # one MXU matmul, one lane-dense (128-wide) bf16 HBM store.
                w = next(prm)[...]
                b = next(prm)[...]
                head = jnp.dot(x_bf, w, preferred_element_type=jnp.float32) + b
                col = jax.lax.broadcasted_iota(jnp.int32, head.shape, 1)
                sdf = jnp.tanh(head)                        # self.th on SDF cols
                if use_tanh:                                # self.tanh (layer L-2)
                    sdf = jnp.tanh(sdf)
                o_ref[...] = jnp.where(col < 2, sdf, head).astype(o_ref.dtype)
            else:
                if layer in latent_in:
                    # cat([x, input], 1) @ W  ==  x @ W_x + input @ W_in
                    w_x = next(prm)[...]
                    w_in = next(prm)[...]
                    b = next(prm)[...]
                    h = (jnp.dot(x_bf, w_x, preferred_element_type=jnp.float32)
                         + jnp.dot(inp_bf, w_in, preferred_element_type=jnp.float32)
                         + b)
                else:
                    w = next(prm)[...]
                    b = next(prm)[...]
                    h = jnp.dot(x_bf, w, preferred_element_type=jnp.float32) + b
                if layer in norm_layers:                    # nn.LayerNorm, eps=1e-5
                    g = next(prm)[...]
                    beta = next(prm)[...]
                    # one-pass statistics: both XLU reductions are independent
                    inv_n = 1.0 / h.shape[-1]
                    mu = jnp.sum(h, axis=-1, keepdims=True) * inv_n
                    e2 = jnp.sum(h * h, axis=-1, keepdims=True) * inv_n
                    var = e2 - mu * mu
                    h = (h - mu) * jax.lax.rsqrt(var + 1e-5) * g + beta
                x = jnp.maximum(h, 0.0)                     # ReLU (f32)
                # TODO(synk): F.dropout is a training-time no-op here (eval mode).

    return kernel


def _round_up(x, m):
    return ((x + m - 1) // m) * m


def _choose_tiling(m, max_tile_rows):
    """Pick (tile_rows, n_tiles, m_pad).

    - rows padded to a multiple of 16 (bf16 sublane packing of the output tile)
    - tile count kept even when >1 so the parallel grid axis shards across
      both v7x TensorCores; small problems collapse to a single tile.
    """
    m16 = _round_up(max(m, 1), 16)
    n_tiles = -(-m16 // max_tile_rows)
    if n_tiles > 1 and n_tiles % 2 == 1:
        n_tiles += 1
    tile_rows = _round_up(-(-m16 // n_tiles), 16)
    return tile_rows, n_tiles, tile_rows * n_tiles


def combined_decoder_forward(params, inp, *, cfg, max_tile_rows=2048):
    """CombinedDecoder.forward: inp [M, latent+3] -> (sdf_hand, sdf_obj, class)."""
    M, d_in = inp.shape
    assert d_in == cfg["dims_full"][0]

    flat = pack_params_for_kernel(params, cfg)
    kernel = make_combined_decoder_kernel(cfg)
    head_pad = cfg["head_pad"]

    tile_rows, n_tiles, m_pad = _choose_tiling(M, max_tile_rows)
    x = inp if m_pad == M else jnp.pad(inp, ((0, m_pad - M), (0, 0)))

    in_specs = [pl.BlockSpec((tile_rows, d_in), lambda i: (i, 0))]
    in_specs += [pl.BlockSpec(p.shape, lambda i: (0, 0)) for p in flat]

    macs = sum(p.shape[0] * p.shape[1] for p in flat
               if p.ndim == 2 and p.shape[0] > 1)
    # Weights have a grid-invariant index_map -> fetched once (no n_tiles factor).
    param_bytes = sum(int(p.size) * p.dtype.itemsize for p in flat)
    cost = pl.CostEstimate(
        flops=2 * m_pad * macs,
        transcendentals=m_pad * head_pad * (2 if cfg["use_tanh"] else 1),
        bytes_accessed=(4 * m_pad * d_in          # input (f32)
                        + 2 * m_pad * head_pad    # output (bf16)
                        + param_bytes))

    out = pl.pallas_call(
        kernel,
        out_shape=jax.ShapeDtypeStruct((m_pad, head_pad), jnp.bfloat16),
        grid=(n_tiles,),
        in_specs=in_specs,
        out_specs=pl.BlockSpec((tile_rows, head_pad), lambda i: (i, 0)),
        compiler_params=pltpu.CompilerParams(
            dimension_semantics=("parallel",)),
        cost_estimate=cost,
    )(x, *flat)

    sdf_hand = out[:M, 0:1].astype(jnp.float32)
    sdf_obj = out[:M, 1:2].astype(jnp.float32)
    if cfg["use_classifier"]:
        pred = out[:M, 2:2 + cfg["num_class"]].astype(jnp.float32)
    else:
        pred = jnp.zeros((1,), jnp.float32)   # torch returns Tensor([0]).cuda()
    return sdf_hand, sdf_obj, pred


# ----------------------------------------------------------------------------
# Plain-JAX reference (literal transcription of CombinedDecoder.forward, eval)
# ----------------------------------------------------------------------------
def combined_decoder_ref(params, cfg, inp):
    L = cfg["num_layers"]
    x = inp
    pred = None
    for layer in range(L - 1):
        if cfg["use_classifier"] and layer == L - 2:
            cw, cb = params["classifier_head"]
            pred = x @ cw + cb
        if layer in cfg["latent_in"]:
            x = jnp.concatenate([x, inp], axis=1)
        w, b = params[f"lin{layer}"]
        x = x @ w + b
        if layer == L - 2 and cfg["use_tanh"]:
            x = jnp.tanh(x)
        if layer < L - 2:
            if layer in cfg["norm_layers"]:
                g, bt = params[f"bn{layer}"]
                mu = jnp.mean(x, axis=-1, keepdims=True)
                var = jnp.mean(jnp.square(x - mu), axis=-1, keepdims=True)
                x = (x - mu) / jnp.sqrt(var + 1e-5) * g + bt
            x = jnp.maximum(x, 0.0)
    x = jnp.tanh(x)                                        # self.th
    if cfg["use_classifier"]:
        return x[:, 0:1], x[:, 1:2], pred
    return x[:, 0:1], x[:, 1:2], jnp.zeros((1,), jnp.float32)


# ----------------------------------------------------------------------------
if __name__ == "__main__":
    LATENT = 32
    DIMS = [64, 64, 64, 64]          # hidden dims; full dims = [35,64,64,64,64,2]
    NUM_CLASS = 6
    M = 256                          # query points (rows)

    cfg = make_config(latent_size=LATENT, dims=DIMS, num_class=NUM_CLASS,
                      norm_layers=(0, 1, 2, 3), latent_in=(2,),
                      use_tanh=False, use_classifier=True)

    key = jax.random.PRNGKey(0)
    k_p, k_x = jax.random.split(key)
    params = make_params(k_p, cfg)
    x = jax.random.normal(k_x, (M, LATENT + 3), jnp.float32)

    fwd = jax.jit(functools.partial(combined_decoder_forward,
                                    cfg=cfg, max_tile_rows=2048))
    sdf_hand, sdf_obj, logits = fwd(params, x)
    jax.block_until_ready((sdf_hand, sdf_obj, logits))

    assert sdf_hand.shape == (M, 1)
    assert sdf_obj.shape == (M, 1)
    assert logits.shape == (M, NUM_CLASS)

    # Correctness check vs. plain-JAX (f32) transcription of the PyTorch
    # forward.  Kernel uses bf16 MXU operands + bf16 output storage, so the
    # tolerance is set accordingly.
    r_hand, r_obj, r_cls = combined_decoder_ref(params, cfg, x)
    for got, ref in ((sdf_hand, r_hand), (sdf_obj, r_obj), (logits, r_cls)):
        err = float(jnp.max(jnp.abs(got - ref)))
        assert err < 3e-2, f"kernel/reference mismatch: max abs err {err}"

    print("KERNEL_OK")
</pallas_src>

<mosaic_0001>
module attributes {stable_mosaic.version = 11 : i64} {
  func.func @kernel(%arg0: i32, %arg1: memref<256x35xf32, #tpu.memory_space<vmem>>, %arg2: memref<35x64xbf16, #tpu.memory_space<vmem>>, %arg3: memref<1x64xf32, #tpu.memory_space<vmem>>, %arg4: memref<1x64xf32, #tpu.memory_space<vmem>>, %arg5: memref<1x64xf32, #tpu.memory_space<vmem>>, %arg6: memref<64x29xbf16, #tpu.memory_space<vmem>>, %arg7: memref<1x29xf32, #tpu.memory_space<vmem>>, %arg8: memref<1x29xf32, #tpu.memory_space<vmem>>, %arg9: memref<1x29xf32, #tpu.memory_space<vmem>>, %arg10: memref<29x64xbf16, #tpu.memory_space<vmem>>, %arg11: memref<35x64xbf16, #tpu.memory_space<vmem>>, %arg12: memref<1x64xf32, #tpu.memory_space<vmem>>, %arg13: memref<1x64xf32, #tpu.memory_space<vmem>>, %arg14: memref<1x64xf32, #tpu.memory_space<vmem>>, %arg15: memref<64x64xbf16, #tpu.memory_space<vmem>>, %arg16: memref<1x64xf32, #tpu.memory_space<vmem>>, %arg17: memref<1x64xf32, #tpu.memory_space<vmem>>, %arg18: memref<1x64xf32, #tpu.memory_space<vmem>>, %arg19: memref<64x128xbf16, #tpu.memory_space<vmem>>, %arg20: memref<1x128xf32, #tpu.memory_space<vmem>>, %arg21: memref<256x128xbf16, #tpu.memory_space<vmem>>) attributes {dimension_semantics = [#tpu.dimension_semantics<parallel>], iteration_bounds = array<i64: 1>, scalar_prefetch = 0 : i64, scratch_operands = 0 : i64, tpu.core_type = #tpu.core_type<tc>, window_params = [{transform_indices = @transform_0, window_bounds = array<i64: 256, 35>}, {pipeline_mode = #tpu.pipeline_mode<synchronous>, transform_indices = @transform_1, window_bounds = array<i64: 35, 64>}, {pipeline_mode = #tpu.pipeline_mode<synchronous>, transform_indices = @transform_2, window_bounds = array<i64: 1, 64>}, {pipeline_mode = #tpu.pipeline_mode<synchronous>, transform_indices = @transform_3, window_bounds = array<i64: 1, 64>}, {pipeline_mode = #tpu.pipeline_mode<synchronous>, transform_indices = @transform_4, window_bounds = array<i64: 1, 64>}, {pipeline_mode = #tpu.pipeline_mode<synchronous>, transform_indices = @transform_5, window_bounds = array<i64: 64, 29>}, {pipeline_mode = #tpu.pipeline_mode<synchronous>, transform_indices = @transform_6, window_bounds = array<i64: 1, 29>}, {pipeline_mode = #tpu.pipeline_mode<synchronous>, transform_indices = @transform_7, window_bounds = array<i64: 1, 29>}, {pipeline_mode = #tpu.pipeline_mode<synchronous>, transform_indices = @transform_8, window_bounds = array<i64: 1, 29>}, {pipeline_mode = #tpu.pipeline_mode<synchronous>, transform_indices = @transform_9, window_bounds = array<i64: 29, 64>}, {pipeline_mode = #tpu.pipeline_mode<synchronous>, transform_indices = @transform_10, window_bounds = array<i64: 35, 64>}, {pipeline_mode = #tpu.pipeline_mode<synchronous>, transform_indices = @transform_11, window_bounds = array<i64: 1, 64>}, {pipeline_mode = #tpu.pipeline_mode<synchronous>, transform_indices = @transform_12, window_bounds = array<i64: 1, 64>}, {pipeline_mode = #tpu.pipeline_mode<synchronous>, transform_indices = @transform_13, window_bounds = array<i64: 1, 64>}, {pipeline_mode = #tpu.pipeline_mode<synchronous>, transform_indices = @transform_14, window_bounds = array<i64: 64, 64>}, {pipeline_mode = #tpu.pipeline_mode<synchronous>, transform_indices = @transform_15, window_bounds = array<i64: 1, 64>}, {pipeline_mode = #tpu.pipeline_mode<synchronous>, transform_indices = @transform_16, window_bounds = array<i64: 1, 64>}, {pipeline_mode = #tpu.pipeline_mode<synchronous>, transform_indices = @transform_17, window_bounds = array<i64: 1, 64>}, {pipeline_mode = #tpu.pipeline_mode<synchronous>, transform_indices = @transform_18, window_bounds = array<i64: 64, 128>}, {pipeline_mode = #tpu.pipeline_mode<synchronous>, transform_indices = @transform_19, window_bounds = array<i64: 1, 128>}, {transform_indices = @transform_20, window_bounds = array<i64: 256, 128>}]} {
    %c0 = arith.constant 0 : index
    %c0_0 = arith.constant 0 : index
    %0 = vector.load %arg1[%c0, %c0_0] : memref<256x35xf32, #tpu.memory_space<vmem>>, vector<256x35xf32>
    %1 = arith.truncf %0 : vector<256x35xf32> to vector<256x35xbf16>
    %2 = arith.truncf %0 : vector<256x35xf32> to vector<256x35xbf16>
    %c0_1 = arith.constant 0 : index
    %c0_2 = arith.constant 0 : index
    %3 = vector.load %arg2[%c0_1, %c0_2] : memref<35x64xbf16, #tpu.memory_space<vmem>>, vector<35x64xbf16>
    %c0_3 = arith.constant 0 : index
    %c0_4 = arith.constant 0 : index
    %4 = vector.load %arg3[%c0_3, %c0_4] : memref<1x64xf32, #tpu.memory_space<vmem>>, vector<1x64xf32>
    %cst = arith.constant dense<0.000000e+00> : vector<256x64xf32>
    %5 = tpu.matmul %2, %3, %cst {dimension_numbers = #tpu.dot_dimension_numbers<[1], [0], [0], [1], [0, 0, 1, 1], [], []>} : vector<256x35xbf16>, vector<35x64xbf16>, vector<256x64xf32> -> vector<256x64xf32>
    %6 = vector.broadcast %4 : vector<1x64xf32> to vector<256x64xf32>
    %7 = arith.addf %5, %6 : vector<256x64xf32>
    %c0_5 = arith.constant 0 : index
    %c0_6 = arith.constant 0 : index
    %8 = vector.load %arg4[%c0_5, %c0_6] : memref<1x64xf32, #tpu.memory_space<vmem>>, vector<1x64xf32>
    %c0_7 = arith.constant 0 : index
    %c0_8 = arith.constant 0 : index
    %9 = vector.load %arg5[%c0_7, %c0_8] : memref<1x64xf32, #tpu.memory_space<vmem>>, vector<1x64xf32>
    %cst_9 = arith.constant dense<0.000000e+00> : vector<256xf32>
    %10 = vector.multi_reduction <add>, %7, %cst_9 [1] : vector<256x64xf32> to vector<256xf32>
    %11 = vector.shape_cast %10 : vector<256xf32> to vector<256x1xf32>
    %cst_10 = arith.constant 1.562500e-02 : f32
    %12 = vector.broadcast %cst_10 : f32 to vector<256x1xf32>
    %13 = arith.mulf %11, %12 : vector<256x1xf32>
    %14 = arith.mulf %7, %7 : vector<256x64xf32>
    %cst_11 = arith.constant dense<0.000000e+00> : vector<256xf32>
    %15 = vector.multi_reduction <add>, %14, %cst_11 [1] : vector<256x64xf32> to vector<256xf32>
    %16 = vector.shape_cast %15 : vector<256xf32> to vector<256x1xf32>
    %cst_12 = arith.constant 1.562500e-02 : f32
    %17 = vector.broadcast %cst_12 : f32 to vector<256x1xf32>
    %18 = arith.mulf %16, %17 : vector<256x1xf32>
    %19 = arith.mulf %13, %13 : vector<256x1xf32>
    %20 = arith.subf %18, %19 : vector<256x1xf32>
    %21 = vector.broadcast %13 : vector<256x1xf32> to vector<256x64xf32>
    %22 = arith.subf %7, %21 : vector<256x64xf32>
    %cst_13 = arith.constant 9.99999974E-6 : f32
    %23 = vector.broadcast %cst_13 : f32 to vector<256x1xf32>
    %24 = arith.addf %20, %23 : vector<256x1xf32>
    %25 = math.rsqrt %24 : vector<256x1xf32>
    %26 = vector.broadcast %25 : vector<256x1xf32> to vector<256x64xf32>
    %27 = arith.mulf %22, %26 : vector<256x64xf32>
    %28 = vector.broadcast %8 : vector<1x64xf32> to vector<256x64xf32>
    %29 = arith.mulf %27, %28 : vector<256x64xf32>
    %30 = vector.broadcast %9 : vector<1x64xf32> to vector<256x64xf32>
    %31 = arith.addf %29, %30 : vector<256x64xf32>
    %cst_14 = arith.constant 0.000000e+00 : f32
    %32 = vector.broadcast %cst_14 : f32 to vector<256x64xf32>
    %33 = arith.maximumf %31, %32 : vector<256x64xf32>
    %34 = arith.truncf %33 : vector<256x64xf32> to vector<256x64xbf16>
    %c0_15 = arith.constant 0 : index
    %c0_16 = arith.constant 0 : index
    %35 = vector.load %arg6[%c0_15, %c0_16] : memref<64x29xbf16, #tpu.memory_space<vmem>>, vector<64x29xbf16>
    %c0_17 = arith.constant 0 : index
    %c0_18 = arith.constant 0 : index
    %36 = vector.load %arg7[%c0_17, %c0_18] : memref<1x29xf32, #tpu.memory_space<vmem>>, vector<1x29xf32>
    %cst_19 = arith.constant dense<0.000000e+00> : vector<256x29xf32>
    %37 = tpu.matmul %34, %35, %cst_19 {dimension_numbers = #tpu.dot_dimension_numbers<[1], [0], [0], [1], [0, 0, 1, 1], [], []>} : vector<256x64xbf16>, vector<64x29xbf16>, vector<256x29xf32> -> vector<256x29xf32>
    %38 = vector.broadcast %36 : vector<1x29xf32> to vector<256x29xf32>
    %39 = arith.addf %37, %38 : vector<256x29xf32>
    %c0_20 = arith.constant 0 : index
    %c0_21 = arith.constant 0 : index
    %40 = vector.load %arg8[%c0_20, %c0_21] : memref<1x29xf32, #tpu.memory_space<vmem>>, vector<1x29xf32>
    %c0_22 = arith.constant 0 : index
    %c0_23 = arith.constant 0 : index
    %41 = vector.load %arg9[%c0_22, %c0_23] : memref<1x29xf32, #tpu.memory_space<vmem>>, vector<1x29xf32>
    %cst_24 = arith.constant dense<0.000000e+00> : vector<256xf32>
    %42 = vector.multi_reduction <add>, %39, %cst_24 [1] : vector<256x29xf32> to vector<256xf32>
    %43 = vector.shape_cast %42 : vector<256xf32> to vector<256x1xf32>
    %cst_25 = arith.constant 0.0344827585 : f32
    %44 = vector.broadcast %cst_25 : f32 to vector<256x1xf32>
    %45 = arith.mulf %43, %44 : vector<256x1xf32>
    %46 = arith.mulf %39, %39 : vector<256x29xf32>
    %cst_26 = arith.constant dense<0.000000e+00> : vector<256xf32>
    %47 = vector.multi_reduction <add>, %46, %cst_26 [1] : vector<256x29xf32> to vector<256xf32>
    %48 = vector.shape_cast %47 : vector<256xf32> to vector<256x1xf32>
    %cst_27 = arith.constant 0.0344827585 : f32
    %49 = vector.broadcast %cst_27 : f32 to vector<256x1xf32>
    %50 = arith.mulf %48, %49 : vector<256x1xf32>
    %51 = arith.mulf %45, %45 : vector<256x1xf32>
    %52 = arith.subf %50, %51 : vector<256x1xf32>
    %53 = vector.broadcast %45 : vector<256x1xf32> to vector<256x29xf32>
    %54 = arith.subf %39, %53 : vector<256x29xf32>
    %cst_28 = arith.constant 9.99999974E-6 : f32
    %55 = vector.broadcast %cst_28 : f32 to vector<256x1xf32>
    %56 = arith.addf %52, %55 : vector<256x1xf32>
    %57 = math.rsqrt %56 : vector<256x1xf32>
    %58 = vector.broadcast %57 : vector<256x1xf32> to vector<256x29xf32>
    %59 = arith.mulf %54, %58 : vector<256x29xf32>
    %60 = vector.broadcast %40 : vector<1x29xf32> to vector<256x29xf32>
    %61 = arith.mulf %59, %60 : vector<256x29xf32>
    %62 = vector.broadcast %41 : vector<1x29xf32> to vector<256x29xf32>
    %63 = arith.addf %61, %62 : vector<256x29xf32>
    %cst_29 = arith.constant 0.000000e+00 : f32
    %64 = vector.broadcast %cst_29 : f32 to vector<256x29xf32>
    %65 = arith.maximumf %63, %64 : vector<256x29xf32>
    %66 = arith.truncf %65 : vector<256x29xf32> to vector<256x29xbf16>
    %c0_30 = arith.constant 0 : index
    %c0_31 = arith.constant 0 : index
    %67 = vector.load %arg10[%c0_30, %c0_31] : memref<29x64xbf16, #tpu.memory_space<vmem>>, vector<29x64xbf16>
    %c0_32 = arith.constant 0 : index
    %c0_33 = arith.constant 0 : index
    %68 = vector.load %arg11[%c0_32, %c0_33] : memref<35x64xbf16, #tpu.memory_space<vmem>>, vector<35x64xbf16>
    %c0_34 = arith.constant 0 : index
    %c0_35 = arith.constant 0 : index
    %69 = vector.load %arg12[%c0_34, %c0_35] : memref<1x64xf32, #tpu.memory_space<vmem>>, vector<1x64xf32>
    %cst_36 = arith.constant dense<0.000000e+00> : vector<256x64xf32>
    %70 = tpu.matmul %66, %67, %cst_36 {dimension_numbers = #tpu.dot_dimension_numbers<[1], [0], [0], [1], [0, 0, 1, 1], [], []>} : vector<256x29xbf16>, vector<29x64xbf16>, vector<256x64xf32> -> vector<256x64xf32>
    %cst_37 = arith.constant dense<0.000000e+00> : vector<256x64xf32>
    %71 = tpu.matmul %1, %68, %cst_37 {dimension_numbers = #tpu.dot_dimension_numbers<[1], [0], [0], [1], [0, 0, 1, 1], [], []>} : vector<256x35xbf16>, vector<35x64xbf16>, vector<256x64xf32> -> vector<256x64xf32>
    %72 = arith.addf %70, %71 : vector<256x64xf32>
    %73 = vector.broadcast %69 : vector<1x64xf32> to vector<256x64xf32>
    %74 = arith.addf %72, %73 : vector<256x64xf32>
    %c0_38 = arith.constant 0 : index
    %c0_39 = arith.constant 0 : index
    %75 = vector.load %arg13[%c0_38, %c0_39] : memref<1x64xf32, #tpu.memory_space<vmem>>, vector<1x64xf32>
    %c0_40 = arith.constant 0 : index
    %c0_41 = arith.constant 0 : index
    %76 = vector.load %arg14[%c0_40, %c0_41] : memref<1x64xf32, #tpu.memory_space<vmem>>, vector<1x64xf32>
    %cst_42 = arith.constant dense<0.000000e+00> : vector<256xf32>
    %77 = vector.multi_reduction <add>, %74, %cst_42 [1] : vector<256x64xf32> to vector<256xf32>
    %78 = vector.shape_cast %77 : vector<256xf32> to vector<256x1xf32>
    %cst_43 = arith.constant 1.562500e-02 : f32
    %79 = vector.broadcast %cst_43 : f32 to vector<256x1xf32>
    %80 = arith.mulf %78, %79 : vector<256x1xf32>
    %81 = arith.mulf %74, %74 : vector<256x64xf32>
    %cst_44 = arith.constant dense<0.000000e+00> : vector<256xf32>
    %82 = vector.multi_reduction <add>, %81, %cst_44 [1] : vector<256x64xf32> to vector<256xf32>
    %83 = vector.shape_cast %82 : vector<256xf32> to vector<256x1xf32>
    %cst_45 = arith.constant 1.562500e-02 : f32
    %84 = vector.broadcast %cst_45 : f32 to vector<256x1xf32>
    %85 = arith.mulf %83, %84 : vector<256x1xf32>
    %86 = arith.mulf %80, %80 : vector<256x1xf32>
    %87 = arith.subf %85, %86 : vector<256x1xf32>
    %88 = vector.broadcast %80 : vector<256x1xf32> to vector<256x64xf32>
    %89 = arith.subf %74, %88 : vector<256x64xf32>
    %cst_46 = arith.constant 9.99999974E-6 : f32
    %90 = vector.broadcast %cst_46 : f32 to vector<256x1xf32>
    %91 = arith.addf %87, %90 : vector<256x1xf32>
    %92 = math.rsqrt %91 : vector<256x1xf32>
    %93 = vector.broadcast %92 : vector<256x1xf32> to vector<256x64xf32>
    %94 = arith.mulf %89, %93 : vector<256x64xf32>
    %95 = vector.broadcast %75 : vector<1x64xf32> to vector<256x64xf32>
    %96 = arith.mulf %94, %95 : vector<256x64xf32>
    %97 = vector.broadcast %76 : vector<1x64xf32> to vector<256x64xf32>
    %98 = arith.addf %96, %97 : vector<256x64xf32>
    %cst_47 = arith.constant 0.000000e+00 : f32
    %99 = vector.broadcast %cst_47 : f32 to vector<256x64xf32>
    %100 = arith.maximumf %98, %99 : vector<256x64xf32>
    %101 = arith.truncf %100 : vector<256x64xf32> to vector<256x64xbf16>
    %c0_48 = arith.constant 0 : index
    %c0_49 = arith.constant 0 : index
    %102 = vector.load %arg15[%c0_48, %c0_49] : memref<64x64xbf16, #tpu.memory_space<vmem>>, vector<64x64xbf16>
    %c0_50 = arith.constant 0 : index
    %c0_51 = arith.constant 0 : index
    %103 = vector.load %arg16[%c0_50, %c0_51] : memref<1x64xf32, #tpu.memory_space<vmem>>, vector<1x64xf32>
    %cst_52 = arith.constant dense<0.000000e+00> : vector<256x64xf32>
    %104 = tpu.matmul %101, %102, %cst_52 {dimension_numbers = #tpu.dot_dimension_numbers<[1], [0], [0], [1], [0, 0, 1, 1], [], []>} : vector<256x64xbf16>, vector<64x64xbf16>, vector<256x64xf32> -> vector<256x64xf32>
    %105 = vector.broadcast %103 : vector<1x64xf32> to vector<256x64xf32>
    %106 = arith.addf %104, %105 : vector<256x64xf32>
    %c0_53 = arith.constant 0 : index
    %c0_54 = arith.constant 0 : index
    %107 = vector.load %arg17[%c0_53, %c0_54] : memref<1x64xf32, #tpu.memory_space<vmem>>, vector<1x64xf32>
    %c0_55 = arith.constant 0 : index
    %c0_56 = arith.constant 0 : index
    %108 = vector.load %arg18[%c0_55, %c0_56] : memref<1x64xf32, #tpu.memory_space<vmem>>, vector<1x64xf32>
    %cst_57 = arith.constant dense<0.000000e+00> : vector<256xf32>
    %109 = vector.multi_reduction <add>, %106, %cst_57 [1] : vector<256x64xf32> to vector<256xf32>
    %110 = vector.shape_cast %109 : vector<256xf32> to vector<256x1xf32>
    %cst_58 = arith.constant 1.562500e-02 : f32
    %111 = vector.broadcast %cst_58 : f32 to vector<256x1xf32>
    %112 = arith.mulf %110, %111 : vector<256x1xf32>
    %113 = arith.mulf %106, %106 : vector<256x64xf32>
    %cst_59 = arith.constant dense<0.000000e+00> : vector<256xf32>
    %114 = vector.multi_reduction <add>, %113, %cst_59 [1] : vector<256x64xf32> to vector<256xf32>
    %115 = vector.shape_cast %114 : vector<256xf32> to vector<256x1xf32>
    %cst_60 = arith.constant 1.562500e-02 : f32
    %116 = vector.broadcast %cst_60 : f32 to vector<256x1xf32>
    %117 = arith.mulf %115, %116 : vector<256x1xf32>
    %118 = arith.mulf %112, %112 : vector<256x1xf32>
    %119 = arith.subf %117, %118 : vector<256x1xf32>
    %120 = vector.broadcast %112 : vector<256x1xf32> to vector<256x64xf32>
    %121 = arith.subf %106, %120 : vector<256x64xf32>
    %cst_61 = arith.constant 9.99999974E-6 : f32
    %122 = vector.broadcast %cst_61 : f32 to vector<256x1xf32>
    %123 = arith.addf %119, %122 : vector<256x1xf32>
    %124 = math.rsqrt %123 : vector<256x1xf32>
    %125 = vector.broadcast %124 : vector<256x1xf32> to vector<256x64xf32>
    %126 = arith.mulf %121, %125 : vector<256x64xf32>
    %127 = vector.broadcast %107 : vector<1x64xf32> to vector<256x64xf32>
    %128 = arith.mulf %126, %127 : vector<256x64xf32>
    %129 = vector.broadcast %108 : vector<1x64xf32> to vector<256x64xf32>
    %130 = arith.addf %128, %129 : vector<256x64xf32>
    %cst_62 = arith.constant 0.000000e+00 : f32
    %131 = vector.broadcast %cst_62 : f32 to vector<256x64xf32>
    %132 = arith.maximumf %130, %131 : vector<256x64xf32>
    %133 = arith.truncf %132 : vector<256x64xf32> to vector<256x64xbf16>
    %c0_63 = arith.constant 0 : index
    %c0_64 = arith.constant 0 : index
    %134 = vector.load %arg19[%c0_63, %c0_64] : memref<64x128xbf16, #tpu.memory_space<vmem>>, vector<64x128xbf16>
    %c0_65 = arith.constant 0 : index
    %c0_66 = arith.constant 0 : index
    %135 = vector.load %arg20[%c0_65, %c0_66] : memref<1x128xf32, #tpu.memory_space<vmem>>, vector<1x128xf32>
    %cst_67 = arith.constant dense<0.000000e+00> : vector<256x128xf32>
    %136 = tpu.matmul %133, %134, %cst_67 {dimension_numbers = #tpu.dot_dimension_numbers<[1], [0], [0], [1], [0, 0, 1, 1], [], []>} : vector<256x64xbf16>, vector<64x128xbf16>, vector<256x128xf32> -> vector<256x128xf32>
    %137 = vector.broadcast %135 : vector<1x128xf32> to vector<256x128xf32>
    %138 = arith.addf %136, %137 : vector<256x128xf32>
    %139 = tpu.iota {dimensions = array<i32: 1>} : vector<256x128xi32>
    %140 = math.tanh %138 : vector<256x128xf32>
    %c2_i32 = arith.constant 2 : i32
    %141 = vector.broadcast %c2_i32 : i32 to vector<256x128xi32>
    %142 = arith.cmpi slt, %139, %141 : vector<256x128xi32>
    %143 = arith.select %142, %140, %138 : vector<256x128xi1>, vector<256x128xf32>
    %144 = arith.truncf %143 : vector<256x128xf32> to vector<256x128xbf16>
    %c0_68 = arith.constant 0 : index
    %c0_69 = arith.constant 0 : index
    %145 = vector.load %arg21[%c0_68, %c0_69] : memref<256x128xbf16, #tpu.memory_space<vmem>>, vector<256x128xbf16>
    tpu.vector_store %arg21[%c0_68, %c0_69], %144 {strides = array<i32>} : memref<256x128xbf16, #tpu.memory_space<vmem>>, vector<256x128xbf16>,
    return
  }
  func.func @transform_0(%arg0: i32) -> (i32, i32) {
    %c0_i32 = arith.constant 0 : i32
    %c0_i32_0 = arith.constant 0 : i32
    return %arg0, %c0_i32 : i32, i32
  }
  func.func @transform_1(%arg0: i32) -> (i32, i32) {
    %c0_i32 = arith.constant 0 : i32
    %c0_i32_0 = arith.constant 0 : i32
    %c0_i32_1 = arith.constant 0 : i32
    return %c0_i32, %c0_i32_0 : i32, i32
  }
  func.func @transform_2(%arg0: i32) -> (i32, i32) {
    %c0_i32 = arith.constant 0 : i32
    %c0_i32_0 = arith.constant 0 : i32
    %c0_i32_1 = arith.constant 0 : i32
    return %c0_i32, %c0_i32_0 : i32, i32
  }
  func.func @transform_3(%arg0: i32) -> (i32, i32) {
    %c0_i32 = arith.constant 0 : i32
    %c0_i32_0 = arith.constant 0 : i32
    %c0_i32_1 = arith.constant 0 : i32
    return %c0_i32, %c0_i32_0 : i32, i32
  }
  func.func @transform_4(%arg0: i32) -> (i32, i32) {
    %c0_i32 = arith.constant 0 : i32
    %c0_i32_0 = arith.constant 0 : i32
    %c0_i32_1 = arith.constant 0 : i32
    return %c0_i32, %c0_i32_0 : i32, i32
  }
  func.func @transform_5(%arg0: i32) -> (i32, i32) {
    %c0_i32 = arith.constant 0 : i32
    %c0_i32_0 = arith.constant 0 : i32
    %c0_i32_1 = arith.constant 0 : i32
    return %c0_i32, %c0_i32_0 : i32, i32
  }
  func.func @transform_6(%arg0: i32) -> (i32, i32) {
    %c0_i32 = arith.constant 0 : i32
    %c0_i32_0 = arith.constant 0 : i32
    %c0_i32_1 = arith.constant 0 : i32
    return %c0_i32, %c0_i32_0 : i32, i32
  }
  func.func @transform_7(%arg0: i32) -> (i32, i32) {
    %c0_i32 = arith.constant 0 : i32
    %c0_i32_0 = arith.constant 0 : i32
    %c0_i32_1 = arith.constant 0 : i32
    return %c0_i32, %c0_i32_0 : i32, i32
  }
  func.func @transform_8(%arg0: i32) -> (i32, i32) {
    %c0_i32 = arith.constant 0 : i32
    %c0_i32_0 = arith.constant 0 : i32
    %c0_i32_1 = arith.constant 0 : i32
    return %c0_i32, %c0_i32_0 : i32, i32
  }
  func.func @transform_9(%arg0: i32) -> (i32, i32) {
    %c0_i32 = arith.constant 0 : i32
    %c0_i32_0 = arith.constant 0 : i32
    %c0_i32_1 = arith.constant 0 : i32
    return %c0_i32, %c0_i32_0 : i32, i32
  }
  func.func @transform_10(%arg0: i32) -> (i32, i32) {
    %c0_i32 = arith.constant 0 : i32
    %c0_i32_0 = arith.constant 0 : i32
    %c0_i32_1 = arith.constant 0 : i32
    return %c0_i32, %c0_i32_0 : i32, i32
  }
  func.func @transform_11(%arg0: i32) -> (i32, i32) {
    %c0_i32 = arith.constant 0 : i32
    %c0_i32_0 = arith.constant 0 : i32
    %c0_i32_1 = arith.constant 0 : i32
    return %c0_i32, %c0_i32_0 : i32, i32
  }
  func.func @transform_12(%arg0: i32) -> (i32, i32) {
    %c0_i32 = arith.constant 0 : i32
    %c0_i32_0 = arith.constant 0 : i32
    %c0_i32_1 = arith.constant 0 : i32
    return %c0_i32, %c0_i32_0 : i32, i32
  }
  func.func @transform_13(%arg0: i32) -> (i32, i32) {
    %c0_i32 = arith.constant 0 : i32
    %c0_i32_0 = arith.constant 0 : i32
    %c0_i32_1 = arith.constant 0 : i32
    return %c0_i32, %c0_i32_0 : i32, i32
  }
  func.func @transform_14(%arg0: i32) -> (i32, i32) {
    %c0_i32 = arith.constant 0 : i32
    %c0_i32_0 = arith.constant 0 : i32
    %c0_i32_1 = arith.constant 0 : i32
    return %c0_i32, %c0_i32_0 : i32, i32
  }
  func.func @transform_15(%arg0: i32) -> (i32, i32) {
    %c0_i32 = arith.constant 0 : i32
    %c0_i32_0 = arith.constant 0 : i32
    %c0_i32_1 = arith.constant 0 : i32
    return %c0_i32, %c0_i32_0 : i32, i32
  }
  func.func @transform_16(%arg0: i32) -> (i32, i32) {
    %c0_i32 = arith.constant 0 : i32
    %c0_i32_0 = arith.constant 0 : i32
    %c0_i32_1 = arith.constant 0 : i32
    return %c0_i32, %c0_i32_0 : i32, i32
  }
  func.func @transform_17(%arg0: i32) -> (i32, i32) {
    %c0_i32 = arith.constant 0 : i32
    %c0_i32_0 = arith.constant 0 : i32
    %c0_i32_1 = arith.constant 0 : i32
    return %c0_i32, %c0_i32_0 : i32, i32
  }
  func.func @transform_18(%arg0: i32) -> (i32, i32) {
    %c0_i32 = arith.constant 0 : i32
    %c0_i32_0 = arith.constant 0 : i32
    %c0_i32_1 = arith.constant 0 : i32
    return %c0_i32, %c0_i32_0 : i32, i32
  }
  func.func @transform_19(%arg0: i32) -> (i32, i32) {
    %c0_i32 = arith.constant 0 : i32
    %c0_i32_0 = arith.constant 0 : i32
    %c0_i32_1 = arith.constant 0 : i32
    return %c0_i32, %c0_i32_0 : i32, i32
  }
  func.func @transform_20(%arg0: i32) -> (i32, i32) {
    %c0_i32 = arith.constant 0 : i32
    %c0_i32_0 = arith.constant 0 : i32
    return %arg0, %c0_i32 : i32, i32
  }
}

</mosaic_0001>

<llo_original>
// kernel: combined_decoder_forward.1
$region0: #{combined_decoder_forward.1}
  #allocation0 [shape = 'u32[]', space=smem, size = 0x4, offset = 0x4, fixed_abs, tag = 'smem constant byte address 0x4 - core index']
  #allocation1 [shape = 'u32[144,128]{1,0:T(1,128)}', space=vmem, size = 0x12000, scoped, tag = 'internal scratch']
  %s0 = inlined_call_operand.vmem [shape: f32[256,35], index: 0, kind: input, shape index: {}]
  %s1 = inlined_call_operand.vmem [shape: bf16[35,64], index: 1, kind: input, shape index: {}]
  %s2 = inlined_call_operand.vmem [shape: f32[1,64], index: 2, kind: input, shape index: {}]
  %s3 = inlined_call_operand.vmem [shape: f32[1,64], index: 3, kind: input, shape index: {}]
  %s4 = inlined_call_operand.vmem [shape: f32[1,64], index: 4, kind: input, shape index: {}]
  %s5 = inlined_call_operand.vmem [shape: bf16[64,29], index: 5, kind: input, shape index: {}]
  %s6 = inlined_call_operand.vmem [shape: f32[1,29], index: 6, kind: input, shape index: {}]
  %s7 = inlined_call_operand.vmem [shape: f32[1,29], index: 7, kind: input, shape index: {}]
  %s8 = inlined_call_operand.vmem [shape: f32[1,29], index: 8, kind: input, shape index: {}]
  %s9 = inlined_call_operand.vmem [shape: bf16[29,64], index: 9, kind: input, shape index: {}]
  %s10 = inlined_call_operand.vmem [shape: bf16[35,64], index: 10, kind: input, shape index: {}]
  %s11 = inlined_call_operand.vmem [shape: f32[1,64], index: 11, kind: input, shape index: {}]
  %s12 = inlined_call_operand.vmem [shape: f32[1,64], index: 12, kind: input, shape index: {}]
  %s13 = inlined_call_operand.vmem [shape: f32[1,64], index: 13, kind: input, shape index: {}]
  %s14 = inlined_call_operand.vmem [shape: bf16[64,64], index: 14, kind: input, shape index: {}]
  %s15 = inlined_call_operand.vmem [shape: f32[1,64], index: 15, kind: input, shape index: {}]
  %s16 = inlined_call_operand.vmem [shape: f32[1,64], index: 16, kind: input, shape index: {}]
  %s17 = inlined_call_operand.vmem [shape: f32[1,64], index: 17, kind: input, shape index: {}]
  %s18 = inlined_call_operand.vmem [shape: bf16[64,128], index: 18, kind: input, shape index: {}]
  %s19 = inlined_call_operand.vmem [shape: f32[1,128], index: 19, kind: input, shape index: {}]
  %s20 = inlined_call_operand.vmem [shape: bf16[256,128], index: 20, kind: output, shape index: {}]
  %s21 = sld [smem:[#allocation0]]
  $region90: #{combined_decoder_forward.1} parent=0
    _
  %s23 = ssub.s32 1, %s21
  %s24 = scalar_select 0, %s23, %s21
  // Predicated region
  $region2: #{combined_decoder_forward.1} parent=0 // pred_check
    _
  $region3: #{combined_decoder_forward.1} parent=0 // pred_check_branch
    %26 = sbr.rel (0) target = $region5
  $region4: #{combined_decoder_forward.1} parent=0 // pred_region
    _
  $region5: #{combined_decoder_forward.1} parent=0 // pred_fallthru
    _
  // Predicated region
  $region6: #{combined_decoder_forward.1} parent=0 // pred_check
    _
  $region7: #{combined_decoder_forward.1} parent=0 // pred_check_branch
    %28 = sbr.rel (0) target = $region9
  $region8: #{combined_decoder_forward.1} parent=0 // pred_region
    _
  $region9: #{combined_decoder_forward.1} parent=0 // pred_fallthru
    _
  // Predicated region
  $region10: #{combined_decoder_forward.1} parent=0 // pred_check
    _
  $region11: #{combined_decoder_forward.1} parent=0 // pred_check_branch
    %30 = sbr.rel (0) target = $region13
  $region12: #{combined_decoder_forward.1} parent=0 // pred_region
    _
  $region13: #{combined_decoder_forward.1} parent=0 // pred_fallthru
    _
  // Predicated region
  $region14: #{combined_decoder_forward.1} parent=0 // pred_check
    _
  $region15: #{combined_decoder_forward.1} parent=0 // pred_check_branch
    %32 = sbr.rel (0) target = $region17
  $region16: #{combined_decoder_forward.1} parent=0 // pred_region
    _
  $region17: #{combined_decoder_forward.1} parent=0 // pred_fallthru
    _
  // Predicated region
  $region18: #{combined_decoder_forward.1} parent=0 // pred_check
    _
  $region19: #{combined_decoder_forward.1} parent=0 // pred_check_branch
    %34 = sbr.rel (0) target = $region21
  $region20: #{combined_decoder_forward.1} parent=0 // pred_region
    _
  $region21: #{combined_decoder_forward.1} parent=0 // pred_fallthru
    _
  // Predicated region
  $region22: #{combined_decoder_forward.1} parent=0 // pred_check
    _
  $region23: #{combined_decoder_forward.1} parent=0 // pred_check_branch
    %36 = sbr.rel (0) target = $region25
  $region24: #{combined_decoder_forward.1} parent=0 // pred_region
    _
  $region25: #{combined_decoder_forward.1} parent=0 // pred_fallthru
    _
  // Predicated region
  $region26: #{combined_decoder_forward.1} parent=0 // pred_check
    _
  $region27: #{combined_decoder_forward.1} parent=0 // pred_check_branch
    %38 = sbr.rel (0) target = $region29
  $region28: #{combined_decoder_forward.1} parent=0 // pred_region
    _
  $region29: #{combined_decoder_forward.1} parent=0 // pred_fallthru
    _
  // Predicated region
  $region30: #{combined_decoder_forward.1} parent=0 // pred_check
    _
  $region31: #{combined_decoder_forward.1} parent=0 // pred_check_branch
    %40 = sbr.rel (0) target = $region33
  $region32: #{combined_decoder_forward.1} parent=0 // pred_region
    _
  $region33: #{combined_decoder_forward.1} parent=0 // pred_fallthru
    _
  // Predicated region
  $region34: #{combined_decoder_forward.1} parent=0 // pred_check
    _
  $region35: #{combined_decoder_forward.1} parent=0 // pred_check_branch
    %42 = sbr.rel (0) target = $region37
  $region36: #{combined_decoder_forward.1} parent=0 // pred_region
    _
  $region37: #{combined_decoder_forward.1} parent=0 // pred_fallthru
    _
  // Predicated region
  $region38: #{combined_decoder_forward.1} parent=0 // pred_check
    _
  $region39: #{combined_decoder_forward.1} parent=0 // pred_check_branch
    %44 = sbr.rel (0) target = $region41
  $region40: #{combined_decoder_forward.1} parent=0 // pred_region
    _
  $region41: #{combined_decoder_forward.1} parent=0 // pred_fallthru
    _
  // Predicated region
  $region42: #{combined_decoder_forward.1} parent=0 // pred_check
    _
  $region43: #{combined_decoder_forward.1} parent=0 // pred_check_branch
    %46 = sbr.rel (0) target = $region45
  $region44: #{combined_decoder_forward.1} parent=0 // pred_region
    _
  $region45: #{combined_decoder_forward.1} parent=0 // pred_fallthru
    _
  // Predicated region
  $region46: #{combined_decoder_forward.1} parent=0 // pred_check
    _
  $region47: #{combined_decoder_forward.1} parent=0 // pred_check_branch
    %48 = sbr.rel (0) target = $region49
  $region48: #{combined_decoder_forward.1} parent=0 // pred_region
    _
  $region49: #{combined_decoder_forward.1} parent=0 // pred_fallthru
    _
  // Predicated region
  $region50: #{combined_decoder_forward.1} parent=0 // pred_check
    _
  $region51: #{combined_decoder_forward.1} parent=0 // pred_check_branch
    %50 = sbr.rel (0) target = $region53
  $region52: #{combined_decoder_forward.1} parent=0 // pred_region
    _
  $region53: #{combined_decoder_forward.1} parent=0 // pred_fallthru
    _
  // Predicated region
  $region54: #{combined_decoder_forward.1} parent=0 // pred_check
    _
  $region55: #{combined_decoder_forward.1} parent=0 // pred_check_branch
    %52 = sbr.rel (0) target = $region57
  $region56: #{combined_decoder_forward.1} parent=0 // pred_region
    _
  $region57: #{combined_decoder_forward.1} parent=0 // pred_fallthru
    _
  // Predicated region
  $region58: #{combined_decoder_forward.1} parent=0 // pred_check
    _
  $region59: #{combined_decoder_forward.1} parent=0 // pred_check_branch
    %54 = sbr.rel (0) target = $region61
  $region60: #{combined_decoder_forward.1} parent=0 // pred_region
    _
  $region61: #{combined_decoder_forward.1} parent=0 // pred_fallthru
    _
  // Predicated region
  $region62: #{combined_decoder_forward.1} parent=0 // pred_check
    _
  $region63: #{combined_decoder_forward.1} parent=0 // pred_check_branch
    %56 = sbr.rel (0) target = $region65
  $region64: #{combined_decoder_forward.1} parent=0 // pred_region
    _
  $region65: #{combined_decoder_forward.1} parent=0 // pred_fallthru
    _
  // Predicated region
  $region66: #{combined_decoder_forward.1} parent=0 // pred_check
    _
  $region67: #{combined_decoder_forward.1} parent=0 // pred_check_branch
    %58 = sbr.rel (0) target = $region69
  $region68: #{combined_decoder_forward.1} parent=0 // pred_region
    _
  $region69: #{combined_decoder_forward.1} parent=0 // pred_fallthru
    _
  // Predicated region
  $region70: #{combined_decoder_forward.1} parent=0 // pred_check
    _
  $region71: #{combined_decoder_forward.1} parent=0 // pred_check_branch
    %60 = sbr.rel (0) target = $region73
  $region72: #{combined_decoder_forward.1} parent=0 // pred_region
    _
  $region73: #{combined_decoder_forward.1} parent=0 // pred_fallthru
    _
  // Predicated region
  $region74: #{combined_decoder_forward.1} parent=0 // pred_check
    _
  $region75: #{combined_decoder_forward.1} parent=0 // pred_check_branch
    %62 = sbr.rel (0) target = $region77
  $region76: #{combined_decoder_forward.1} parent=0 // pred_region
    _
  $region77: #{combined_decoder_forward.1} parent=0 // pred_fallthru
    _
  // Predicated region
  $region78: #{combined_decoder_forward.1} parent=0 // pred_check
    _
  $region79: #{combined_decoder_forward.1} parent=0 // pred_check_branch
    %64 = sbr.rel (0) target = $region81
  $region80: #{combined_decoder_forward.1} parent=0 // pred_region
    _
  $region81: #{combined_decoder_forward.1} parent=0 // pred_fallthru
    _
  %v66 = vld [vmem:[%s0] sm:$0xff]
  %v67 = vld [vmem:[%s0 + $0x8] sm:$0xff]
  %v68 = vld [vmem:[%s0 + $0x10] sm:$0xff]
  %v69 = vld [vmem:[%s0 + $0x18] sm:$0xff]
  %v70 = vld [vmem:[%s0 + $0x20] sm:$0xff]
  %v71 = vld [vmem:[%s0 + $0x28] sm:$0xff]
  %v72 = vld [vmem:[%s0 + $0x30] sm:$0xff]
  %v73 = vld [vmem:[%s0 + $0x38] sm:$0xff]
  %v74 = vld [vmem:[%s0 + $0x40] sm:$0xff]
  %v75 = vld [vmem:[%s0 + $0x48] sm:$0xff]
  %v76 = vld [vmem:[%s0 + $0x50] sm:$0xff]
  %v77 = vld [vmem:[%s0 + $0x58] sm:$0xff]
  %v78 = vld [vmem:[%s0 + $0x60] sm:$0xff]
  %v79 = vld [vmem:[%s0 + $0x68] sm:$0xff]
  %v80 = vld [vmem:[%s0 + $0x70] sm:$0xff]
  %v81 = vld [vmem:[%s0 + $0x78] sm:$0xff]
  %v82 = vld [vmem:[%s0 + $0x80] sm:$0xff]
  %v83 = vld [vmem:[%s0 + $0x88] sm:$0xff]
  %v84 = vld [vmem:[%s0 + $0x90] sm:$0xff]
  %v85 = vld [vmem:[%s0 + $0x98] sm:$0xff]
  %v86 = vld [vmem:[%s0 + $0xa0] sm:$0xff]
  %v87 = vld [vmem:[%s0 + $0xa8] sm:$0xff]
  %v88 = vld [vmem:[%s0 + $0xb0] sm:$0xff]
  %v89 = vld [vmem:[%s0 + $0xb8] sm:$0xff]
  %v90 = vld [vmem:[%s0 + $0xc0] sm:$0xff]
  %v91 = vld [vmem:[%s0 + $0xc8] sm:$0xff]
  %v92 = vld [vmem:[%s0 + $0xd0] sm:$0xff]
  %v93 = vld [vmem:[%s0 + $0xd8] sm:$0xff]
  %v94 = vld [vmem:[%s0 + $0xe0] sm:$0xff]
  %v95 = vld [vmem:[%s0 + $0xe8] sm:$0xff]
  %v96 = vld [vmem:[%s0 + $0xf0] sm:$0xff]
  %v97 = vld [vmem:[%s0 + $0xf8] sm:$0xff]
  %v98 = vpack.c.bf16 %v67, %v66
  %v99 = vpack.c.bf16 %v69, %v68
  %v100 = vpack.c.bf16 %v71, %v70
  %v101 = vpack.c.bf16 %v73, %v72
  %v102 = vpack.c.bf16 %v75, %v74
  %v103 = vpack.c.bf16 %v77, %v76
  %v104 = vpack.c.bf16 %v79, %v78
  %v105 = vpack.c.bf16 %v81, %v80
  %v106 = vpack.c.bf16 %v83, %v82
  %v107 = vpack.c.bf16 %v85, %v84
  %v108 = vpack.c.bf16 %v87, %v86
  %v109 = vpack.c.bf16 %v89, %v88
  %v110 = vpack.c.bf16 %v91, %v90
  %v111 = vpack.c.bf16 %v93, %v92
  %v112 = vpack.c.bf16 %v95, %v94
  %v113 = vpack.c.bf16 %v97, %v96
  %v114 = vld [vmem:[%s1] sm:$0xf]
  %v115 = vld [vmem:[%s1 + $0x4] sm:$0xf]
  %v116 = vld [vmem:[%s1 + $0x8] sm:$0xf]
  %v117 = vld [vmem:[%s1 + $0xc] sm:$0xf]
  %v118 = vld [vmem:[%s1 + $0x10] sm:$0x3]
  %v119 = vld [vmem:[%s2] sm:$0x1]
  %v121 = vlaneseq
  %v122 = vshrl.u32 %v121, 7
  %v123 = vsub.s32 0, %v122
  %v124 = vrot.slane %v119, %v123
  %v131 = vunpack.c.l.b16 %v114
  %v132 = vunpack.c.l.b16 %v115
  %v133 = vunpack.c.l.b16 %v116
  %v134 = vunpack.c.l.b16 %v117
  %v135 = vunpack.c.l.b16 %v118
  %v136 = vpack.c.b16 %v132, %v131
  %v137 = vpack.c.b16 %v134, %v133
  %v138 = vpack.c.b16 %v135, %v135
  %vm141 = vcmask 285696
  %v143 = vsel %vm141, %v98, 0
  %v146 = vsel %vm141, %v99, 0
  %v149 = vsel %vm141, %v100, 0
  %v152 = vsel %vm141, %v101, 0
  %v155 = vsel %vm141, %v102, 0
  %v158 = vsel %vm141, %v103, 0
  %v161 = vsel %vm141, %v104, 0
  %v164 = vsel %vm141, %v105, 0
  %v167 = vsel %vm141, %v106, 0
  %v170 = vsel %vm141, %v107, 0
  %v173 = vsel %vm141, %v108, 0
  %v176 = vsel %vm141, %v109, 0
  %v179 = vsel %vm141, %v110, 0
  %v182 = vsel %vm141, %v111, 0
  %v185 = vsel %vm141, %v112, 0
  %v188 = vsel %vm141, %v113, 0
  %vm190 = vcmask 1040384
  %vm191 = vcmask 1041408
  %v192 = vsel %vm190, 4294967295, 65535
  %v193 = vsel %vm191, %v192, 0
  %v195 = vand.u32 %v138, %v193
  %197 = vmatprep.subr.bf16.mxu0 0
  %198 = vmatpush1.bf16.msra.mxu0 %v136
  %199 = vmatprep.subr.bf16.mxu0 0
  %200 = vmatpush1.bf16.msra.mxu0 %v137
  %201 = vmatprep.subr.bf16.mxu0 0
  %202 = vmatpush1.bf16.msra.mxu0 %v195
  %203 = vmatprep.subr.bf16.mxu0 0
  %204 = vmatpush1.bf16.msra.mxu0 0
  %205 = vmatprep.subr.bf16.mxu0 0
  %206 = vmatpush1.bf16.msra.mxu0 0
  %207 = vmatprep.subr.bf16.mxu0 0
  %208 = vmatpush1.bf16.msra.mxu0 0
  %209 = vmatprep.subr.bf16.mxu0 0
  %210 = vmatpush1.bf16.msra.mxu0 0
  %211 = vmatprep.subr.bf16.mxu0 0
  %212 = vmatpush1.bf16.msra.mxu0 0
  %213 = vmatprep.subr.bf16.mxu0 0
  %214 = vmatpush1.bf16.msra.mxu0 0
  %215 = vmatprep.subr.bf16.mxu0 0
  %216 = vmatpush1.bf16.msra.mxu0 0
  %217 = vmatprep.subr.bf16.mxu0 0
  %218 = vmatpush1.bf16.msra.mxu0 0
  %219 = vmatprep.subr.bf16.mxu0 0
  %220 = vmatpush1.bf16.msra.mxu0 0
  %221 = vmatprep.subr.bf16.mxu0 0
  %222 = vmatpush1.bf16.msra.mxu0 0
  %223 = vmatprep.subr.bf16.mxu0 0
  %224 = vmatpush1.bf16.msra.mxu0 0
  %225 = vmatprep.subr.bf16.mxu0 0
  %226 = vmatpush1.bf16.msra.mxu0 0
  %227 = vmatprep.subr.bf16.mxu0 0
  %228 = vmatpush1.bf16.msra.mxu0 0
  %229 = vmatprep.mubr.bf16.mxu0 0
  %230 = vmatmul.mubr.bf16.gmra.mrb[0].mxu0 %v143
  %v231 = vpop.f32.mrb[0].mxu0
  %v232 = vadd.f32 %v124, %v231
  %v233 = vpop.f32.mrb[0].mxu0
  %v234 = vpop.f32.mrb[0].mxu0
  %v235 = vadd.f32 %v124, %v234
  %v236 = vpop.f32.mrb[0].mxu0
  %237 = vmatprep.mubr.bf16.mxu0 0
  %238 = vmatmul.mubr.bf16.gmra.mrb[0].mxu0 %v146
  %v239 = vpop.f32.mrb[0].mxu0
  %v240 = vadd.f32 %v124, %v239
  %v241 = vpop.f32.mrb[0].mxu0
  %v242 = vpop.f32.mrb[0].mxu0
  %v243 = vadd.f32 %v124, %v242
  %v244 = vpop.f32.mrb[0].mxu0
  %245 = vmatprep.mubr.bf16.mxu0 0
  %246 = vmatmul.mubr.bf16.gmra.mrb[0].mxu0 %v149
  %v247 = vpop.f32.mrb[0].mxu0
  %v248 = vadd.f32 %v124, %v247
  %v249 = vpop.f32.mrb[0].mxu0
  %v250 = vpop.f32.mrb[0].mxu0
  %v251 = vadd.f32 %v124, %v250
  %v252 = vpop.f32.mrb[0].mxu0
  %253 = vmatprep.mubr.bf16.mxu0 0
  %254 = vmatmul.mubr.bf16.gmra.mrb[0].mxu0 %v152
  %v255 = vpop.f32.mrb[0].mxu0
  %v256 = vadd.f32 %v124, %v255
  %v257 = vpop.f32.mrb[0].mxu0
  %v258 = vpop.f32.mrb[0].mxu0
  %v259 = vadd.f32 %v124, %v258
  %v260 = vpop.f32.mrb[0].mxu0
  %261 = vmatprep.mubr.bf16.mxu0 0
  %262 = vmatmul.mubr.bf16.gmra.mrb[0].mxu0 %v155
  %v263 = vpop.f32.mrb[0].mxu0
  %v264 = vadd.f32 %v124, %v263
  %v265 = vpop.f32.mrb[0].mxu0
  %v266 = vpop.f32.mrb[0].mxu0
  %v267 = vadd.f32 %v124, %v266
  %v268 = vpop.f32.mrb[0].mxu0
  %269 = vmatprep.mubr.bf16.mxu0 0
  %270 = vmatmul.mubr.bf16.gmra.mrb[0].mxu0 %v158
  %v271 = vpop.f32.mrb[0].mxu0
  %v272 = vadd.f32 %v124, %v271
  %v273 = vpop.f32.mrb[0].mxu0
  %v274 = vpop.f32.mrb[0].mxu0
  %v275 = vadd.f32 %v124, %v274
  %v276 = vpop.f32.mrb[0].mxu0
  %277 = vmatprep.mubr.bf16.mxu0 0
  %278 = vmatmul.mubr.bf16.gmra.mrb[0].mxu0 %v161
  %v279 = vpop.f32.mrb[0].mxu0
  %v280 = vadd.f32 %v124, %v279
  %v281 = vpop.f32.mrb[0].mxu0
  %v282 = vpop.f32.mrb[0].mxu0
  %v283 = vadd.f32 %v124, %v282
  %v284 = vpop.f32.mrb[0].mxu0
  %285 = vmatprep.mubr.bf16.mxu0 0
  %286 = vmatmul.mubr.bf16.gmra.mrb[0].mxu0 %v164
  %v287 = vpop.f32.mrb[0].mxu0
  %v288 = vadd.f32 %v124, %v287
  %v289 = vpop.f32.mrb[0].mxu0
  %v290 = vpop.f32.mrb[0].mxu0
  %v291 = vadd.f32 %v124, %v290
  %v292 = vpop.f32.mrb[0].mxu0
  %293 = vmatprep.mubr.bf16.mxu0 0
  %294 = vmatmul.mubr.bf16.gmra.mrb[0].mxu0 %v167
  %v295 = vpop.f32.mrb[0].mxu0
  %v296 = vadd.f32 %v124, %v295
  %v297 = vpop.f32.mrb[0].mxu0
  %v298 = vpop.f32.mrb[0].mxu0
  %v299 = vadd.f32 %v124, %v298
  %v300 = vpop.f32.mrb[0].mxu0
  %301 = vmatprep.mubr.bf16.mxu0 0
  %302 = vmatmul.mubr.bf16.gmra.mrb[0].mxu0 %v170
  %v303 = vpop.f32.mrb[0].mxu0
  %v304 = vadd.f32 %v124, %v303
  %v305 = vpop.f32.mrb[0].mxu0
  %v306 = vpop.f32.mrb[0].mxu0
  %v307 = vadd.f32 %v124, %v306
  %v308 = vpop.f32.mrb[0].mxu0
  %309 = vmatprep.mubr.bf16.mxu0 0
  %310 = vmatmul.mubr.bf16.gmra.mrb[0].mxu0 %v173
  %v311 = vpop.f32.mrb[0].mxu0
  %v312 = vadd.f32 %v124, %v311
  %v313 = vpop.f32.mrb[0].mxu0
  %v314 = vpop.f32.mrb[0].mxu0
  %v315 = vadd.f32 %v124, %v314
  %v316 = vpop.f32.mrb[0].mxu0
  %317 = vmatprep.mubr.bf16.mxu0 0
  %318 = vmatmul.mubr.bf16.gmra.mrb[0].mxu0 %v176
  %v319 = vpop.f32.mrb[0].mxu0
  %v320 = vadd.f32 %v124, %v319
  %v321 = vpop.f32.mrb[0].mxu0
  %v322 = vpop.f32.mrb[0].mxu0
  %v323 = vadd.f32 %v124, %v322
  %v324 = vpop.f32.mrb[0].mxu0
  %325 = vmatprep.mubr.bf16.mxu0 0
  %326 = vmatmul.mubr.bf16.gmra.mrb[0].mxu0 %v179
  %v327 = vpop.f32.mrb[0].mxu0
  %v328 = vadd.f32 %v124, %v327
  %v329 = vpop.f32.mrb[0].mxu0
  %v330 = vpop.f32.mrb[0].mxu0
  %v331 = vadd.f32 %v124, %v330
  %v332 = vpop.f32.mrb[0].mxu0
  %333 = vmatprep.mubr.bf16.mxu0 0
  %334 = vmatmul.mubr.bf16.gmra.mrb[0].mxu0 %v182
  %v335 = vpop.f32.mrb[0].mxu0
  %v336 = vadd.f32 %v124, %v335
  %v337 = vpop.f32.mrb[0].mxu0
  %v338 = vpop.f32.mrb[0].mxu0
  %v339 = vadd.f32 %v124, %v338
  %v340 = vpop.f32.mrb[0].mxu0
  %341 = vmatprep.mubr.bf16.mxu0 0
  %342 = vmatmul.mubr.bf16.gmra.mrb[0].mxu0 %v185
  %v343 = vpop.f32.mrb[0].mxu0
  %v344 = vadd.f32 %v124, %v343
  %v345 = vpop.f32.mrb[0].mxu0
  %v346 = vpop.f32.mrb[0].mxu0
  %v347 = vadd.f32 %v124, %v346
  %v348 = vpop.f32.mrb[0].mxu0
  %349 = vmatprep.mubr.bf16.mxu0 0
  %350 = vmatmul.mubr.bf16.gmra.mrb[0].mxu0 %v188
  %v351 = vpop.f32.mrb[0].mxu0
  %v352 = vadd.f32 %v124, %v351
  %v353 = vpop.f32.mrb[0].mxu0
  %v354 = vpop.f32.mrb[0].mxu0
  %v355 = vadd.f32 %v124, %v354
  %v356 = vpop.f32.mrb[0].mxu0
  %357 = vdwg.mxu0
  %v358 = vld [vmem:[%s3] sm:$0x1]
  %v359 = vld [vmem:[%s4] sm:$0x1]
  %vm360 = vcmask 523264
  %v361 = vsel %vm360, %v232, 0.0
  %362 = vadd.xlane.f32.xlu0 %v361
  %v363 = vpop.xlane.xlu0 %362
  %v364 = vsel %vm360, %v235, 0.0
  %365 = vadd.xlane.f32.xlu0 %v364
  %v366 = vpop.xlane.xlu0 %365
  %v367 = vsel %vm360, %v240, 0.0
  %368 = vadd.xlane.f32.xlu0 %v367
  %v369 = vpop.xlane.xlu0 %368
  %v370 = vsel %vm360, %v243, 0.0
  %371 = vadd.xlane.f32.xlu0 %v370
  %v372 = vpop.xlane.xlu0 %371
  %v373 = vsel %vm360, %v248, 0.0
  %374 = vadd.xlane.f32.xlu0 %v373
  %v375 = vpop.xlane.xlu0 %374
  %v376 = vsel %vm360, %v251, 0.0
  %377 = vadd.xlane.f32.xlu0 %v376
  %v378 = vpop.xlane.xlu0 %377
  %v379 = vsel %vm360, %v256, 0.0
  %380 = vadd.xlane.f32.xlu0 %v379
  %v381 = vpop.xlane.xlu0 %380
  %v382 = vsel %vm360, %v259, 0.0
  %383 = vadd.xlane.f32.xlu0 %v382
  %v384 = vpop.xlane.xlu0 %383
  %v385 = vsel %vm360, %v264, 0.0
  %386 = vadd.xlane.f32.xlu0 %v385
  %v387 = vpop.xlane.xlu0 %386
  %v388 = vsel %vm360, %v267, 0.0
  %389 = vadd.xlane.f32.xlu0 %v388
  %v390 = vpop.xlane.xlu0 %389
  %v391 = vsel %vm360, %v272, 0.0
  %392 = vadd.xlane.f32.xlu0 %v391
  %v393 = vpop.xlane.xlu0 %392
  %v394 = vsel %vm360, %v275, 0.0
  %395 = vadd.xlane.f32.xlu0 %v394
  %v396 = vpop.xlane.xlu0 %395
  %v397 = vsel %vm360, %v280, 0.0
  %398 = vadd.xlane.f32.xlu0 %v397
  %v399 = vpop.xlane.xlu0 %398
  %v400 = vsel %vm360, %v283, 0.0
  %401 = vadd.xlane.f32.xlu0 %v400
  %v402 = vpop.xlane.xlu0 %401
  %v403 = vsel %vm360, %v288, 0.0
  %404 = vadd.xlane.f32.xlu0 %v403
  %v405 = vpop.xlane.xlu0 %404
  %v406 = vsel %vm360, %v291, 0.0
  %407 = vadd.xlane.f32.xlu0 %v406
  %v408 = vpop.xlane.xlu0 %407
  %v409 = vsel %vm360, %v296, 0.0
  %410 = vadd.xlane.f32.xlu0 %v409
  %v411 = vpop.xlane.xlu0 %410
  %v412 = vsel %vm360, %v299, 0.0
  %413 = vadd.xlane.f32.xlu0 %v412
  %v414 = vpop.xlane.xlu0 %413
  %v415 = vsel %vm360, %v304, 0.0
  %416 = vadd.xlane.f32.xlu0 %v415
  %v417 = vpop.xlane.xlu0 %416
  %v418 = vsel %vm360, %v307, 0.0
  %419 = vadd.xlane.f32.xlu0 %v418
  %v420 = vpop.xlane.xlu0 %419
  %v421 = vsel %vm360, %v312, 0.0
  %422 = vadd.xlane.f32.xlu0 %v421
  %v423 = vpop.xlane.xlu0 %422
  %v424 = vsel %vm360, %v315, 0.0
  %425 = vadd.xlane.f32.xlu0 %v424
  %v426 = vpop.xlane.xlu0 %425
  %v427 = vsel %vm360, %v320, 0.0
  %428 = vadd.xlane.f32.xlu0 %v427
  %v429 = vpop.xlane.xlu0 %428
  %v430 = vsel %vm360, %v323, 0.0
  %431 = vadd.xlane.f32.xlu0 %v430
  %v432 = vpop.xlane.xlu0 %431
  %v433 = vsel %vm360, %v328, 0.0
  %434 = vadd.xlane.f32.xlu0 %v433
  %v435 = vpop.xlane.xlu0 %434
  %v436 = vsel %vm360, %v331, 0.0
  %437 = vadd.xlane.f32.xlu0 %v436
  %v438 = vpop.xlane.xlu0 %437
  %v439 = vsel %vm360, %v336, 0.0
  %440 = vadd.xlane.f32.xlu0 %v439
  %v441 = vpop.xlane.xlu0 %440
  %v442 = vsel %vm360, %v339, 0.0
  %443 = vadd.xlane.f32.xlu0 %v442
  %v444 = vpop.xlane.xlu0 %443
  %v445 = vsel %vm360, %v344, 0.0
  %446 = vadd.xlane.f32.xlu0 %v445
  %v447 = vpop.xlane.xlu0 %446
  %v448 = vsel %vm360, %v347, 0.0
  %449 = vadd.xlane.f32.xlu0 %v448
  %v450 = vpop.xlane.xlu0 %449
  %v451 = vsel %vm360, %v352, 0.0
  %452 = vadd.xlane.f32.xlu0 %v451
  %v453 = vpop.xlane.xlu0 %452
  %v454 = vsel %vm360, %v355, 0.0
  %455 = vadd.xlane.f32.xlu0 %v454
  %v456 = vpop.xlane.xlu0 %455
  %v457 = vmul.f32 %v363, 0.015625
  %v458 = vmul.f32 %v366, 0.015625
  %v459 = vmul.f32 %v369, 0.015625
  %v460 = vmul.f32 %v372, 0.015625
  %v461 = vmul.f32 %v375, 0.015625
  %v462 = vmul.f32 %v378, 0.015625
  %v463 = vmul.f32 %v381, 0.015625
  %v464 = vmul.f32 %v384, 0.015625
  %v465 = vmul.f32 %v387, 0.015625
  %v466 = vmul.f32 %v390, 0.015625
  %v467 = vmul.f32 %v393, 0.015625
  %v468 = vmul.f32 %v396, 0.015625
  %v469 = vmul.f32 %v399, 0.015625
  %v470 = vmul.f32 %v402, 0.015625
  %v471 = vmul.f32 %v405, 0.015625
  %v472 = vmul.f32 %v408, 0.015625
  %v473 = vmul.f32 %v411, 0.015625
  %v474 = vmul.f32 %v414, 0.015625
  %v475 = vmul.f32 %v417, 0.015625
  %v476 = vmul.f32 %v420, 0.015625
  %v477 = vmul.f32 %v423, 0.015625
  %v478 = vmul.f32 %v426, 0.015625
  %v479 = vmul.f32 %v429, 0.015625
  %v480 = vmul.f32 %v432, 0.015625
  %v481 = vmul.f32 %v435, 0.015625
  %v482 = vmul.f32 %v438, 0.015625
  %v483 = vmul.f32 %v441, 0.015625
  %v484 = vmul.f32 %v444, 0.015625
  %v485 = vmul.f32 %v447, 0.015625
  %v486 = vmul.f32 %v450, 0.015625
  %v487 = vmul.f32 %v453, 0.015625
  %v488 = vmul.f32 %v456, 0.015625
  %v489 = vmul.f32 %v232, %v232
  %v490 = vmul.f32 %v235, %v235
  %v491 = vmul.f32 %v240, %v240
  %v492 = vmul.f32 %v243, %v243
  %v493 = vmul.f32 %v248, %v248
  %v494 = vmul.f32 %v251, %v251
  %v495 = vmul.f32 %v256, %v256
  %v496 = vmul.f32 %v259, %v259
  %v497 = vmul.f32 %v264, %v264
  %v498 = vmul.f32 %v267, %v267
  %v499 = vmul.f32 %v272, %v272
  %v500 = vmul.f32 %v275, %v275
  %v501 = vmul.f32 %v280, %v280
  %v502 = vmul.f32 %v283, %v283
  %v503 = vmul.f32 %v288, %v288
  %v504 = vmul.f32 %v291, %v291
  %v505 = vmul.f32 %v296, %v296
  %v506 = vmul.f32 %v299, %v299
  %v507 = vmul.f32 %v304, %v304
  %v508 = vmul.f32 %v307, %v307
  %v509 = vmul.f32 %v312, %v312
  %v510 = vmul.f32 %v315, %v315
  %v511 = vmul.f32 %v320, %v320
  %v512 = vmul.f32 %v323, %v323
  %v513 = vmul.f32 %v328, %v328
  %v514 = vmul.f32 %v331, %v331
  %v515 = vmul.f32 %v336, %v336
  %v516 = vmul.f32 %v339, %v339
  %v517 = vmul.f32 %v344, %v344
  %v518 = vmul.f32 %v347, %v347
  %v519 = vmul.f32 %v352, %v352
  %v520 = vmul.f32 %v355, %v355
  %v521 = vsel %vm360, %v489, 0.0
  %522 = vadd.xlane.f32.xlu0 %v521
  %v523 = vpop.xlane.xlu0 %522
  %v524 = vsel %vm360, %v490, 0.0
  %525 = vadd.xlane.f32.xlu0 %v524
  %v526 = vpop.xlane.xlu0 %525
  %v527 = vsel %vm360, %v491, 0.0
  %528 = vadd.xlane.f32.xlu0 %v527
  %v529 = vpop.xlane.xlu0 %528
  %v530 = vsel %vm360, %v492, 0.0
  %531 = vadd.xlane.f32.xlu0 %v530
  %v532 = vpop.xlane.xlu0 %531
  %v533 = vsel %vm360, %v493, 0.0
  %534 = vadd.xlane.f32.xlu0 %v533
  %v535 = vpop.xlane.xlu0 %534
  %v536 = vsel %vm360, %v494, 0.0
  %537 = vadd.xlane.f32.xlu0 %v536
  %v538 = vpop.xlane.xlu0 %537
  %v539 = vsel %vm360, %v495, 0.0
  %540 = vadd.xlane.f32.xlu0 %v539
  %v541 = vpop.xlane.xlu0 %540
  %v542 = vsel %vm360, %v496, 0.0
  %543 = vadd.xlane.f32.xlu0 %v542
  %v544 = vpop.xlane.xlu0 %543
  %v545 = vsel %vm360, %v497, 0.0
  %546 = vadd.xlane.f32.xlu0 %v545
  %v547 = vpop.xlane.xlu0 %546
  %v548 = vsel %vm360, %v498, 0.0
  %549 = vadd.xlane.f32.xlu0 %v548
  %v550 = vpop.xlane.xlu0 %549
  %v551 = vsel %vm360, %v499, 0.0
  %552 = vadd.xlane.f32.xlu0 %v551
  %v553 = vpop.xlane.xlu0 %552
  %v554 = vsel %vm360, %v500, 0.0
  %555 = vadd.xlane.f32.xlu0 %v554
  %v556 = vpop.xlane.xlu0 %555
  %v557 = vsel %vm360, %v501, 0.0
  %558 = vadd.xlane.f32.xlu0 %v557
  %v559 = vpop.xlane.xlu0 %558
  %v560 = vsel %vm360, %v502, 0.0
  %561 = vadd.xlane.f32.xlu0 %v560
  %v562 = vpop.xlane.xlu0 %561
  %v563 = vsel %vm360, %v503, 0.0
  %564 = vadd.xlane.f32.xlu0 %v563
  %v565 = vpop.xlane.xlu0 %564
  %v566 = vsel %vm360, %v504, 0.0
  %567 = vadd.xlane.f32.xlu0 %v566
  %v568 = vpop.xlane.xlu0 %567
  %v569 = vsel %vm360, %v505, 0.0
  %570 = vadd.xlane.f32.xlu0 %v569
  %v571 = vpop.xlane.xlu0 %570
  %v572 = vsel %vm360, %v506, 0.0
  %573 = vadd.xlane.f32.xlu0 %v572
  %v574 = vpop.xlane.xlu0 %573
  %v575 = vsel %vm360, %v507, 0.0
  %576 = vadd.xlane.f32.xlu0 %v575
  %v577 = vpop.xlane.xlu0 %576
  %v578 = vsel %vm360, %v508, 0.0
  %579 = vadd.xlane.f32.xlu0 %v578
  %v580 = vpop.xlane.xlu0 %579
  %v581 = vsel %vm360, %v509, 0.0
  %582 = vadd.xlane.f32.xlu0 %v581
  %v583 = vpop.xlane.xlu0 %582
  %v584 = vsel %vm360, %v510, 0.0
  %585 = vadd.xlane.f32.xlu0 %v584
  %v586 = vpop.xlane.xlu0 %585
  %v587 = vsel %vm360, %v511, 0.0
  %588 = vadd.xlane.f32.xlu0 %v587
  %v589 = vpop.xlane.xlu0 %588
  %v590 = vsel %vm360, %v512, 0.0
  %591 = vadd.xlane.f32.xlu0 %v590
  %v592 = vpop.xlane.xlu0 %591
  %v593 = vsel %vm360, %v513, 0.0
  %594 = vadd.xlane.f32.xlu0 %v593
  %v595 = vpop.xlane.xlu0 %594
  %v596 = vsel %vm360, %v514, 0.0
  %597 = vadd.xlane.f32.xlu0 %v596
  %v598 = vpop.xlane.xlu0 %597
  %v599 = vsel %vm360, %v515, 0.0
  %600 = vadd.xlane.f32.xlu0 %v599
  %v601 = vpop.xlane.xlu0 %600
  %v602 = vsel %vm360, %v516, 0.0
  %603 = vadd.xlane.f32.xlu0 %v602
  %v604 = vpop.xlane.xlu0 %603
  %v605 = vsel %vm360, %v517, 0.0
  %606 = vadd.xlane.f32.xlu0 %v605
  %v607 = vpop.xlane.xlu0 %606
  %v608 = vsel %vm360, %v518, 0.0
  %609 = vadd.xlane.f32.xlu0 %v608
  %v610 = vpop.xlane.xlu0 %609
  %v611 = vsel %vm360, %v519, 0.0
  %612 = vadd.xlane.f32.xlu0 %v611
  %v613 = vpop.xlane.xlu0 %612
  %v614 = vsel %vm360, %v520, 0.0
  %615 = vadd.xlane.f32.xlu0 %v614
  %v616 = vpop.xlane.xlu0 %615
  %v617 = vmul.f32 %v523, 0.015625
  %v618 = vmul.f32 %v526, 0.015625
  %v619 = vmul.f32 %v529, 0.015625
  %v620 = vmul.f32 %v532, 0.015625
  %v621 = vmul.f32 %v535, 0.015625
  %v622 = vmul.f32 %v538, 0.015625
  %v623 = vmul.f32 %v541, 0.015625
  %v624 = vmul.f32 %v544, 0.015625
  %v625 = vmul.f32 %v547, 0.015625
  %v626 = vmul.f32 %v550, 0.015625
  %v627 = vmul.f32 %v553, 0.015625
  %v628 = vmul.f32 %v556, 0.015625
  %v629 = vmul.f32 %v559, 0.015625
  %v630 = vmul.f32 %v562, 0.015625
  %v631 = vmul.f32 %v565, 0.015625
  %v632 = vmul.f32 %v568, 0.015625
  %v633 = vmul.f32 %v571, 0.015625
  %v634 = vmul.f32 %v574, 0.015625
  %v635 = vmul.f32 %v577, 0.015625
  %v636 = vmul.f32 %v580, 0.015625
  %v637 = vmul.f32 %v583, 0.015625
  %v638 = vmul.f32 %v586, 0.015625
  %v639 = vmul.f32 %v589, 0.015625
  %v640 = vmul.f32 %v592, 0.015625
  %v641 = vmul.f32 %v595, 0.015625
  %v642 = vmul.f32 %v598, 0.015625
  %v643 = vmul.f32 %v601, 0.015625
  %v644 = vmul.f32 %v604, 0.015625
  %v645 = vmul.f32 %v607, 0.015625
  %v646 = vmul.f32 %v610, 0.015625
  %v647 = vmul.f32 %v613, 0.015625
  %v648 = vmul.f32 %v616, 0.015625
  %v649 = vmul.f32 %v457, %v457
  %v650 = vmul.f32 %v458, %v458
  %v651 = vmul.f32 %v459, %v459
  %v652 = vmul.f32 %v460, %v460
  %v653 = vmul.f32 %v461, %v461
  %v654 = vmul.f32 %v462, %v462
  %v655 = vmul.f32 %v463, %v463
  %v656 = vmul.f32 %v464, %v464
  %v657 = vmul.f32 %v465, %v465
  %v658 = vmul.f32 %v466, %v466
  %v659 = vmul.f32 %v467, %v467
  %v660 = vmul.f32 %v468, %v468
  %v661 = vmul.f32 %v469, %v469
  %v662 = vmul.f32 %v470, %v470
  %v663 = vmul.f32 %v471, %v471
  %v664 = vmul.f32 %v472, %v472
  %v665 = vmul.f32 %v473, %v473
  %v666 = vmul.f32 %v474, %v474
  %v667 = vmul.f32 %v475, %v475
  %v668 = vmul.f32 %v476, %v476
  %v669 = vmul.f32 %v477, %v477
  %v670 = vmul.f32 %v478, %v478
  %v671 = vmul.f32 %v479, %v479
  %v672 = vmul.f32 %v480, %v480
  %v673 = vmul.f32 %v481, %v481
  %v674 = vmul.f32 %v482, %v482
  %v675 = vmul.f32 %v483, %v483
  %v676 = vmul.f32 %v484, %v484
  %v677 = vmul.f32 %v485, %v485
  %v678 = vmul.f32 %v486, %v486
  %v679 = vmul.f32 %v487, %v487
  %v680 = vmul.f32 %v488, %v488
  %v681 = vsub.f32 %v617, %v649
  %v682 = vsub.f32 %v618, %v650
  %v683 = vsub.f32 %v619, %v651
  %v684 = vsub.f32 %v620, %v652
  %v685 = vsub.f32 %v621, %v653
  %v686 = vsub.f32 %v622, %v654
  %v687 = vsub.f32 %v623, %v655
  %v688 = vsub.f32 %v624, %v656
  %v689 = vsub.f32 %v625, %v657
  %v690 = vsub.f32 %v626, %v658
  %v691 = vsub.f32 %v627, %v659
  %v692 = vsub.f32 %v628, %v660
  %v693 = vsub.f32 %v629, %v661
  %v694 = vsub.f32 %v630, %v662
  %v695 = vsub.f32 %v631, %v663
  %v696 = vsub.f32 %v632, %v664
  %v697 = vsub.f32 %v633, %v665
  %v698 = vsub.f32 %v634, %v666
  %v699 = vsub.f32 %v635, %v667
  %v700 = vsub.f32 %v636, %v668
  %v701 = vsub.f32 %v637, %v669
  %v702 = vsub.f32 %v638, %v670
  %v703 = vsub.f32 %v639, %v671
  %v704 = vsub.f32 %v640, %v672
  %v705 = vsub.f32 %v641, %v673
  %v706 = vsub.f32 %v642, %v674
  %v707 = vsub.f32 %v643, %v675
  %v708 = vsub.f32 %v644, %v676
  %v709 = vsub.f32 %v645, %v677
  %v710 = vsub.f32 %v646, %v678
  %v711 = vsub.f32 %v647, %v679
  %v712 = vsub.f32 %v648, %v680
  %v713 = vsub.f32 %v232, %v457
  %v714 = vsub.f32 %v235, %v458
  %v715 = vsub.f32 %v240, %v459
  %v716 = vsub.f32 %v243, %v460
  %v717 = vsub.f32 %v248, %v461
  %v718 = vsub.f32 %v251, %v462
  %v719 = vsub.f32 %v256, %v463
  %v720 = vsub.f32 %v259, %v464
  %v721 = vsub.f32 %v264, %v465
  %v722 = vsub.f32 %v267, %v466
  %v723 = vsub.f32 %v272, %v467
  %v724 = vsub.f32 %v275, %v468
  %v725 = vsub.f32 %v280, %v469
  %v726 = vsub.f32 %v283, %v470
  %v727 = vsub.f32 %v288, %v471
  %v728 = vsub.f32 %v291, %v472
  %v729 = vsub.f32 %v296, %v473
  %v730 = vsub.f32 %v299, %v474
  %v731 = vsub.f32 %v304, %v475
  %v732 = vsub.f32 %v307, %v476
  %v733 = vsub.f32 %v312, %v477
  %v734 = vsub.f32 %v315, %v478
  %v735 = vsub.f32 %v320, %v479
  %v736 = vsub.f32 %v323, %v480
  %v737 = vsub.f32 %v328, %v481
  %v738 = vsub.f32 %v331, %v482
  %v739 = vsub.f32 %v336, %v483
  %v740 = vsub.f32 %v339, %v484
  %v741 = vsub.f32 %v344, %v485
  %v742 = vsub.f32 %v347, %v486
  %v743 = vsub.f32 %v352, %v487
  %v744 = vsub.f32 %v355, %v488
  %v745 = vadd.f32 %v681, 1e-05
  %v746 = vadd.f32 %v682, 1e-05
  %v747 = vadd.f32 %v683, 1e-05
  %v748 = vadd.f32 %v684, 1e-05
  %v749 = vadd.f32 %v685, 1e-05
  %v750 = vadd.f32 %v686, 1e-05
  %v751 = vadd.f32 %v687, 1e-05
  %v752 = vadd.f32 %v688, 1e-05
  %v753 = vadd.f32 %v689, 1e-05
  %v754 = vadd.f32 %v690, 1e-05
  %v755 = vadd.f32 %v691, 1e-05
  %v756 = vadd.f32 %v692, 1e-05
  %v757 = vadd.f32 %v693, 1e-05
  %v758 = vadd.f32 %v694, 1e-05
  %v759 = vadd.f32 %v695, 1e-05
  %v760 = vadd.f32 %v696, 1e-05
  %v761 = vadd.f32 %v697, 1e-05
  %v762 = vadd.f32 %v698, 1e-05
  %v763 = vadd.f32 %v699, 1e-05
  %v764 = vadd.f32 %v700, 1e-05
  %v765 = vadd.f32 %v701, 1e-05
  %v766 = vadd.f32 %v702, 1e-05
  %v767 = vadd.f32 %v703, 1e-05
  %v768 = vadd.f32 %v704, 1e-05
  %v769 = vadd.f32 %v705, 1e-05
  %v770 = vadd.f32 %v706, 1e-05
  %v771 = vadd.f32 %v707, 1e-05
  %v772 = vadd.f32 %v708, 1e-05
  %v773 = vadd.f32 %v709, 1e-05
  %v774 = vadd.f32 %v710, 1e-05
  %v775 = vadd.f32 %v711, 1e-05
  %v776 = vadd.f32 %v712, 1e-05
  %v777 = vrsqrt.pop %v745
  %v778 = vrsqrt.pop %v746
  %v779 = vrsqrt.pop %v747
  %v780 = vrsqrt.pop %v748
  %v781 = vrsqrt.pop %v749
  %v782 = vrsqrt.pop %v750
  %v783 = vrsqrt.pop %v751
  %v784 = vrsqrt.pop %v752
  %v785 = vrsqrt.pop %v753
  %v786 = vrsqrt.pop %v754
  %v787 = vrsqrt.pop %v755
  %v788 = vrsqrt.pop %v756
  %v789 = vrsqrt.pop %v757
  %v790 = vrsqrt.pop %v758
  %v791 = vrsqrt.pop %v759
  %v792 = vrsqrt.pop %v760
  %v793 = vrsqrt.pop %v761
  %v794 = vrsqrt.pop %v762
  %v795 = vrsqrt.pop %v763
  %v796 = vrsqrt.pop %v764
  %v797 = vrsqrt.pop %v765
  %v798 = vrsqrt.pop %v766
  %v799 = vrsqrt.pop %v767
  %v800 = vrsqrt.pop %v768
  %v801 = vrsqrt.pop %v769
  %v802 = vrsqrt.pop %v770
  %v803 = vrsqrt.pop %v771
  %v804 = vrsqrt.pop %v772
  %v805 = vrsqrt.pop %v773
  %v806 = vrsqrt.pop %v774
  %v807 = vrsqrt.pop %v775
  %v808 = vrsqrt.pop %v776
  %v809 = vmul.f32 %v713, %v777
  %v810 = vmul.f32 %v714, %v778
  %v811 = vmul.f32 %v715, %v779
  %v812 = vmul.f32 %v716, %v780
  %v813 = vmul.f32 %v717, %v781
  %v814 = vmul.f32 %v718, %v782
  %v815 = vmul.f32 %v719, %v783
  %v816 = vmul.f32 %v720, %v784
  %v817 = vmul.f32 %v721, %v785
  %v818 = vmul.f32 %v722, %v786
  %v819 = vmul.f32 %v723, %v787
  %v820 = vmul.f32 %v724, %v788
  %v821 = vmul.f32 %v725, %v789
  %v822 = vmul.f32 %v726, %v790
  %v823 = vmul.f32 %v727, %v791
  %v824 = vmul.f32 %v728, %v792
  %v825 = vmul.f32 %v729, %v793
  %v826 = vmul.f32 %v730, %v794
  %v827 = vmul.f32 %v731, %v795
  %v828 = vmul.f32 %v732, %v796
  %v829 = vmul.f32 %v733, %v797
  %v830 = vmul.f32 %v734, %v798
  %v831 = vmul.f32 %v735, %v799
  %v832 = vmul.f32 %v736, %v800
  %v833 = vmul.f32 %v737, %v801
  %v834 = vmul.f32 %v738, %v802
  %v835 = vmul.f32 %v739, %v803
  %v836 = vmul.f32 %v740, %v804
  %v837 = vmul.f32 %v741, %v805
  %v838 = vmul.f32 %v742, %v806
  %v839 = vmul.f32 %v743, %v807
  %v840 = vmul.f32 %v744, %v808
  %v842 = vlaneseq
  %v843 = vshrl.u32 %v842, 7
  %v844 = vsub.s32 0, %v843
  %v845 = vrot.slane %v358, %v844
  %v847 = vmul.f32 %v809, %v845
  %v848 = vmul.f32 %v810, %v845
  %v849 = vmul.f32 %v811, %v845
  %v850 = vmul.f32 %v812, %v845
  %v851 = vmul.f32 %v813, %v845
  %v852 = vmul.f32 %v814, %v845
  %v853 = vmul.f32 %v815, %v845
  %v854 = vmul.f32 %v816, %v845
  %v855 = vmul.f32 %v817, %v845
  %v856 = vmul.f32 %v818, %v845
  %v857 = vmul.f32 %v819, %v845
  %v858 = vmul.f32 %v820, %v845
  %v859 = vmul.f32 %v821, %v845
  %v860 = vmul.f32 %v822, %v845
  %v861 = vmul.f32 %v823, %v845
  %v862 = vmul.f32 %v824, %v845
  %v863 = vmul.f32 %v825, %v845
  %v864 = vmul.f32 %v826, %v845
  %v865 = vmul.f32 %v827, %v845
  %v866 = vmul.f32 %v828, %v845
  %v867 = vmul.f32 %v829, %v845
  %v868 = vmul.f32 %v830, %v845
  %v869 = vmul.f32 %v831, %v845
  %v870 = vmul.f32 %v832, %v845
  %v871 = vmul.f32 %v833, %v845
  %v872 = vmul.f32 %v834, %v845
  %v873 = vmul.f32 %v835, %v845
  %v874 = vmul.f32 %v836, %v845
  %v875 = vmul.f32 %v837, %v845
  %v876 = vmul.f32 %v838, %v845
  %v877 = vmul.f32 %v839, %v845
  %v878 = vmul.f32 %v840, %v845
  %v880 = vlaneseq
  %v881 = vshrl.u32 %v880, 7
  %v882 = vsub.s32 0, %v881
  %v883 = vrot.slane %v359, %v882
  %v885 = vadd.f32 %v847, %v883
  %v886 = vadd.f32 %v848, %v883
  %v887 = vadd.f32 %v849, %v883
  %v888 = vadd.f32 %v850, %v883
  %v889 = vadd.f32 %v851, %v883
  %v890 = vadd.f32 %v852, %v883
  %v891 = vadd.f32 %v853, %v883
  %v892 = vadd.f32 %v854, %v883
  %v893 = vadd.f32 %v855, %v883
  %v894 = vadd.f32 %v856, %v883
  %v895 = vadd.f32 %v857, %v883
  %v896 = vadd.f32 %v858, %v883
  %v897 = vadd.f32 %v859, %v883
  %v898 = vadd.f32 %v860, %v883
  %v899 = vadd.f32 %v861, %v883
  %v900 = vadd.f32 %v862, %v883
  %v901 = vadd.f32 %v863, %v883
  %v902 = vadd.f32 %v864, %v883
  %v903 = vadd.f32 %v865, %v883
  %v904 = vadd.f32 %v866, %v883
  %v905 = vadd.f32 %v867, %v883
  %v906 = vadd.f32 %v868, %v883
  %v907 = vadd.f32 %v869, %v883
  %v908 = vadd.f32 %v870, %v883
  %v909 = vadd.f32 %v871, %v883
  %v910 = vadd.f32 %v872, %v883
  %v911 = vadd.f32 %v873, %v883
  %v912 = vadd.f32 %v874, %v883
  %v913 = vadd.f32 %v875, %v883
  %v914 = vadd.f32 %v876, %v883
  %v915 = vadd.f32 %v877, %v883
  %v916 = vadd.f32 %v878, %v883
  %v917 = vmax.f32 %v885, 0.0
  %v918 = vmax.f32 %v886, 0.0
  %v919 = vmax.f32 %v887, 0.0
  %v920 = vmax.f32 %v888, 0.0
  %v921 = vmax.f32 %v889, 0.0
  %v922 = vmax.f32 %v890, 0.0
  %v923 = vmax.f32 %v891, 0.0
  %v924 = vmax.f32 %v892, 0.0
  %v925 = vmax.f32 %v893, 0.0
  %v926 = vmax.f32 %v894, 0.0
  %v927 = vmax.f32 %v895, 0.0
  %v928 = vmax.f32 %v896, 0.0
  %v929 = vmax.f32 %v897, 0.0
  %v930 = vmax.f32 %v898, 0.0
  %v931 = vmax.f32 %v899, 0.0
  %v932 = vmax.f32 %v900, 0.0
  %v933 = vmax.f32 %v901, 0.0
  %v934 = vmax.f32 %v902, 0.0
  %v935 = vmax.f32 %v903, 0.0
  %v936 = vmax.f32 %v904, 0.0
  %v937 = vmax.f32 %v905, 0.0
  %v938 = vmax.f32 %v906, 0.0
  %v939 = vmax.f32 %v907, 0.0
  %v940 = vmax.f32 %v908, 0.0
  %v941 = vmax.f32 %v909, 0.0
  %v942 = vmax.f32 %v910, 0.0
  %v943 = vmax.f32 %v911, 0.0
  %v944 = vmax.f32 %v912, 0.0
  %v945 = vmax.f32 %v913, 0.0
  %v946 = vmax.f32 %v914, 0.0
  %v947 = vmax.f32 %v915, 0.0
  %v948 = vmax.f32 %v916, 0.0
  %v949 = vpack.c.bf16 %v918, %v917
  %v950 = vpack.c.bf16 %v920, %v919
  %v951 = vpack.c.bf16 %v922, %v921
  %v952 = vpack.c.bf16 %v924, %v923
  %v953 = vpack.c.bf16 %v926, %v925
  %v954 = vpack.c.bf16 %v928, %v927
  %v955 = vpack.c.bf16 %v930, %v929
  %v956 = vpack.c.bf16 %v932, %v931
  %v957 = vpack.c.bf16 %v934, %v933
  %v958 = vpack.c.bf16 %v936, %v935
  %v959 = vpack.c.bf16 %v938, %v937
  %v960 = vpack.c.bf16 %v940, %v939
  %v961 = vpack.c.bf16 %v942, %v941
  %v962 = vpack.c.bf16 %v944, %v943
  %v963 = vpack.c.bf16 %v946, %v945
  %v964 = vpack.c.bf16 %v948, %v947
  %v965 = vld [vmem:[%s5] sm:$0xf]
  %v966 = vld [vmem:[%s5 + $0x4] sm:$0xf]
  %v967 = vld [vmem:[%s5 + $0x8] sm:$0xf]
  %v968 = vld [vmem:[%s5 + $0xc] sm:$0xf]
  %v969 = vld [vmem:[%s5 + $0x10] sm:$0xf]
  %v970 = vld [vmem:[%s5 + $0x14] sm:$0xf]
  %v971 = vld [vmem:[%s5 + $0x18] sm:$0xf]
  %v972 = vld [vmem:[%s5 + $0x1c] sm:$0xf]
  %v973 = vld [vmem:[%s6] sm:$0x1]
  %v975 = vlaneseq
  %v976 = vshrl.u32 %v975, 7
  %v977 = vsub.s32 0, %v976
  %v978 = vrot.slane %v973, %v977
  %v988 = vunpack.c.l.b16 %v965
  %v989 = vunpack.c.l.b16 %v966
  %v990 = vunpack.c.l.b16 %v967
  %v991 = vunpack.c.l.b16 %v968
  %v992 = vunpack.c.l.b16 %v969
  %v993 = vunpack.c.l.b16 %v970
  %v994 = vunpack.c.l.b16 %v971
  %v995 = vunpack.c.l.b16 %v972
  %v996 = vpack.c.b16 %v989, %v988
  %v997 = vpack.c.b16 %v991, %v990
  %v998 = vpack.c.b16 %v993, %v992
  %v999 = vpack.c.b16 %v995, %v994
  %v1005 = vsel %vm360, %v949, 0
  %v1008 = vsel %vm360, %v950, 0
  %v1011 = vsel %vm360, %v951, 0
  %v1014 = vsel %vm360, %v952, 0
  %v1017 = vsel %vm360, %v953, 0
  %v1020 = vsel %vm360, %v954, 0
  %v1023 = vsel %vm360, %v955, 0
  %v1026 = vsel %vm360, %v956, 0
  %v1029 = vsel %vm360, %v957, 0
  %v1032 = vsel %vm360, %v958, 0
  %v1035 = vsel %vm360, %v959, 0
  %v1038 = vsel %vm360, %v960, 0
  %v1041 = vsel %vm360, %v961, 0
  %v1044 = vsel %vm360, %v962, 0
  %v1047 = vsel %vm360, %v963, 0
  %v1050 = vsel %vm360, %v964, 0
  %1052 = vmatprep.subr.bf16.mxu0 0
  %1053 = vmatpush1.bf16.msra.mxu0 %v996
  %1054 = vmatprep.subr.bf16.mxu0 0
  %1055 = vmatpush1.bf16.msra.mxu0 %v997
  %1056 = vmatprep.subr.bf16.mxu0 0
  %1057 = vmatpush1.bf16.msra.mxu0 %v998
  %1058 = vmatprep.subr.bf16.mxu0 0
  %1059 = vmatpush1.bf16.msra.mxu0 %v999
  %1060 = vmatprep.subr.bf16.mxu0 0
  %1061 = vmatpush1.bf16.msra.mxu0 0
  %1062 = vmatprep.subr.bf16.mxu0 0
  %1063 = vmatpush1.bf16.msra.mxu0 0
  %1064 = vmatprep.subr.bf16.mxu0 0
  %1065 = vmatpush1.bf16.msra.mxu0 0
  %1066 = vmatprep.subr.bf16.mxu0 0
  %1067 = vmatpush1.bf16.msra.mxu0 0
  %1068 = vmatprep.subr.bf16.mxu0 0
  %1069 = vmatpush1.bf16.msra.mxu0 0
  %1070 = vmatprep.subr.bf16.mxu0 0
  %1071 = vmatpush1.bf16.msra.mxu0 0
  %1072 = vmatprep.subr.bf16.mxu0 0
  %1073 = vmatpush1.bf16.msra.mxu0 0
  %1074 = vmatprep.subr.bf16.mxu0 0
  %1075 = vmatpush1.bf16.msra.mxu0 0
  %1076 = vmatprep.subr.bf16.mxu0 0
  %1077 = vmatpush1.bf16.msra.mxu0 0
  %1078 = vmatprep.subr.bf16.mxu0 0
  %1079 = vmatpush1.bf16.msra.mxu0 0
  %1080 = vmatprep.subr.bf16.mxu0 0
  %1081 = vmatpush1.bf16.msra.mxu0 0
  %1082 = vmatprep.subr.bf16.mxu0 0
  %1083 = vmatpush1.bf16.msra.mxu0 0
  %1084 = vmatprep.mubr.bf16.mxu0 0
  %1085 = vmatmul.mubr.bf16.gmra.mrb[0].mxu0 %v1005
  %v1086 = vpop.f32.mrb[0].mxu0
  %v1087 = vadd.f32 %v978, %v1086
  %v1088 = vpop.f32.mrb[0].mxu0
  %v1089 = vpop.f32.mrb[0].mxu0
  %v1090 = vadd.f32 %v978, %v1089
  %v1091 = vpop.f32.mrb[0].mxu0
  %1092 = vmatprep.mubr.bf16.mxu0 0
  %1093 = vmatmul.mubr.bf16.gmra.mrb[0].mxu0 %v1008
  %v1094 = vpop.f32.mrb[0].mxu0
  %v1095 = vadd.f32 %v978, %v1094
  %v1096 = vpop.f32.mrb[0].mxu0
  %v1097 = vpop.f32.mrb[0].mxu0
  %v1098 = vadd.f32 %v978, %v1097
  %v1099 = vpop.f32.mrb[0].mxu0
  %1100 = vmatprep.mubr.bf16.mxu0 0
  %1101 = vmatmul.mubr.bf16.gmra.mrb[0].mxu0 %v1011
  %v1102 = vpop.f32.mrb[0].mxu0
  %v1103 = vadd.f32 %v978, %v1102
  %v1104 = vpop.f32.mrb[0].mxu0
  %v1105 = vpop.f32.mrb[0].mxu0
  %v1106 = vadd.f32 %v978, %v1105
  %v1107 = vpop.f32.mrb[0].mxu0
  %1108 = vmatprep.mubr.bf16.mxu0 0
  %1109 = vmatmul.mubr.bf16.gmra.mrb[0].mxu0 %v1014
  %v1110 = vpop.f32.mrb[0].mxu0
  %v1111 = vadd.f32 %v978, %v1110
  %v1112 = vpop.f32.mrb[0].mxu0
  %v1113 = vpop.f32.mrb[0].mxu0
  %v1114 = vadd.f32 %v978, %v1113
  %v1115 = vpop.f32.mrb[0].mxu0
  %1116 = vmatprep.mubr.bf16.mxu0 0
  %1117 = vmatmul.mubr.bf16.gmra.mrb[0].mxu0 %v1017
  %v1118 = vpop.f32.mrb[0].mxu0
  %v1119 = vadd.f32 %v978, %v1118
  %v1120 = vpop.f32.mrb[0].mxu0
  %v1121 = vpop.f32.mrb[0].mxu0
  %v1122 = vadd.f32 %v978, %v1121
  %v1123 = vpop.f32.mrb[0].mxu0
  %1124 = vmatprep.mubr.bf16.mxu0 0
  %1125 = vmatmul.mubr.bf16.gmra.mrb[0].mxu0 %v1020
  %v1126 = vpop.f32.mrb[0].mxu0
  %v1127 = vadd.f32 %v978, %v1126
  %v1128 = vpop.f32.mrb[0].mxu0
  %v1129 = vpop.f32.mrb[0].mxu0
  %v1130 = vadd.f32 %v978, %v1129
  %v1131 = vpop.f32.mrb[0].mxu0
  %1132 = vmatprep.mubr.bf16.mxu0 0
  %1133 = vmatmul.mubr.bf16.gmra.mrb[0].mxu0 %v1023
  %v1134 = vpop.f32.mrb[0].mxu0
  %v1135 = vadd.f32 %v978, %v1134
  %v1136 = vpop.f32.mrb[0].mxu0
  %v1137 = vpop.f32.mrb[0].mxu0
  %v1138 = vadd.f32 %v978, %v1137
  %v1139 = vpop.f32.mrb[0].mxu0
  %1140 = vmatprep.mubr.bf16.mxu0 0
  %1141 = vmatmul.mubr.bf16.gmra.mrb[0].mxu0 %v1026
  %v1142 = vpop.f32.mrb[0].mxu0
  %v1143 = vadd.f32 %v978, %v1142
  %v1144 = vpop.f32.mrb[0].mxu0
  %v1145 = vpop.f32.mrb[0].mxu0
  %v1146 = vadd.f32 %v978, %v1145
  %v1147 = vpop.f32.mrb[0].mxu0
  %1148 = vmatprep.mubr.bf16.mxu0 0
  %1149 = vmatmul.mubr.bf16.gmra.mrb[0].mxu0 %v1029
  %v1150 = vpop.f32.mrb[0].mxu0
  %v1151 = vadd.f32 %v978, %v1150
  %v1152 = vpop.f32.mrb[0].mxu0
  %v1153 = vpop.f32.mrb[0].mxu0
  %v1154 = vadd.f32 %v978, %v1153
  %v1155 = vpop.f32.mrb[0].mxu0
  %1156 = vmatprep.mubr.bf16.mxu0 0
  %1157 = vmatmul.mubr.bf16.gmra.mrb[0].mxu0 %v1032
  %v1158 = vpop.f32.mrb[0].mxu0
  %v1159 = vadd.f32 %v978, %v1158
  %v1160 = vpop.f32.mrb[0].mxu0
  %v1161 = vpop.f32.mrb[0].mxu0
  %v1162 = vadd.f32 %v978, %v1161
  %v1163 = vpop.f32.mrb[0].mxu0
  %1164 = vmatprep.mubr.bf16.mxu0 0
  %1165 = vmatmul.mubr.bf16.gmra.mrb[0].mxu0 %v1035
  %v1166 = vpop.f32.mrb[0].mxu0
  %v1167 = vadd.f32 %v978, %v1166
  %v1168 = vpop.f32.mrb[0].mxu0
  %v1169 = vpop.f32.mrb[0].mxu0
  %v1170 = vadd.f32 %v978, %v1169
  %v1171 = vpop.f32.mrb[0].mxu0
  %1172 = vmatprep.mubr.bf16.mxu0 0
  %1173 = vmatmul.mubr.bf16.gmra.mrb[0].mxu0 %v1038
  %v1174 = vpop.f32.mrb[0].mxu0
  %v1175 = vadd.f32 %v978, %v1174
  %v1176 = vpop.f32.mrb[0].mxu0
  %v1177 = vpop.f32.mrb[0].mxu0
  %v1178 = vadd.f32 %v978, %v1177
  %v1179 = vpop.f32.mrb[0].mxu0
  %1180 = vmatprep.mubr.bf16.mxu0 0
  %1181 = vmatmul.mubr.bf16.gmra.mrb[0].mxu0 %v1041
  %v1182 = vpop.f32.mrb[0].mxu0
  %v1183 = vadd.f32 %v978, %v1182
  %v1184 = vpop.f32.mrb[0].mxu0
  %v1185 = vpop.f32.mrb[0].mxu0
  %v1186 = vadd.f32 %v978, %v1185
  %v1187 = vpop.f32.mrb[0].mxu0
  %1188 = vmatprep.mubr.bf16.mxu0 0
  %1189 = vmatmul.mubr.bf16.gmra.mrb[0].mxu0 %v1044
  %v1190 = vpop.f32.mrb[0].mxu0
  %v1191 = vadd.f32 %v978, %v1190
  %v1192 = vpop.f32.mrb[0].mxu0
  %v1193 = vpop.f32.mrb[0].mxu0
  %v1194 = vadd.f32 %v978, %v1193
  %v1195 = vpop.f32.mrb[0].mxu0
  %1196 = vmatprep.mubr.bf16.mxu0 0
  %1197 = vmatmul.mubr.bf16.gmra.mrb[0].mxu0 %v1047
  %v1198 = vpop.f32.mrb[0].mxu0
  %v1199 = vadd.f32 %v978, %v1198
  %v1200 = vpop.f32.mrb[0].mxu0
  %v1201 = vpop.f32.mrb[0].mxu0
  %v1202 = vadd.f32 %v978, %v1201
  %v1203 = vpop.f32.mrb[0].mxu0
  %1204 = vmatprep.mubr.bf16.mxu0 0
  %1205 = vmatmul.mubr.bf16.gmra.mrb[0].mxu0 %v1050
  %v1206 = vpop.f32.mrb[0].mxu0
  %v1207 = vadd.f32 %v978, %v1206
  %v1208 = vpop.f32.mrb[0].mxu0
  %v1209 = vpop.f32.mrb[0].mxu0
  %v1210 = vadd.f32 %v978, %v1209
  %v1211 = vpop.f32.mrb[0].mxu0
  %1212 = vdwg.mxu0
  %v1213 = vld [vmem:[%s7] sm:$0x1]
  %v1214 = vld [vmem:[%s8] sm:$0x1]
  %vm1215 = vcmask 236544
  %v1216 = vsel %vm1215, %v1087, 0.0
  %1217 = vadd.xlane.f32.xlu0 %v1216
  %v1218 = vpop.xlane.xlu0 %1217
  %v1219 = vsel %vm1215, %v1090, 0.0
  %1220 = vadd.xlane.f32.xlu0 %v1219
  %v1221 = vpop.xlane.xlu0 %1220
  %v1222 = vsel %vm1215, %v1095, 0.0
  %1223 = vadd.xlane.f32.xlu0 %v1222
  %v1224 = vpop.xlane.xlu0 %1223
  %v1225 = vsel %vm1215, %v1098, 0.0
  %1226 = vadd.xlane.f32.xlu0 %v1225
  %v1227 = vpop.xlane.xlu0 %1226
  %v1228 = vsel %vm1215, %v1103, 0.0
  %1229 = vadd.xlane.f32.xlu0 %v1228
  %v1230 = vpop.xlane.xlu0 %1229
  %v1231 = vsel %vm1215, %v1106, 0.0
  %1232 = vadd.xlane.f32.xlu0 %v1231
  %v1233 = vpop.xlane.xlu0 %1232
  %v1234 = vsel %vm1215, %v1111, 0.0
  %1235 = vadd.xlane.f32.xlu0 %v1234
  %v1236 = vpop.xlane.xlu0 %1235
  %v1237 = vsel %vm1215, %v1114, 0.0
  %1238 = vadd.xlane.f32.xlu0 %v1237
  %v1239 = vpop.xlane.xlu0 %1238
  %v1240 = vsel %vm1215, %v1119, 0.0
  %1241 = vadd.xlane.f32.xlu0 %v1240
  %v1242 = vpop.xlane.xlu0 %1241
  %v1243 = vsel %vm1215, %v1122, 0.0
  %1244 = vadd.xlane.f32.xlu0 %v1243
  %v1245 = vpop.xlane.xlu0 %1244
  %v1246 = vsel %vm1215, %v1127, 0.0
  %1247 = vadd.xlane.f32.xlu0 %v1246
  %v1248 = vpop.xlane.xlu0 %1247
  %v1249 = vsel %vm1215, %v1130, 0.0
  %1250 = vadd.xlane.f32.xlu0 %v1249
  %v1251 = vpop.xlane.xlu0 %1250
  %v1252 = vsel %vm1215, %v1135, 0.0
  %1253 = vadd.xlane.f32.xlu0 %v1252
  %v1254 = vpop.xlane.xlu0 %1253
  %v1255 = vsel %vm1215, %v1138, 0.0
  %1256 = vadd.xlane.f32.xlu0 %v1255
  %v1257 = vpop.xlane.xlu0 %1256
  %v1258 = vsel %vm1215, %v1143, 0.0
  %1259 = vadd.xlane.f32.xlu0 %v1258
  %v1260 = vpop.xlane.xlu0 %1259
  %v1261 = vsel %vm1215, %v1146, 0.0
  %1262 = vadd.xlane.f32.xlu0 %v1261
  %v1263 = vpop.xlane.xlu0 %1262
  %v1264 = vsel %vm1215, %v1151, 0.0
  %1265 = vadd.xlane.f32.xlu0 %v1264
  %v1266 = vpop.xlane.xlu0 %1265
  %v1267 = vsel %vm1215, %v1154, 0.0
  %1268 = vadd.xlane.f32.xlu0 %v1267
  %v1269 = vpop.xlane.xlu0 %1268
  %v1270 = vsel %vm1215, %v1159, 0.0
  %1271 = vadd.xlane.f32.xlu0 %v1270
  %v1272 = vpop.xlane.xlu0 %1271
  %v1273 = vsel %vm1215, %v1162, 0.0
  %1274 = vadd.xlane.f32.xlu0 %v1273
  %v1275 = vpop.xlane.xlu0 %1274
  %v1276 = vsel %vm1215, %v1167, 0.0
  %1277 = vadd.xlane.f32.xlu0 %v1276
  %v1278 = vpop.xlane.xlu0 %1277
  %v1279 = vsel %vm1215, %v1170, 0.0
  %1280 = vadd.xlane.f32.xlu0 %v1279
  %v1281 = vpop.xlane.xlu0 %1280
  %v1282 = vsel %vm1215, %v1175, 0.0
  %1283 = vadd.xlane.f32.xlu0 %v1282
  %v1284 = vpop.xlane.xlu0 %1283
  %v1285 = vsel %vm1215, %v1178, 0.0
  %1286 = vadd.xlane.f32.xlu0 %v1285
  %v1287 = vpop.xlane.xlu0 %1286
  %v1288 = vsel %vm1215, %v1183, 0.0
  %1289 = vadd.xlane.f32.xlu0 %v1288
  %v1290 = vpop.xlane.xlu0 %1289
  %v1291 = vsel %vm1215, %v1186, 0.0
  %1292 = vadd.xlane.f32.xlu0 %v1291
  %v1293 = vpop.xlane.xlu0 %1292
  %v1294 = vsel %vm1215, %v1191, 0.0
  %1295 = vadd.xlane.f32.xlu0 %v1294
  %v1296 = vpop.xlane.xlu0 %1295
  %v1297 = vsel %vm1215, %v1194, 0.0
  %1298 = vadd.xlane.f32.xlu0 %v1297
  %v1299 = vpop.xlane.xlu0 %1298
  %v1300 = vsel %vm1215, %v1199, 0.0
  %1301 = vadd.xlane.f32.xlu0 %v1300
  %v1302 = vpop.xlane.xlu0 %1301
  %v1303 = vsel %vm1215, %v1202, 0.0
  %1304 = vadd.xlane.f32.xlu0 %v1303
  %v1305 = vpop.xlane.xlu0 %1304
  %v1306 = vsel %vm1215, %v1207, 0.0
  %1307 = vadd.xlane.f32.xlu0 %v1306
  %v1308 = vpop.xlane.xlu0 %1307
  %v1309 = vsel %vm1215, %v1210, 0.0
  %1310 = vadd.xlane.f32.xlu0 %v1309
  %v1311 = vpop.xlane.xlu0 %1310
  %v1312 = vmul.f32 %v1218, 0.03448276
  %v1313 = vmul.f32 %v1221, 0.03448276
  %v1314 = vmul.f32 %v1224, 0.03448276
  %v1315 = vmul.f32 %v1227, 0.03448276
  %v1316 = vmul.f32 %v1230, 0.03448276
  %v1317 = vmul.f32 %v1233, 0.03448276
  %v1318 = vmul.f32 %v1236, 0.03448276
  %v1319 = vmul.f32 %v1239, 0.03448276
  %v1320 = vmul.f32 %v1242, 0.03448276
  %v1321 = vmul.f32 %v1245, 0.03448276
  %v1322 = vmul.f32 %v1248, 0.03448276
  %v1323 = vmul.f32 %v1251, 0.03448276
  %v1324 = vmul.f32 %v1254, 0.03448276
  %v1325 = vmul.f32 %v1257, 0.03448276
  %v1326 = vmul.f32 %v1260, 0.03448276
  %v1327 = vmul.f32 %v1263, 0.03448276
  %v1328 = vmul.f32 %v1266, 0.03448276
  %v1329 = vmul.f32 %v1269, 0.03448276
  %v1330 = vmul.f32 %v1272, 0.03448276
  %v1331 = vmul.f32 %v1275, 0.03448276
  %v1332 = vmul.f32 %v1278, 0.03448276
  %v1333 = vmul.f32 %v1281, 0.03448276
  %v1334 = vmul.f32 %v1284, 0.03448276
  %v1335 = vmul.f32 %v1287, 0.03448276
  %v1336 = vmul.f32 %v1290, 0.03448276
  %v1337 = vmul.f32 %v1293, 0.03448276
  %v1338 = vmul.f32 %v1296, 0.03448276
  %v1339 = vmul.f32 %v1299, 0.03448276
  %v1340 = vmul.f32 %v1302, 0.03448276
  %v1341 = vmul.f32 %v1305, 0.03448276
  %v1342 = vmul.f32 %v1308, 0.03448276
  %v1343 = vmul.f32 %v1311, 0.03448276
  %v1344 = vmul.f32 %v1087, %v1087
  %v1345 = vmul.f32 %v1090, %v1090
  %v1346 = vmul.f32 %v1095, %v1095
  %v1347 = vmul.f32 %v1098, %v1098
  %v1348 = vmul.f32 %v1103, %v1103
  %v1349 = vmul.f32 %v1106, %v1106
  %v1350 = vmul.f32 %v1111, %v1111
  %v1351 = vmul.f32 %v1114, %v1114
  %v1352 = vmul.f32 %v1119, %v1119
  %v1353 = vmul.f32 %v1122, %v1122
  %v1354 = vmul.f32 %v1127, %v1127
  %v1355 = vmul.f32 %v1130, %v1130
  %v1356 = vmul.f32 %v1135, %v1135
  %v1357 = vmul.f32 %v1138, %v1138
  %v1358 = vmul.f32 %v1143, %v1143
  %v1359 = vmul.f32 %v1146, %v1146
  %v1360 = vmul.f32 %v1151, %v1151
  %v1361 = vmul.f32 %v1154, %v1154
  %v1362 = vmul.f32 %v1159, %v1159
  %v1363 = vmul.f32 %v1162, %v1162
  %v1364 = vmul.f32 %v1167, %v1167
  %v1365 = vmul.f32 %v1170, %v1170
  %v1366 = vmul.f32 %v1175, %v1175
  %v1367 = vmul.f32 %v1178, %v1178
  %v1368 = vmul.f32 %v1183, %v1183
  %v1369 = vmul.f32 %v1186, %v1186
  %v1370 = vmul.f32 %v1191, %v1191
  %v1371 = vmul.f32 %v1194, %v1194
  %v1372 = vmul.f32 %v1199, %v1199
  %v1373 = vmul.f32 %v1202, %v1202
  %v1374 = vmul.f32 %v1207, %v1207
  %v1375 = vmul.f32 %v1210, %v1210
  %v1376 = vsel %vm1215, %v1344, 0.0
  %1377 = vadd.xlane.f32.xlu0 %v1376
  %v1378 = vpop.xlane.xlu0 %1377
  %v1379 = vsel %vm1215, %v1345, 0.0
  %1380 = vadd.xlane.f32.xlu0 %v1379
  %v1381 = vpop.xlane.xlu0 %1380
  %v1382 = vsel %vm1215, %v1346, 0.0
  %1383 = vadd.xlane.f32.xlu0 %v1382
  %v1384 = vpop.xlane.xlu0 %1383
  %v1385 = vsel %vm1215, %v1347, 0.0
  %1386 = vadd.xlane.f32.xlu0 %v1385
  %v1387 = vpop.xlane.xlu0 %1386
  %v1388 = vsel %vm1215, %v1348, 0.0
  %1389 = vadd.xlane.f32.xlu0 %v1388
  %v1390 = vpop.xlane.xlu0 %1389
  %v1391 = vsel %vm1215, %v1349, 0.0
  %1392 = vadd.xlane.f32.xlu0 %v1391
  %v1393 = vpop.xlane.xlu0 %1392
  %v1394 = vsel %vm1215, %v1350, 0.0
  %1395 = vadd.xlane.f32.xlu0 %v1394
  %v1396 = vpop.xlane.xlu0 %1395
  %v1397 = vsel %vm1215, %v1351, 0.0
  %1398 = vadd.xlane.f32.xlu0 %v1397
  %v1399 = vpop.xlane.xlu0 %1398
  %v1400 = vsel %vm1215, %v1352, 0.0
  %1401 = vadd.xlane.f32.xlu0 %v1400
  %v1402 = vpop.xlane.xlu0 %1401
  %v1403 = vsel %vm1215, %v1353, 0.0
  %1404 = vadd.xlane.f32.xlu0 %v1403
  %v1405 = vpop.xlane.xlu0 %1404
  %v1406 = vsel %vm1215, %v1354, 0.0
  %1407 = vadd.xlane.f32.xlu0 %v1406
  %v1408 = vpop.xlane.xlu0 %1407
  %v1409 = vsel %vm1215, %v1355, 0.0
  %1410 = vadd.xlane.f32.xlu0 %v1409
  %v1411 = vpop.xlane.xlu0 %1410
  %v1412 = vsel %vm1215, %v1356, 0.0
  %1413 = vadd.xlane.f32.xlu0 %v1412
  %v1414 = vpop.xlane.xlu0 %1413
  %v1415 = vsel %vm1215, %v1357, 0.0
  %1416 = vadd.xlane.f32.xlu0 %v1415
  %v1417 = vpop.xlane.xlu0 %1416
  %v1418 = vsel %vm1215, %v1358, 0.0
  %1419 = vadd.xlane.f32.xlu0 %v1418
  %v1420 = vpop.xlane.xlu0 %1419
  %v1421 = vsel %vm1215, %v1359, 0.0
  %1422 = vadd.xlane.f32.xlu0 %v1421
  %v1423 = vpop.xlane.xlu0 %1422
  %v1424 = vsel %vm1215, %v1360, 0.0
  %1425 = vadd.xlane.f32.xlu0 %v1424
  %v1426 = vpop.xlane.xlu0 %1425
  %v1427 = vsel %vm1215, %v1361, 0.0
  %1428 = vadd.xlane.f32.xlu0 %v1427
  %v1429 = vpop.xlane.xlu0 %1428
  %v1430 = vsel %vm1215, %v1362, 0.0
  %1431 = vadd.xlane.f32.xlu0 %v1430
  %v1432 = vpop.xlane.xlu0 %1431
  %v1433 = vsel %vm1215, %v1363, 0.0
  %1434 = vadd.xlane.f32.xlu0 %v1433
  %v1435 = vpop.xlane.xlu0 %1434
  %v1436 = vsel %vm1215, %v1364, 0.0
  %1437 = vadd.xlane.f32.xlu0 %v1436
  %v1438 = vpop.xlane.xlu0 %1437
  %v1439 = vsel %vm1215, %v1365, 0.0
  %1440 = vadd.xlane.f32.xlu0 %v1439
  %v1441 = vpop.xlane.xlu0 %1440
  %v1442 = vsel %vm1215, %v1366, 0.0
  %1443 = vadd.xlane.f32.xlu0 %v1442
  %v1444 = vpop.xlane.xlu0 %1443
  %v1445 = vsel %vm1215, %v1367, 0.0
  %1446 = vadd.xlane.f32.xlu0 %v1445
  %v1447 = vpop.xlane.xlu0 %1446
  %v1448 = vsel %vm1215, %v1368, 0.0
  %1449 = vadd.xlane.f32.xlu0 %v1448
  %v1450 = vpop.xlane.xlu0 %1449
  %v1451 = vsel %vm1215, %v1369, 0.0
  %1452 = vadd.xlane.f32.xlu0 %v1451
  %v1453 = vpop.xlane.xlu0 %1452
  %v1454 = vsel %vm1215, %v1370, 0.0
  %1455 = vadd.xlane.f32.xlu0 %v1454
  %v1456 = vpop.xlane.xlu0 %1455
  %v1457 = vsel %vm1215, %v1371, 0.0
  %1458 = vadd.xlane.f32.xlu0 %v1457
  %v1459 = vpop.xlane.xlu0 %1458
  %v1460 = vsel %vm1215, %v1372, 0.0
  %1461 = vadd.xlane.f32.xlu0 %v1460
  %v1462 = vpop.xlane.xlu0 %1461
  %v1463 = vsel %vm1215, %v1373, 0.0
  %1464 = vadd.xlane.f32.xlu0 %v1463
  %v1465 = vpop.xlane.xlu0 %1464
  %v1466 = vsel %vm1215, %v1374, 0.0
  %1467 = vadd.xlane.f32.xlu0 %v1466
  %v1468 = vpop.xlane.xlu0 %1467
  %v1469 = vsel %vm1215, %v1375, 0.0
  %1470 = vadd.xlane.f32.xlu0 %v1469
  %v1471 = vpop.xlane.xlu0 %1470
  %v1472 = vmul.f32 %v1378, 0.03448276
  %v1473 = vmul.f32 %v1381, 0.03448276
  %v1474 = vmul.f32 %v1384, 0.03448276
  %v1475 = vmul.f32 %v1387, 0.03448276
  %v1476 = vmul.f32 %v1390, 0.03448276
  %v1477 = vmul.f32 %v1393, 0.03448276
  %v1478 = vmul.f32 %v1396, 0.03448276
  %v1479 = vmul.f32 %v1399, 0.03448276
  %v1480 = vmul.f32 %v1402, 0.03448276
  %v1481 = vmul.f32 %v1405, 0.03448276
  %v1482 = vmul.f32 %v1408, 0.03448276
  %v1483 = vmul.f32 %v1411, 0.03448276
  %v1484 = vmul.f32 %v1414, 0.03448276
  %v1485 = vmul.f32 %v1417, 0.03448276
  %v1486 = vmul.f32 %v1420, 0.03448276
  %v1487 = vmul.f32 %v1423, 0.03448276
  %v1488 = vmul.f32 %v1426, 0.03448276
  %v1489 = vmul.f32 %v1429, 0.03448276
  %v1490 = vmul.f32 %v1432, 0.03448276
  %v1491 = vmul.f32 %v1435, 0.03448276
  %v1492 = vmul.f32 %v1438, 0.03448276
  %v1493 = vmul.f32 %v1441, 0.03448276
  %v1494 = vmul.f32 %v1444, 0.03448276
  %v1495 = vmul.f32 %v1447, 0.03448276
  %v1496 = vmul.f32 %v1450, 0.03448276
  %v1497 = vmul.f32 %v1453, 0.03448276
  %v1498 = vmul.f32 %v1456, 0.03448276
  %v1499 = vmul.f32 %v1459, 0.03448276
  %v1500 = vmul.f32 %v1462, 0.03448276
  %v1501 = vmul.f32 %v1465, 0.03448276
  %v1502 = vmul.f32 %v1468, 0.03448276
  %v1503 = vmul.f32 %v1471, 0.03448276
  %v1504 = vmul.f32 %v1312, %v1312
  %v1505 = vmul.f32 %v1313, %v1313
  %v1506 = vmul.f32 %v1314, %v1314
  %v1507 = vmul.f32 %v1315, %v1315
  %v1508 = vmul.f32 %v1316, %v1316
  %v1509 = vmul.f32 %v1317, %v1317
  %v1510 = vmul.f32 %v1318, %v1318
  %v1511 = vmul.f32 %v1319, %v1319
  %v1512 = vmul.f32 %v1320, %v1320
  %v1513 = vmul.f32 %v1321, %v1321
  %v1514 = vmul.f32 %v1322, %v1322
  %v1515 = vmul.f32 %v1323, %v1323
  %v1516 = vmul.f32 %v1324, %v1324
  %v1517 = vmul.f32 %v1325, %v1325
  %v1518 = vmul.f32 %v1326, %v1326
  %v1519 = vmul.f32 %v1327, %v1327
  %v1520 = vmul.f32 %v1328, %v1328
  %v1521 = vmul.f32 %v1329, %v1329
  %v1522 = vmul.f32 %v1330, %v1330
  %v1523 = vmul.f32 %v1331, %v1331
  %v1524 = vmul.f32 %v1332, %v1332
  %v1525 = vmul.f32 %v1333, %v1333
  %v1526 = vmul.f32 %v1334, %v1334
  %v1527 = vmul.f32 %v1335, %v1335
  %v1528 = vmul.f32 %v1336, %v1336
  %v1529 = vmul.f32 %v1337, %v1337
  %v1530 = vmul.f32 %v1338, %v1338
  %v1531 = vmul.f32 %v1339, %v1339
  %v1532 = vmul.f32 %v1340, %v1340
  %v1533 = vmul.f32 %v1341, %v1341
  %v1534 = vmul.f32 %v1342, %v1342
  %v1535 = vmul.f32 %v1343, %v1343
  %v1536 = vsub.f32 %v1472, %v1504
  %v1537 = vsub.f32 %v1473, %v1505
  %v1538 = vsub.f32 %v1474, %v1506
  %v1539 = vsub.f32 %v1475, %v1507
  %v1540 = vsub.f32 %v1476, %v1508
  %v1541 = vsub.f32 %v1477, %v1509
  %v1542 = vsub.f32 %v1478, %v1510
  %v1543 = vsub.f32 %v1479, %v1511
  %v1544 = vsub.f32 %v1480, %v1512
  %v1545 = vsub.f32 %v1481, %v1513
  %v1546 = vsub.f32 %v1482, %v1514
  %v1547 = vsub.f32 %v1483, %v1515
  %v1548 = vsub.f32 %v1484, %v1516
  %v1549 = vsub.f32 %v1485, %v1517
  %v1550 = vsub.f32 %v1486, %v1518
  %v1551 = vsub.f32 %v1487, %v1519
  %v1552 = vsub.f32 %v1488, %v1520
  %v1553 = vsub.f32 %v1489, %v1521
  %v1554 = vsub.f32 %v1490, %v1522
  %v1555 = vsub.f32 %v1491, %v1523
  %v1556 = vsub.f32 %v1492, %v1524
  %v1557 = vsub.f32 %v1493, %v1525
  %v1558 = vsub.f32 %v1494, %v1526
  %v1559 = vsub.f32 %v1495, %v1527
  %v1560 = vsub.f32 %v1496, %v1528
  %v1561 = vsub.f32 %v1497, %v1529
  %v1562 = vsub.f32 %v1498, %v1530
  %v1563 = vsub.f32 %v1499, %v1531
  %v1564 = vsub.f32 %v1500, %v1532
  %v1565 = vsub.f32 %v1501, %v1533
  %v1566 = vsub.f32 %v1502, %v1534
  %v1567 = vsub.f32 %v1503, %v1535
  %v1568 = vsub.f32 %v1087, %v1312
  %v1569 = vsub.f32 %v1090, %v1313
  %v1570 = vsub.f32 %v1095, %v1314
  %v1571 = vsub.f32 %v1098, %v1315
  %v1572 = vsub.f32 %v1103, %v1316
  %v1573 = vsub.f32 %v1106, %v1317
  %v1574 = vsub.f32 %v1111, %v1318
  %v1575 = vsub.f32 %v1114, %v1319
  %v1576 = vsub.f32 %v1119, %v1320
  %v1577 = vsub.f32 %v1122, %v1321
  %v1578 = vsub.f32 %v1127, %v1322
  %v1579 = vsub.f32 %v1130, %v1323
  %v1580 = vsub.f32 %v1135, %v1324
  %v1581 = vsub.f32 %v1138, %v1325
  %v1582 = vsub.f32 %v1143, %v1326
  %v1583 = vsub.f32 %v1146, %v1327
  %v1584 = vsub.f32 %v1151, %v1328
  %v1585 = vsub.f32 %v1154, %v1329
  %v1586 = vsub.f32 %v1159, %v1330
  %v1587 = vsub.f32 %v1162, %v1331
  %v1588 = vsub.f32 %v1167, %v1332
  %v1589 = vsub.f32 %v1170, %v1333
  %v1590 = vsub.f32 %v1175, %v1334
  %v1591 = vsub.f32 %v1178, %v1335
  %v1592 = vsub.f32 %v1183, %v1336
  %v1593 = vsub.f32 %v1186, %v1337
  %v1594 = vsub.f32 %v1191, %v1338
  %v1595 = vsub.f32 %v1194, %v1339
  %v1596 = vsub.f32 %v1199, %v1340
  %v1597 = vsub.f32 %v1202, %v1341
  %v1598 = vsub.f32 %v1207, %v1342
  %v1599 = vsub.f32 %v1210, %v1343
  %v1600 = vadd.f32 %v1536, 1e-05
  %v1601 = vadd.f32 %v1537, 1e-05
  %v1602 = vadd.f32 %v1538, 1e-05
  %v1603 = vadd.f32 %v1539, 1e-05
  %v1604 = vadd.f32 %v1540, 1e-05
  %v1605 = vadd.f32 %v1541, 1e-05
  %v1606 = vadd.f32 %v1542, 1e-05
  %v1607 = vadd.f32 %v1543, 1e-05
  %v1608 = vadd.f32 %v1544, 1e-05
  %v1609 = vadd.f32 %v1545, 1e-05
  %v1610 = vadd.f32 %v1546, 1e-05
  %v1611 = vadd.f32 %v1547, 1e-05
  %v1612 = vadd.f32 %v1548, 1e-05
  %v1613 = vadd.f32 %v1549, 1e-05
  %v1614 = vadd.f32 %v1550, 1e-05
  %v1615 = vadd.f32 %v1551, 1e-05
  %v1616 = vadd.f32 %v1552, 1e-05
  %v1617 = vadd.f32 %v1553, 1e-05
  %v1618 = vadd.f32 %v1554, 1e-05
  %v1619 = vadd.f32 %v1555, 1e-05
  %v1620 = vadd.f32 %v1556, 1e-05
  %v1621 = vadd.f32 %v1557, 1e-05
  %v1622 = vadd.f32 %v1558, 1e-05
  %v1623 = vadd.f32 %v1559, 1e-05
  %v1624 = vadd.f32 %v1560, 1e-05
  %v1625 = vadd.f32 %v1561, 1e-05
  %v1626 = vadd.f32 %v1562, 1e-05
  %v1627 = vadd.f32 %v1563, 1e-05
  %v1628 = vadd.f32 %v1564, 1e-05
  %v1629 = vadd.f32 %v1565, 1e-05
  %v1630 = vadd.f32 %v1566, 1e-05
  %v1631 = vadd.f32 %v1567, 1e-05
  %v1632 = vrsqrt.pop %v1600
  %v1633 = vrsqrt.pop %v1601
  %v1634 = vrsqrt.pop %v1602
  %v1635 = vrsqrt.pop %v1603
  %v1636 = vrsqrt.pop %v1604
  %v1637 = vrsqrt.pop %v1605
  %v1638 = vrsqrt.pop %v1606
  %v1639 = vrsqrt.pop %v1607
  %v1640 = vrsqrt.pop %v1608
  %v1641 = vrsqrt.pop %v1609
  %v1642 = vrsqrt.pop %v1610
  %v1643 = vrsqrt.pop %v1611
  %v1644 = vrsqrt.pop %v1612
  %v1645 = vrsqrt.pop %v1613
  %v1646 = vrsqrt.pop %v1614
  %v1647 = vrsqrt.pop %v1615
  %v1648 = vrsqrt.pop %v1616
  %v1649 = vrsqrt.pop %v1617
  %v1650 = vrsqrt.pop %v1618
  %v1651 = vrsqrt.pop %v1619
  %v1652 = vrsqrt.pop %v1620
  %v1653 = vrsqrt.pop %v1621
  %v1654 = vrsqrt.pop %v1622
  %v1655 = vrsqrt.pop %v1623
  %v1656 = vrsqrt.pop %v1624
  %v1657 = vrsqrt.pop %v1625
  %v1658 = vrsqrt.pop %v1626
  %v1659 = vrsqrt.pop %v1627
  %v1660 = vrsqrt.pop %v1628
  %v1661 = vrsqrt.pop %v1629
  %v1662 = vrsqrt.pop %v1630
  %v1663 = vrsqrt.pop %v1631
  %v1664 = vmul.f32 %v1568, %v1632
  %v1665 = vmul.f32 %v1569, %v1633
  %v1666 = vmul.f32 %v1570, %v1634
  %v1667 = vmul.f32 %v1571, %v1635
  %v1668 = vmul.f32 %v1572, %v1636
  %v1669 = vmul.f32 %v1573, %v1637
  %v1670 = vmul.f32 %v1574, %v1638
  %v1671 = vmul.f32 %v1575, %v1639
  %v1672 = vmul.f32 %v1576, %v1640
  %v1673 = vmul.f32 %v1577, %v1641
  %v1674 = vmul.f32 %v1578, %v1642
  %v1675 = vmul.f32 %v1579, %v1643
  %v1676 = vmul.f32 %v1580, %v1644
  %v1677 = vmul.f32 %v1581, %v1645
  %v1678 = vmul.f32 %v1582, %v1646
  %v1679 = vmul.f32 %v1583, %v1647
  %v1680 = vmul.f32 %v1584, %v1648
  %v1681 = vmul.f32 %v1585, %v1649
  %v1682 = vmul.f32 %v1586, %v1650
  %v1683 = vmul.f32 %v1587, %v1651
  %v1684 = vmul.f32 %v1588, %v1652
  %v1685 = vmul.f32 %v1589, %v1653
  %v1686 = vmul.f32 %v1590, %v1654
  %v1687 = vmul.f32 %v1591, %v1655
  %v1688 = vmul.f32 %v1592, %v1656
  %v1689 = vmul.f32 %v1593, %v1657
  %v1690 = vmul.f32 %v1594, %v1658
  %v1691 = vmul.f32 %v1595, %v1659
  %v1692 = vmul.f32 %v1596, %v1660
  %v1693 = vmul.f32 %v1597, %v1661
  %v1694 = vmul.f32 %v1598, %v1662
  %v1695 = vmul.f32 %v1599, %v1663
  %v1697 = vlaneseq
  %v1698 = vshrl.u32 %v1697, 7
  %v1699 = vsub.s32 0, %v1698
  %v1700 = vrot.slane %v1213, %v1699
  %v1702 = vmul.f32 %v1664, %v1700
  %v1703 = vmul.f32 %v1665, %v1700
  %v1704 = vmul.f32 %v1666, %v1700
  %v1705 = vmul.f32 %v1667, %v1700
  %v1706 = vmul.f32 %v1668, %v1700
  %v1707 = vmul.f32 %v1669, %v1700
  %v1708 = vmul.f32 %v1670, %v1700
  %v1709 = vmul.f32 %v1671, %v1700
  %v1710 = vmul.f32 %v1672, %v1700
  %v1711 = vmul.f32 %v1673, %v1700
  %v1712 = vmul.f32 %v1674, %v1700
  %v1713 = vmul.f32 %v1675, %v1700
  %v1714 = vmul.f32 %v1676, %v1700
  %v1715 = vmul.f32 %v1677, %v1700
  %v1716 = vmul.f32 %v1678, %v1700
  %v1717 = vmul.f32 %v1679, %v1700
  %v1718 = vmul.f32 %v1680, %v1700
  %v1719 = vmul.f32 %v1681, %v1700
  %v1720 = vmul.f32 %v1682, %v1700
  %v1721 = vmul.f32 %v1683, %v1700
  %v1722 = vmul.f32 %v1684, %v1700
  %v1723 = vmul.f32 %v1685, %v1700
  %v1724 = vmul.f32 %v1686, %v1700
  %v1725 = vmul.f32 %v1687, %v1700
  %v1726 = vmul.f32 %v1688, %v1700
  %v1727 = vmul.f32 %v1689, %v1700
  %v1728 = vmul.f32 %v1690, %v1700
  %v1729 = vmul.f32 %v1691, %v1700
  %v1730 = vmul.f32 %v1692, %v1700
  %v1731 = vmul.f32 %v1693, %v1700
  %v1732 = vmul.f32 %v1694, %v1700
  %v1733 = vmul.f32 %v1695, %v1700
  %v1735 = vlaneseq
  %v1736 = vshrl.u32 %v1735, 7
  %v1737 = vsub.s32 0, %v1736
  %v1738 = vrot.slane %v1214, %v1737
  %v1740 = vadd.f32 %v1702, %v1738
  %v1741 = vadd.f32 %v1703, %v1738
  %v1742 = vadd.f32 %v1704, %v1738
  %v1743 = vadd.f32 %v1705, %v1738
  %v1744 = vadd.f32 %v1706, %v1738
  %v1745 = vadd.f32 %v1707, %v1738
  %v1746 = vadd.f32 %v1708, %v1738
  %v1747 = vadd.f32 %v1709, %v1738
  %v1748 = vadd.f32 %v1710, %v1738
  %v1749 = vadd.f32 %v1711, %v1738
  %v1750 = vadd.f32 %v1712, %v1738
  %v1751 = vadd.f32 %v1713, %v1738
  %v1752 = vadd.f32 %v1714, %v1738
  %v1753 = vadd.f32 %v1715, %v1738
  %v1754 = vadd.f32 %v1716, %v1738
  %v1755 = vadd.f32 %v1717, %v1738
  %v1756 = vadd.f32 %v1718, %v1738
  %v1757 = vadd.f32 %v1719, %v1738
  %v1758 = vadd.f32 %v1720, %v1738
  %v1759 = vadd.f32 %v1721, %v1738
  %v1760 = vadd.f32 %v1722, %v1738
  %v1761 = vadd.f32 %v1723, %v1738
  %v1762 = vadd.f32 %v1724, %v1738
  %v1763 = vadd.f32 %v1725, %v1738
  %v1764 = vadd.f32 %v1726, %v1738
  %v1765 = vadd.f32 %v1727, %v1738
  %v1766 = vadd.f32 %v1728, %v1738
  %v1767 = vadd.f32 %v1729, %v1738
  %v1768 = vadd.f32 %v1730, %v1738
  %v1769 = vadd.f32 %v1731, %v1738
  %v1770 = vadd.f32 %v1732, %v1738
  %v1771 = vadd.f32 %v1733, %v1738
  %v1772 = vmax.f32 %v1740, 0.0
  %v1773 = vmax.f32 %v1741, 0.0
  %v1774 = vmax.f32 %v1742, 0.0
  %v1775 = vmax.f32 %v1743, 0.0
  %v1776 = vmax.f32 %v1744, 0.0
  %v1777 = vmax.f32 %v1745, 0.0
  %v1778 = vmax.f32 %v1746, 0.0
  %v1779 = vmax.f32 %v1747, 0.0
  %v1780 = vmax.f32 %v1748, 0.0
  %v1781 = vmax.f32 %v1749, 0.0
  %v1782 = vmax.f32 %v1750, 0.0
  %v1783 = vmax.f32 %v1751, 0.0
  %v1784 = vmax.f32 %v1752, 0.0
  %v1785 = vmax.f32 %v1753, 0.0
  %v1786 = vmax.f32 %v1754, 0.0
  %v1787 = vmax.f32 %v1755, 0.0
  %v1788 = vmax.f32 %v1756, 0.0
  %v1789 = vmax.f32 %v1757, 0.0
  %v1790 = vmax.f32 %v1758, 0.0
  %v1791 = vmax.f32 %v1759, 0.0
  %v1792 = vmax.f32 %v1760, 0.0
  %v1793 = vmax.f32 %v1761, 0.0
  %v1794 = vmax.f32 %v1762, 0.0
  %v1795 = vmax.f32 %v1763, 0.0
  %v1796 = vmax.f32 %v1764, 0.0
  %v1797 = vmax.f32 %v1765, 0.0
  %v1798 = vmax.f32 %v1766, 0.0
  %v1799 = vmax.f32 %v1767, 0.0
  %v1800 = vmax.f32 %v1768, 0.0
  %v1801 = vmax.f32 %v1769, 0.0
  %v1802 = vmax.f32 %v1770, 0.0
  %v1803 = vmax.f32 %v1771, 0.0
  %v1804 = vpack.c.bf16 %v1773, %v1772
  %v1805 = vpack.c.bf16 %v1775, %v1774
  %v1806 = vpack.c.bf16 %v1777, %v1776
  %v1807 = vpack.c.bf16 %v1779, %v1778
  %v1808 = vpack.c.bf16 %v1781, %v1780
  %v1809 = vpack.c.bf16 %v1783, %v1782
  %v1810 = vpack.c.bf16 %v1785, %v1784
  %v1811 = vpack.c.bf16 %v1787, %v1786
  %v1812 = vpack.c.bf16 %v1789, %v1788
  %v1813 = vpack.c.bf16 %v1791, %v1790
  %v1814 = vpack.c.bf16 %v1793, %v1792
  %v1815 = vpack.c.bf16 %v1795, %v1794
  %v1816 = vpack.c.bf16 %v1797, %v1796
  %v1817 = vpack.c.bf16 %v1799, %v1798
  %v1818 = vpack.c.bf16 %v1801, %v1800
  %v1819 = vpack.c.bf16 %v1803, %v1802
  %v1820 = vld [vmem:[%s9] sm:$0xf]
  %v1821 = vld [vmem:[%s9 + $0x4] sm:$0xf]
  %v1822 = vld [vmem:[%s9 + $0x8] sm:$0xf]
  %v1823 = vld [vmem:[%s9 + $0xc] sm:$0x7]
  %v1824 = vld [vmem:[%s10] sm:$0xf]
  %v1825 = vld [vmem:[%s10 + $0x4] sm:$0xf]
  %v1826 = vld [vmem:[%s10 + $0x8] sm:$0xf]
  %v1827 = vld [vmem:[%s10 + $0xc] sm:$0xf]
  %v1828 = vld [vmem:[%s10 + $0x10] sm:$0x3]
  %v1829 = vld [vmem:[%s11] sm:$0x1]
  %v1835 = vunpack.c.l.b16 %v1824
  %v1836 = vunpack.c.l.b16 %v1825
  %v1837 = vunpack.c.l.b16 %v1826
  %v1838 = vunpack.c.l.b16 %v1827
  %v1839 = vunpack.c.l.b16 %v1828
  %v1840 = vpack.c.b16 %v1836, %v1835
  %v1841 = vpack.c.b16 %v1838, %v1837
  %v1842 = vpack.c.b16 %v1839, %v1839
  %v1846 = vand.u32 %v1842, %v193
  %1848 = vmatprep.subr.bf16.mxu0 0
  %1849 = vmatpush1.bf16.msra.mxu0 %v1840
  %1850 = vmatprep.subr.bf16.mxu0 0
  %1851 = vmatpush1.bf16.msra.mxu0 %v1841
  %1852 = vmatprep.subr.bf16.mxu0 0
  %1853 = vmatpush1.bf16.msra.mxu0 %v1846
  %1854 = vmatprep.subr.bf16.mxu0 0
  %1855 = vmatpush1.bf16.msra.mxu0 0
  %1856 = vmatprep.subr.bf16.mxu0 0
  %1857 = vmatpush1.bf16.msra.mxu0 0
  %1858 = vmatprep.subr.bf16.mxu0 0
  %1859 = vmatpush1.bf16.msra.mxu0 0
  %1860 = vmatprep.subr.bf16.mxu0 0
  %1861 = vmatpush1.bf16.msra.mxu0 0
  %1862 = vmatprep.subr.bf16.mxu0 0
  %1863 = vmatpush1.bf16.msra.mxu0 0
  %1864 = vmatprep.subr.bf16.mxu0 0
  %1865 = vmatpush1.bf16.msra.mxu0 0
  %1866 = vmatprep.subr.bf16.mxu0 0
  %1867 = vmatpush1.bf16.msra.mxu0 0
  %1868 = vmatprep.subr.bf16.mxu0 0
  %1869 = vmatpush1.bf16.msra.mxu0 0
  %1870 = vmatprep.subr.bf16.mxu0 0
  %1871 = vmatpush1.bf16.msra.mxu0 0
  %1872 = vmatprep.subr.bf16.mxu0 0
  %1873 = vmatpush1.bf16.msra.mxu0 0
  %1874 = vmatprep.subr.bf16.mxu0 0
  %1875 = vmatpush1.bf16.msra.mxu0 0
  %1876 = vmatprep.subr.bf16.mxu0 0
  %1877 = vmatpush1.bf16.msra.mxu0 0
  %1878 = vmatprep.subr.bf16.mxu0 0
  %1879 = vmatpush1.bf16.msra.mxu0 0
  %1880 = vmatprep.mubr.bf16.mxu0 0
  %1881 = vmatmul.mubr.bf16.gmra.mrb[0].mxu0 %v143
  %v1882 = vpop.f32.mrb[0].mxu0
  %v1883 = vadd.f32 0.0, %v1882
  %v1884 = vpop.f32.mrb[0].mxu0
  %v1885 = vpop.f32.mrb[0].mxu0
  %v1886 = vadd.f32 0.0, %v1885
  %v1887 = vpop.f32.mrb[0].mxu0
  %1888 = vmatprep.mubr.bf16.mxu0 0
  %1889 = vmatmul.mubr.bf16.gmra.mrb[0].mxu0 %v146
  %v1890 = vpop.f32.mrb[0].mxu0
  %v1891 = vadd.f32 0.0, %v1890
  %v1892 = vpop.f32.mrb[0].mxu0
  %v1893 = vpop.f32.mrb[0].mxu0
  %v1894 = vadd.f32 0.0, %v1893
  %v1895 = vpop.f32.mrb[0].mxu0
  %1896 = vmatprep.mubr.bf16.mxu0 0
  %1897 = vmatmul.mubr.bf16.gmra.mrb[0].mxu0 %v149
  %v1898 = vpop.f32.mrb[0].mxu0
  %v1899 = vadd.f32 0.0, %v1898
  %v1900 = vpop.f32.mrb[0].mxu0
  %v1901 = vpop.f32.mrb[0].mxu0
  %v1902 = vadd.f32 0.0, %v1901
  %v1903 = vpop.f32.mrb[0].mxu0
  %1904 = vmatprep.mubr.bf16.mxu0 0
  %1905 = vmatmul.mubr.bf16.gmra.mrb[0].mxu0 %v152
  %v1906 = vpop.f32.mrb[0].mxu0
  %v1907 = vadd.f32 0.0, %v1906
  %v1908 = vpop.f32.mrb[0].mxu0
  %v1909 = vpop.f32.mrb[0].mxu0
  %v1910 = vadd.f32 0.0, %v1909
  %v1911 = vpop.f32.mrb[0].mxu0
  %1912 = vmatprep.mubr.bf16.mxu0 0
  %1913 = vmatmul.mubr.bf16.gmra.mrb[0].mxu0 %v155
  %v1914 = vpop.f32.mrb[0].mxu0
  %v1915 = vadd.f32 0.0, %v1914
  %v1916 = vpop.f32.mrb[0].mxu0
  %v1917 = vpop.f32.mrb[0].mxu0
  %v1918 = vadd.f32 0.0, %v1917
  %v1919 = vpop.f32.mrb[0].mxu0
  %1920 = vmatprep.mubr.bf16.mxu0 0
  %1921 = vmatmul.mubr.bf16.gmra.mrb[0].mxu0 %v158
  %v1922 = vpop.f32.mrb[0].mxu0
  %v1923 = vadd.f32 0.0, %v1922
  %v1924 = vpop.f32.mrb[0].mxu0
  %v1925 = vpop.f32.mrb[0].mxu0
  %v1926 = vadd.f32 0.0, %v1925
  %v1927 = vpop.f32.mrb[0].mxu0
  %1928 = vmatprep.mubr.bf16.mxu0 0
  %1929 = vmatmul.mubr.bf16.gmra.mrb[0].mxu0 %v161
  %v1930 = vpop.f32.mrb[0].mxu0
  %v1931 = vadd.f32 0.0, %v1930
  %v1932 = vpop.f32.mrb[0].mxu0
  %v1933 = vpop.f32.mrb[0].mxu0
  %v1934 = vadd.f32 0.0, %v1933
  %v1935 = vpop.f32.mrb[0].mxu0
  %1936 = vmatprep.mubr.bf16.mxu0 0
  %1937 = vmatmul.mubr.bf16.gmra.mrb[0].mxu0 %v164
  %v1938 = vpop.f32.mrb[0].mxu0
  %v1939 = vadd.f32 0.0, %v1938
  %v1940 = vpop.f32.mrb[0].mxu0
  %v1941 = vpop.f32.mrb[0].mxu0
  %v1942 = vadd.f32 0.0, %v1941
  %v1943 = vpop.f32.mrb[0].mxu0
  %1944 = vmatprep.mubr.bf16.mxu0 0
  %1945 = vmatmul.mubr.bf16.gmra.mrb[0].mxu0 %v167
  %v1946 = vpop.f32.mrb[0].mxu0
  %v1947 = vadd.f32 0.0, %v1946
  %v1948 = vpop.f32.mrb[0].mxu0
  %v1949 = vpop.f32.mrb[0].mxu0
  %v1950 = vadd.f32 0.0, %v1949
  %v1951 = vpop.f32.mrb[0].mxu0
  %1952 = vmatprep.mubr.bf16.mxu0 0
  %1953 = vmatmul.mubr.bf16.gmra.mrb[0].mxu0 %v170
  %v1954 = vpop.f32.mrb[0].mxu0
  %v1955 = vadd.f32 0.0, %v1954
  %v1956 = vpop.f32.mrb[0].mxu0
  %v1957 = vpop.f32.mrb[0].mxu0
  %v1958 = vadd.f32 0.0, %v1957
  %v1959 = vpop.f32.mrb[0].mxu0
  %1960 = vmatprep.mubr.bf16.mxu0 0
  %1961 = vmatmul.mubr.bf16.gmra.mrb[0].mxu0 %v173
  %v1962 = vpop.f32.mrb[0].mxu0
  %v1963 = vadd.f32 0.0, %v1962
  %v1964 = vpop.f32.mrb[0].mxu0
  %v1965 = vpop.f32.mrb[0].mxu0
  %v1966 = vadd.f32 0.0, %v1965
  %v1967 = vpop.f32.mrb[0].mxu0
  %1968 = vmatprep.mubr.bf16.mxu0 0
  %1969 = vmatmul.mubr.bf16.gmra.mrb[0].mxu0 %v176
  %v1970 = vpop.f32.mrb[0].mxu0
  %v1971 = vadd.f32 0.0, %v1970
  %v1972 = vpop.f32.mrb[0].mxu0
  %v1973 = vpop.f32.mrb[0].mxu0
  %v1974 = vadd.f32 0.0, %v1973
  %v1975 = vpop.f32.mrb[0].mxu0
  %1976 = vmatprep.mubr.bf16.mxu0 0
  %1977 = vmatmul.mubr.bf16.gmra.mrb[0].mxu0 %v179
  %v1978 = vpop.f32.mrb[0].mxu0
  %v1979 = vadd.f32 0.0, %v1978
  %v1980 = vpop.f32.mrb[0].mxu0
  %v1981 = vpop.f32.mrb[0].mxu0
  %v1982 = vadd.f32 0.0, %v1981
  %v1983 = vpop.f32.mrb[0].mxu0
  %1984 = vmatprep.mubr.bf16.mxu0 0
  %1985 = vmatmul.mubr.bf16.gmra.mrb[0].mxu0 %v182
  %v1986 = vpop.f32.mrb[0].mxu0
  %v1987 = vadd.f32 0.0, %v1986
  %v1988 = vpop.f32.mrb[0].mxu0
  %v1989 = vpop.f32.mrb[0].mxu0
  %v1990 = vadd.f32 0.0, %v1989
  %v1991 = vpop.f32.mrb[0].mxu0
  %1992 = vmatprep.mubr.bf16.mxu0 0
  %1993 = vmatmul.mubr.bf16.gmra.mrb[0].mxu0 %v185
  %v1994 = vpop.f32.mrb[0].mxu0
  %v1995 = vadd.f32 0.0, %v1994
  %v1996 = vpop.f32.mrb[0].mxu0
  %v1997 = vpop.f32.mrb[0].mxu0
  %v1998 = vadd.f32 0.0, %v1997
  %v1999 = vpop.f32.mrb[0].mxu0
  %2000 = vmatprep.mubr.bf16.mxu0 0
  %2001 = vmatmul.mubr.bf16.gmra.mrb[0].mxu0 %v188
  %v2002 = vpop.f32.mrb[0].mxu0
  %v2003 = vadd.f32 0.0, %v2002
  %v2004 = vpop.f32.mrb[0].mxu0
  %v2005 = vpop.f32.mrb[0].mxu0
  %v2006 = vadd.f32 0.0, %v2005
  %v2007 = vpop.f32.mrb[0].mxu0
  %2008 = vdwg.mxu0
  %v2013 = vunpack.c.l.b16 %v1820
  %v2014 = vunpack.c.l.b16 %v1821
  %v2015 = vunpack.c.l.b16 %v1822
  %v2016 = vunpack.c.l.b16 %v1823
  %v2017 = vpack.c.b16 %v2014, %v2013
  %v2018 = vpack.c.b16 %v2016, %v2015
  %v2021 = vsel %vm1215, %v1804, 0
  %v2024 = vsel %vm1215, %v1805, 0
  %v2027 = vsel %vm1215, %v1806, 0
  %v2030 = vsel %vm1215, %v1807, 0
  %v2033 = vsel %vm1215, %v1808, 0
  %v2036 = vsel %vm1215, %v1809, 0
  %v2039 = vsel %vm1215, %v1810, 0
  %v2042 = vsel %vm1215, %v1811, 0
  %v2045 = vsel %vm1215, %v1812, 0
  %v2048 = vsel %vm1215, %v1813, 0
  %v2051 = vsel %vm1215, %v1814, 0
  %v2054 = vsel %vm1215, %v1815, 0
  %v2057 = vsel %vm1215, %v1816, 0
  %v2060 = vsel %vm1215, %v1817, 0
  %v2063 = vsel %vm1215, %v1818, 0
  %v2066 = vsel %vm1215, %v1819, 0
  %vm2068 = vcmask 1045504
  %vm2069 = vcmask 1046528
  %v2070 = vsel %vm2068, 4294967295, 65535
  %v2071 = vsel %vm2069, %v2070, 0
  %v2073 = vand.u32 %v2018, %v2071
  %2075 = vmatprep.subr.bf16.mxu0 0
  %2076 = vmatpush1.bf16.msra.mxu0 %v2017
  %2077 = vmatprep.subr.bf16.mxu0 0
  %2078 = vmatpush1.bf16.msra.mxu0 %v2073
  %2079 = vmatprep.subr.bf16.mxu0 0
  %2080 = vmatpush1.bf16.msra.mxu0 0
  %2081 = vmatprep.subr.bf16.mxu0 0
  %2082 = vmatpush1.bf16.msra.mxu0 0
  %2083 = vmatprep.subr.bf16.mxu0 0
  %2084 = vmatpush1.bf16.msra.mxu0 0
  %2085 = vmatprep.subr.bf16.mxu0 0
  %2086 = vmatpush1.bf16.msra.mxu0 0
  %2087 = vmatprep.subr.bf16.mxu0 0
  %2088 = vmatpush1.bf16.msra.mxu0 0
  %2089 = vmatprep.subr.bf16.mxu0 0
  %2090 = vmatpush1.bf16.msra.mxu0 0
  %2091 = vmatprep.subr.bf16.mxu0 0
  %2092 = vmatpush1.bf16.msra.mxu0 0
  %2093 = vmatprep.subr.bf16.mxu0 0
  %2094 = vmatpush1.bf16.msra.mxu0 0
  %2095 = vmatprep.subr.bf16.mxu0 0
  %2096 = vmatpush1.bf16.msra.mxu0 0
  %2097 = vmatprep.subr.bf16.mxu0 0
  %2098 = vmatpush1.bf16.msra.mxu0 0
  %2099 = vmatprep.subr.bf16.mxu0 0
  %2100 = vmatpush1.bf16.msra.mxu0 0
  %2101 = vmatprep.subr.bf16.mxu0 0
  %2102 = vmatpush1.bf16.msra.mxu0 0
  %2103 = vmatprep.subr.bf16.mxu0 0
  %2104 = vmatpush1.bf16.msra.mxu0 0
  %2105 = vmatprep.subr.bf16.mxu0 0
  %2106 = vmatpush1.bf16.msra.mxu0 0
  %2107 = vmatprep.mubr.bf16.mxu0 0
  %2108 = vmatmul.mubr.bf16.gmra.mrb[0].mxu0 %v2021
  %v2109 = vpop.f32.mrb[0].mxu0
  %v2110 = vadd.f32 %v1883, %v2109
  %v2111 = vpop.f32.mrb[0].mxu0
  %v2112 = vpop.f32.mrb[0].mxu0
  %v2113 = vadd.f32 %v1886, %v2112
  %v2114 = vpop.f32.mrb[0].mxu0
  %2115 = vmatprep.mubr.bf16.mxu0 0
  %2116 = vmatmul.mubr.bf16.gmra.mrb[0].mxu0 %v2024
  %v2117 = vpop.f32.mrb[0].mxu0
  %v2118 = vadd.f32 %v1891, %v2117
  %v2119 = vpop.f32.mrb[0].mxu0
  %v2120 = vpop.f32.mrb[0].mxu0
  %v2121 = vadd.f32 %v1894, %v2120
  %v2122 = vpop.f32.mrb[0].mxu0
  %2123 = vmatprep.mubr.bf16.mxu0 0
  %2124 = vmatmul.mubr.bf16.gmra.mrb[0].mxu0 %v2027
  %v2125 = vpop.f32.mrb[0].mxu0
  %v2126 = vadd.f32 %v1899, %v2125
  %v2127 = vpop.f32.mrb[0].mxu0
  %v2128 = vpop.f32.mrb[0].mxu0
  %v2129 = vadd.f32 %v1902, %v2128
  %v2130 = vpop.f32.mrb[0].mxu0
  %2131 = vmatprep.mubr.bf16.mxu0 0
  %2132 = vmatmul.mubr.bf16.gmra.mrb[0].mxu0 %v2030
  %v2133 = vpop.f32.mrb[0].mxu0
  %v2134 = vadd.f32 %v1907, %v2133
  %v2135 = vpop.f32.mrb[0].mxu0
  %v2136 = vpop.f32.mrb[0].mxu0
  %v2137 = vadd.f32 %v1910, %v2136
  %v2138 = vpop.f32.mrb[0].mxu0
  %2139 = vmatprep.mubr.bf16.mxu0 0
  %2140 = vmatmul.mubr.bf16.gmra.mrb[0].mxu0 %v2033
  %v2141 = vpop.f32.mrb[0].mxu0
  %v2142 = vadd.f32 %v1915, %v2141
  %v2143 = vpop.f32.mrb[0].mxu0
  %v2144 = vpop.f32.mrb[0].mxu0
  %v2145 = vadd.f32 %v1918, %v2144
  %v2146 = vpop.f32.mrb[0].mxu0
  %2147 = vmatprep.mubr.bf16.mxu0 0
  %2148 = vmatmul.mubr.bf16.gmra.mrb[0].mxu0 %v2036
  %v2149 = vpop.f32.mrb[0].mxu0
  %v2150 = vadd.f32 %v1923, %v2149
  %v2151 = vpop.f32.mrb[0].mxu0
  %v2152 = vpop.f32.mrb[0].mxu0
  %v2153 = vadd.f32 %v1926, %v2152
  %v2154 = vpop.f32.mrb[0].mxu0
  %2155 = vmatprep.mubr.bf16.mxu0 0
  %2156 = vmatmul.mubr.bf16.gmra.mrb[0].mxu0 %v2039
  %v2157 = vpop.f32.mrb[0].mxu0
  %v2158 = vadd.f32 %v1931, %v2157
  %v2159 = vpop.f32.mrb[0].mxu0
  %v2160 = vpop.f32.mrb[0].mxu0
  %v2161 = vadd.f32 %v1934, %v2160
  %v2162 = vpop.f32.mrb[0].mxu0
  %2163 = vmatprep.mubr.bf16.mxu0 0
  %2164 = vmatmul.mubr.bf16.gmra.mrb[0].mxu0 %v2042
  %v2165 = vpop.f32.mrb[0].mxu0
  %v2166 = vadd.f32 %v1939, %v2165
  %v2167 = vpop.f32.mrb[0].mxu0
  %v2168 = vpop.f32.mrb[0].mxu0
  %v2169 = vadd.f32 %v1942, %v2168
  %v2170 = vpop.f32.mrb[0].mxu0
  %2171 = vmatprep.mubr.bf16.mxu0 0
  %2172 = vmatmul.mubr.bf16.gmra.mrb[0].mxu0 %v2045
  %v2173 = vpop.f32.mrb[0].mxu0
  %v2174 = vadd.f32 %v1947, %v2173
  %v2175 = vpop.f32.mrb[0].mxu0
  %v2176 = vpop.f32.mrb[0].mxu0
  %v2177 = vadd.f32 %v1950, %v2176
  %v2178 = vpop.f32.mrb[0].mxu0
  %2179 = vmatprep.mubr.bf16.mxu0 0
  %2180 = vmatmul.mubr.bf16.gmra.mrb[0].mxu0 %v2048
  %v2181 = vpop.f32.mrb[0].mxu0
  %v2182 = vadd.f32 %v1955, %v2181
  %v2183 = vpop.f32.mrb[0].mxu0
  %v2184 = vpop.f32.mrb[0].mxu0
  %v2185 = vadd.f32 %v1958, %v2184
  %v2186 = vpop.f32.mrb[0].mxu0
  %2187 = vmatprep.mubr.bf16.mxu0 0
  %2188 = vmatmul.mubr.bf16.gmra.mrb[0].mxu0 %v2051
  %v2189 = vpop.f32.mrb[0].mxu0
  %v2190 = vadd.f32 %v1963, %v2189
  %v2191 = vpop.f32.mrb[0].mxu0
  %v2192 = vpop.f32.mrb[0].mxu0
  %v2193 = vadd.f32 %v1966, %v2192
  %v2194 = vpop.f32.mrb[0].mxu0
  %2195 = vmatprep.mubr.bf16.mxu0 0
  %2196 = vmatmul.mubr.bf16.gmra.mrb[0].mxu0 %v2054
  %v2197 = vpop.f32.mrb[0].mxu0
  %v2198 = vadd.f32 %v1971, %v2197
  %v2199 = vpop.f32.mrb[0].mxu0
  %v2200 = vpop.f32.mrb[0].mxu0
  %v2201 = vadd.f32 %v1974, %v2200
  %v2202 = vpop.f32.mrb[0].mxu0
  %2203 = vmatprep.mubr.bf16.mxu0 0
  %2204 = vmatmul.mubr.bf16.gmra.mrb[0].mxu0 %v2057
  %v2205 = vpop.f32.mrb[0].mxu0
  %v2206 = vadd.f32 %v1979, %v2205
  %v2207 = vpop.f32.mrb[0].mxu0
  %v2208 = vpop.f32.mrb[0].mxu0
  %v2209 = vadd.f32 %v1982, %v2208
  %v2210 = vpop.f32.mrb[0].mxu0
  %2211 = vmatprep.mubr.bf16.mxu0 0
  %2212 = vmatmul.mubr.bf16.gmra.mrb[0].mxu0 %v2060
  %v2213 = vpop.f32.mrb[0].mxu0
  %v2214 = vadd.f32 %v1987, %v2213
  %v2215 = vpop.f32.mrb[0].mxu0
  %v2216 = vpop.f32.mrb[0].mxu0
  %v2217 = vadd.f32 %v1990, %v2216
  %v2218 = vpop.f32.mrb[0].mxu0
  %2219 = vmatprep.mubr.bf16.mxu0 0
  %2220 = vmatmul.mubr.bf16.gmra.mrb[0].mxu0 %v2063
  %v2221 = vpop.f32.mrb[0].mxu0
  %v2222 = vadd.f32 %v1995, %v2221
  %v2223 = vpop.f32.mrb[0].mxu0
  %v2224 = vpop.f32.mrb[0].mxu0
  %v2225 = vadd.f32 %v1998, %v2224
  %v2226 = vpop.f32.mrb[0].mxu0
  %2227 = vmatprep.mubr.bf16.mxu0 0
  %2228 = vmatmul.mubr.bf16.gmra.mrb[0].mxu0 %v2066
  %v2229 = vpop.f32.mrb[0].mxu0
  %v2230 = vadd.f32 %v2003, %v2229
  %v2231 = vpop.f32.mrb[0].mxu0
  %v2232 = vpop.f32.mrb[0].mxu0
  %v2233 = vadd.f32 %v2006, %v2232
  %v2234 = vpop.f32.mrb[0].mxu0
  %2235 = vdwg.mxu0
  %v2237 = vlaneseq
  %v2238 = vshrl.u32 %v2237, 7
  %v2239 = vsub.s32 0, %v2238
  %v2240 = vrot.slane %v1829, %v2239
  %v2242 = vadd.f32 %v2110, %v2240
  %v2243 = vadd.f32 %v2113, %v2240
  %v2244 = vadd.f32 %v2118, %v2240
  %v2245 = vadd.f32 %v2121, %v2240
  %v2246 = vadd.f32 %v2126, %v2240
  %v2247 = vadd.f32 %v2129, %v2240
  %v2248 = vadd.f32 %v2134, %v2240
  %v2249 = vadd.f32 %v2137, %v2240
  %v2250 = vadd.f32 %v2142, %v2240
  %v2251 = vadd.f32 %v2145, %v2240
  %v2252 = vadd.f32 %v2150, %v2240
  %v2253 = vadd.f32 %v2153, %v2240
  %v2254 = vadd.f32 %v2158, %v2240
  %v2255 = vadd.f32 %v2161, %v2240
  %v2256 = vadd.f32 %v2166, %v2240
  %v2257 = vadd.f32 %v2169, %v2240
  %v2258 = vadd.f32 %v2174, %v2240
  %v2259 = vadd.f32 %v2177, %v2240
  %v2260 = vadd.f32 %v2182, %v2240
  %v2261 = vadd.f32 %v2185, %v2240
  %v2262 = vadd.f32 %v2190, %v2240
  %v2263 = vadd.f32 %v2193, %v2240
  %v2264 = vadd.f32 %v2198, %v2240
  %v2265 = vadd.f32 %v2201, %v2240
  %v2266 = vadd.f32 %v2206, %v2240
  %v2267 = vadd.f32 %v2209, %v2240
  %v2268 = vadd.f32 %v2214, %v2240
  %v2269 = vadd.f32 %v2217, %v2240
  %v2270 = vadd.f32 %v2222, %v2240
  %v2271 = vadd.f32 %v2225, %v2240
  %v2272 = vadd.f32 %v2230, %v2240
  %v2273 = vadd.f32 %v2233, %v2240
  %v2274 = vld [vmem:[%s12] sm:$0x1]
  %v2275 = vld [vmem:[%s13] sm:$0x1]
  %v2276 = vsel %vm360, %v2242, 0.0
  %2277 = vadd.xlane.f32.xlu0 %v2276
  %v2278 = vpop.xlane.xlu0 %2277
  %v2279 = vsel %vm360, %v2243, 0.0
  %2280 = vadd.xlane.f32.xlu0 %v2279
  %v2281 = vpop.xlane.xlu0 %2280
  %v2282 = vsel %vm360, %v2244, 0.0
  %2283 = vadd.xlane.f32.xlu0 %v2282
  %v2284 = vpop.xlane.xlu0 %2283
  %v2285 = vsel %vm360, %v2245, 0.0
  %2286 = vadd.xlane.f32.xlu0 %v2285
  %v2287 = vpop.xlane.xlu0 %2286
  %v2288 = vsel %vm360, %v2246, 0.0
  %2289 = vadd.xlane.f32.xlu0 %v2288
  %v2290 = vpop.xlane.xlu0 %2289
  %v2291 = vsel %vm360, %v2247, 0.0
  %2292 = vadd.xlane.f32.xlu0 %v2291
  %v2293 = vpop.xlane.xlu0 %2292
  %v2294 = vsel %vm360, %v2248, 0.0
  %2295 = vadd.xlane.f32.xlu0 %v2294
  %v2296 = vpop.xlane.xlu0 %2295
  %v2297 = vsel %vm360, %v2249, 0.0
  %2298 = vadd.xlane.f32.xlu0 %v2297
  %v2299 = vpop.xlane.xlu0 %2298
  %v2300 = vsel %vm360, %v2250, 0.0
  %2301 = vadd.xlane.f32.xlu0 %v2300
  %v2302 = vpop.xlane.xlu0 %2301
  %v2303 = vsel %vm360, %v2251, 0.0
  %2304 = vadd.xlane.f32.xlu0 %v2303
  %v2305 = vpop.xlane.xlu0 %2304
  %v2306 = vsel %vm360, %v2252, 0.0
  %2307 = vadd.xlane.f32.xlu0 %v2306
  %v2308 = vpop.xlane.xlu0 %2307
  %v2309 = vsel %vm360, %v2253, 0.0
  %2310 = vadd.xlane.f32.xlu0 %v2309
  %v2311 = vpop.xlane.xlu0 %2310
  %v2312 = vsel %vm360, %v2254, 0.0
  %2313 = vadd.xlane.f32.xlu0 %v2312
  %v2314 = vpop.xlane.xlu0 %2313
  %v2315 = vsel %vm360, %v2255, 0.0
  %2316 = vadd.xlane.f32.xlu0 %v2315
  %v2317 = vpop.xlane.xlu0 %2316
  %v2318 = vsel %vm360, %v2256, 0.0
  %2319 = vadd.xlane.f32.xlu0 %v2318
  %v2320 = vpop.xlane.xlu0 %2319
  %v2321 = vsel %vm360, %v2257, 0.0
  %2322 = vadd.xlane.f32.xlu0 %v2321
  %v2323 = vpop.xlane.xlu0 %2322
  %v2324 = vsel %vm360, %v2258, 0.0
  %2325 = vadd.xlane.f32.xlu0 %v2324
  %v2326 = vpop.xlane.xlu0 %2325
  %v2327 = vsel %vm360, %v2259, 0.0
  %2328 = vadd.xlane.f32.xlu0 %v2327
  %v2329 = vpop.xlane.xlu0 %2328
  %v2330 = vsel %vm360, %v2260, 0.0
  %2331 = vadd.xlane.f32.xlu0 %v2330
  %v2332 = vpop.xlane.xlu0 %2331
  %v2333 = vsel %vm360, %v2261, 0.0
  %2334 = vadd.xlane.f32.xlu0 %v2333
  %v2335 = vpop.xlane.xlu0 %2334
  %v2336 = vsel %vm360, %v2262, 0.0
  %2337 = vadd.xlane.f32.xlu0 %v2336
  %v2338 = vpop.xlane.xlu0 %2337
  %v2339 = vsel %vm360, %v2263, 0.0
  %2340 = vadd.xlane.f32.xlu0 %v2339
  %v2341 = vpop.xlane.xlu0 %2340
  %v2342 = vsel %vm360, %v2264, 0.0
  %2343 = vadd.xlane.f32.xlu0 %v2342
  %v2344 = vpop.xlane.xlu0 %2343
  %v2345 = vsel %vm360, %v2265, 0.0
  %2346 = vadd.xlane.f32.xlu0 %v2345
  %v2347 = vpop.xlane.xlu0 %2346
  %v2348 = vsel %vm360, %v2266, 0.0
  %2349 = vadd.xlane.f32.xlu0 %v2348
  %v2350 = vpop.xlane.xlu0 %2349
  %v2351 = vsel %vm360, %v2267, 0.0
  %2352 = vadd.xlane.f32.xlu0 %v2351
  %v2353 = vpop.xlane.xlu0 %2352
  %v2354 = vsel %vm360, %v2268, 0.0
  %2355 = vadd.xlane.f32.xlu0 %v2354
  %v2356 = vpop.xlane.xlu0 %2355
  %v2357 = vsel %vm360, %v2269, 0.0
  %2358 = vadd.xlane.f32.xlu0 %v2357
  %v2359 = vpop.xlane.xlu0 %2358
  %v2360 = vsel %vm360, %v2270, 0.0
  %2361 = vadd.xlane.f32.xlu0 %v2360
  %v2362 = vpop.xlane.xlu0 %2361
  %v2363 = vsel %vm360, %v2271, 0.0
  %2364 = vadd.xlane.f32.xlu0 %v2363
  %v2365 = vpop.xlane.xlu0 %2364
  %v2366 = vsel %vm360, %v2272, 0.0
  %2367 = vadd.xlane.f32.xlu0 %v2366
  %v2368 = vpop.xlane.xlu0 %2367
  %v2369 = vsel %vm360, %v2273, 0.0
  %2370 = vadd.xlane.f32.xlu0 %v2369
  %v2371 = vpop.xlane.xlu0 %2370
  %v2372 = vmul.f32 %v2278, 0.015625
  %v2373 = vmul.f32 %v2281, 0.015625
  %v2374 = vmul.f32 %v2284, 0.015625
  %v2375 = vmul.f32 %v2287, 0.015625
  %v2376 = vmul.f32 %v2290, 0.015625
  %v2377 = vmul.f32 %v2293, 0.015625
  %v2378 = vmul.f32 %v2296, 0.015625
  %v2379 = vmul.f32 %v2299, 0.015625
  %v2380 = vmul.f32 %v2302, 0.015625
  %v2381 = vmul.f32 %v2305, 0.015625
  %v2382 = vmul.f32 %v2308, 0.015625
  %v2383 = vmul.f32 %v2311, 0.015625
  %v2384 = vmul.f32 %v2314, 0.015625
  %v2385 = vmul.f32 %v2317, 0.015625
  %v2386 = vmul.f32 %v2320, 0.015625
  %v2387 = vmul.f32 %v2323, 0.015625
  %v2388 = vmul.f32 %v2326, 0.015625
  %v2389 = vmul.f32 %v2329, 0.015625
  %v2390 = vmul.f32 %v2332, 0.015625
  %v2391 = vmul.f32 %v2335, 0.015625
  %v2392 = vmul.f32 %v2338, 0.015625
  %v2393 = vmul.f32 %v2341, 0.015625
  %v2394 = vmul.f32 %v2344, 0.015625
  %v2395 = vmul.f32 %v2347, 0.015625
  %v2396 = vmul.f32 %v2350, 0.015625
  %v2397 = vmul.f32 %v2353, 0.015625
  %v2398 = vmul.f32 %v2356, 0.015625
  %v2399 = vmul.f32 %v2359, 0.015625
  %v2400 = vmul.f32 %v2362, 0.015625
  %v2401 = vmul.f32 %v2365, 0.015625
  %v2402 = vmul.f32 %v2368, 0.015625
  %v2403 = vmul.f32 %v2371, 0.015625
  %v2404 = vmul.f32 %v2242, %v2242
  %v2405 = vmul.f32 %v2243, %v2243
  %v2406 = vmul.f32 %v2244, %v2244
  %v2407 = vmul.f32 %v2245, %v2245
  %v2408 = vmul.f32 %v2246, %v2246
  %v2409 = vmul.f32 %v2247, %v2247
  %v2410 = vmul.f32 %v2248, %v2248
  %v2411 = vmul.f32 %v2249, %v2249
  %v2412 = vmul.f32 %v2250, %v2250
  %v2413 = vmul.f32 %v2251, %v2251
  %v2414 = vmul.f32 %v2252, %v2252
  %v2415 = vmul.f32 %v2253, %v2253
  %v2416 = vmul.f32 %v2254, %v2254
  %v2417 = vmul.f32 %v2255, %v2255
  %v2418 = vmul.f32 %v2256, %v2256
  %v2419 = vmul.f32 %v2257, %v2257
  %v2420 = vmul.f32 %v2258, %v2258
  %v2421 = vmul.f32 %v2259, %v2259
  %v2422 = vmul.f32 %v2260, %v2260
  %v2423 = vmul.f32 %v2261, %v2261
  %v2424 = vmul.f32 %v2262, %v2262
  %v2425 = vmul.f32 %v2263, %v2263
  %v2426 = vmul.f32 %v2264, %v2264
  %v2427 = vmul.f32 %v2265, %v2265
  %v2428 = vmul.f32 %v2266, %v2266
  %v2429 = vmul.f32 %v2267, %v2267
  %v2430 = vmul.f32 %v2268, %v2268
  %v2431 = vmul.f32 %v2269, %v2269
  %v2432 = vmul.f32 %v2270, %v2270
  %v2433 = vmul.f32 %v2271, %v2271
  %v2434 = vmul.f32 %v2272, %v2272
  %v2435 = vmul.f32 %v2273, %v2273
  %v2436 = vsel %vm360, %v2404, 0.0
  %2437 = vadd.xlane.f32.xlu0 %v2436
  %v2438 = vpop.xlane.xlu0 %2437
  %v2439 = vsel %vm360, %v2405, 0.0
  %2440 = vadd.xlane.f32.xlu0 %v2439
  %v2441 = vpop.xlane.xlu0 %2440
  %v2442 = vsel %vm360, %v2406, 0.0
  %2443 = vadd.xlane.f32.xlu0 %v2442
  %v2444 = vpop.xlane.xlu0 %2443
  %v2445 = vsel %vm360, %v2407, 0.0
  %2446 = vadd.xlane.f32.xlu0 %v2445
  %v2447 = vpop.xlane.xlu0 %2446
  %v2448 = vsel %vm360, %v2408, 0.0
  %2449 = vadd.xlane.f32.xlu0 %v2448
  %v2450 = vpop.xlane.xlu0 %2449
  %v2451 = vsel %vm360, %v2409, 0.0
  %2452 = vadd.xlane.f32.xlu0 %v2451
  %v2453 = vpop.xlane.xlu0 %2452
  %v2454 = vsel %vm360, %v2410, 0.0
  %2455 = vadd.xlane.f32.xlu0 %v2454
  %v2456 = vpop.xlane.xlu0 %2455
  %v2457 = vsel %vm360, %v2411, 0.0
  %2458 = vadd.xlane.f32.xlu0 %v2457
  %v2459 = vpop.xlane.xlu0 %2458
  %v2460 = vsel %vm360, %v2412, 0.0
  %2461 = vadd.xlane.f32.xlu0 %v2460
  %v2462 = vpop.xlane.xlu0 %2461
  %v2463 = vsel %vm360, %v2413, 0.0
  %2464 = vadd.xlane.f32.xlu0 %v2463
  %v2465 = vpop.xlane.xlu0 %2464
  %v2466 = vsel %vm360, %v2414, 0.0
  %2467 = vadd.xlane.f32.xlu0 %v2466
  %v2468 = vpop.xlane.xlu0 %2467
  %v2469 = vsel %vm360, %v2415, 0.0
  %2470 = vadd.xlane.f32.xlu0 %v2469
  %v2471 = vpop.xlane.xlu0 %2470
  %v2472 = vsel %vm360, %v2416, 0.0
  %2473 = vadd.xlane.f32.xlu0 %v2472
  %v2474 = vpop.xlane.xlu0 %2473
  %v2475 = vsel %vm360, %v2417, 0.0
  %2476 = vadd.xlane.f32.xlu0 %v2475
  %v2477 = vpop.xlane.xlu0 %2476
  %v2478 = vsel %vm360, %v2418, 0.0
  %2479 = vadd.xlane.f32.xlu0 %v2478
  %v2480 = vpop.xlane.xlu0 %2479
  %v2481 = vsel %vm360, %v2419, 0.0
  %2482 = vadd.xlane.f32.xlu0 %v2481
  %v2483 = vpop.xlane.xlu0 %2482
  %v2484 = vsel %vm360, %v2420, 0.0
  %2485 = vadd.xlane.f32.xlu0 %v2484
  %v2486 = vpop.xlane.xlu0 %2485
  %v2487 = vsel %vm360, %v2421, 0.0
  %2488 = vadd.xlane.f32.xlu0 %v2487
  %v2489 = vpop.xlane.xlu0 %2488
  %v2490 = vsel %vm360, %v2422, 0.0
  %2491 = vadd.xlane.f32.xlu0 %v2490
  %v2492 = vpop.xlane.xlu0 %2491
  %v2493 = vsel %vm360, %v2423, 0.0
  %2494 = vadd.xlane.f32.xlu0 %v2493
  %v2495 = vpop.xlane.xlu0 %2494
  %v2496 = vsel %vm360, %v2424, 0.0
  %2497 = vadd.xlane.f32.xlu0 %v2496
  %v2498 = vpop.xlane.xlu0 %2497
  %v2499 = vsel %vm360, %v2425, 0.0
  %2500 = vadd.xlane.f32.xlu0 %v2499
  %v2501 = vpop.xlane.xlu0 %2500
  %v2502 = vsel %vm360, %v2426, 0.0
  %2503 = vadd.xlane.f32.xlu0 %v2502
  %v2504 = vpop.xlane.xlu0 %2503
  %v2505 = vsel %vm360, %v2427, 0.0
  %2506 = vadd.xlane.f32.xlu0 %v2505
  %v2507 = vpop.xlane.xlu0 %2506
  %v2508 = vsel %vm360, %v2428, 0.0
  %2509 = vadd.xlane.f32.xlu0 %v2508
  %v2510 = vpop.xlane.xlu0 %2509
  %v2511 = vsel %vm360, %v2429, 0.0
  %2512 = vadd.xlane.f32.xlu0 %v2511
  %v2513 = vpop.xlane.xlu0 %2512
  %v2514 = vsel %vm360, %v2430, 0.0
  %2515 = vadd.xlane.f32.xlu0 %v2514
  %v2516 = vpop.xlane.xlu0 %2515
  %v2517 = vsel %vm360, %v2431, 0.0
  %2518 = vadd.xlane.f32.xlu0 %v2517
  %v2519 = vpop.xlane.xlu0 %2518
  %v2520 = vsel %vm360, %v2432, 0.0
  %2521 = vadd.xlane.f32.xlu0 %v2520
  %v2522 = vpop.xlane.xlu0 %2521
  %v2523 = vsel %vm360, %v2433, 0.0
  %2524 = vadd.xlane.f32.xlu0 %v2523
  %v2525 = vpop.xlane.xlu0 %2524
  %v2526 = vsel %vm360, %v2434, 0.0
  %2527 = vadd.xlane.f32.xlu0 %v2526
  %v2528 = vpop.xlane.xlu0 %2527
  %v2529 = vsel %vm360, %v2435, 0.0
  %2530 = vadd.xlane.f32.xlu0 %v2529
  %v2531 = vpop.xlane.xlu0 %2530
  %v2532 = vmul.f32 %v2438, 0.015625
  %v2533 = vmul.f32 %v2441, 0.015625
  %v2534 = vmul.f32 %v2444, 0.015625
  %v2535 = vmul.f32 %v2447, 0.015625
  %v2536 = vmul.f32 %v2450, 0.015625
  %v2537 = vmul.f32 %v2453, 0.015625
  %v2538 = vmul.f32 %v2456, 0.015625
  %v2539 = vmul.f32 %v2459, 0.015625
  %v2540 = vmul.f32 %v2462, 0.015625
  %v2541 = vmul.f32 %v2465, 0.015625
  %v2542 = vmul.f32 %v2468, 0.015625
  %v2543 = vmul.f32 %v2471, 0.015625
  %v2544 = vmul.f32 %v2474, 0.015625
  %v2545 = vmul.f32 %v2477, 0.015625
  %v2546 = vmul.f32 %v2480, 0.015625
  %v2547 = vmul.f32 %v2483, 0.015625
  %v2548 = vmul.f32 %v2486, 0.015625
  %v2549 = vmul.f32 %v2489, 0.015625
  %v2550 = vmul.f32 %v2492, 0.015625
  %v2551 = vmul.f32 %v2495, 0.015625
  %v2552 = vmul.f32 %v2498, 0.015625
  %v2553 = vmul.f32 %v2501, 0.015625
  %v2554 = vmul.f32 %v2504, 0.015625
  %v2555 = vmul.f32 %v2507, 0.015625
  %v2556 = vmul.f32 %v2510, 0.015625
  %v2557 = vmul.f32 %v2513, 0.015625
  %v2558 = vmul.f32 %v2516, 0.015625
  %v2559 = vmul.f32 %v2519, 0.015625
  %v2560 = vmul.f32 %v2522, 0.015625
  %v2561 = vmul.f32 %v2525, 0.015625
  %v2562 = vmul.f32 %v2528, 0.015625
  %v2563 = vmul.f32 %v2531, 0.015625
  %v2564 = vmul.f32 %v2372, %v2372
  %v2565 = vmul.f32 %v2373, %v2373
  %v2566 = vmul.f32 %v2374, %v2374
  %v2567 = vmul.f32 %v2375, %v2375
  %v2568 = vmul.f32 %v2376, %v2376
  %v2569 = vmul.f32 %v2377, %v2377
  %v2570 = vmul.f32 %v2378, %v2378
  %v2571 = vmul.f32 %v2379, %v2379
  %v2572 = vmul.f32 %v2380, %v2380
  %v2573 = vmul.f32 %v2381, %v2381
  %v2574 = vmul.f32 %v2382, %v2382
  %v2575 = vmul.f32 %v2383, %v2383
  %v2576 = vmul.f32 %v2384, %v2384
  %v2577 = vmul.f32 %v2385, %v2385
  %v2578 = vmul.f32 %v2386, %v2386
  %v2579 = vmul.f32 %v2387, %v2387
  %v2580 = vmul.f32 %v2388, %v2388
  %v2581 = vmul.f32 %v2389, %v2389
  %v2582 = vmul.f32 %v2390, %v2390
  %v2583 = vmul.f32 %v2391, %v2391
  %v2584 = vmul.f32 %v2392, %v2392
  %v2585 = vmul.f32 %v2393, %v2393
  %v2586 = vmul.f32 %v2394, %v2394
  %v2587 = vmul.f32 %v2395, %v2395
  %v2588 = vmul.f32 %v2396, %v2396
  %v2589 = vmul.f32 %v2397, %v2397
  %v2590 = vmul.f32 %v2398, %v2398
  %v2591 = vmul.f32 %v2399, %v2399
  %v2592 = vmul.f32 %v2400, %v2400
  %v2593 = vmul.f32 %v2401, %v2401
  %v2594 = vmul.f32 %v2402, %v2402
  %v2595 = vmul.f32 %v2403, %v2403
  %v2596 = vsub.f32 %v2532, %v2564
  %v2597 = vsub.f32 %v2533, %v2565
  %v2598 = vsub.f32 %v2534, %v2566
  %v2599 = vsub.f32 %v2535, %v2567
  %v2600 = vsub.f32 %v2536, %v2568
  %v2601 = vsub.f32 %v2537, %v2569
  %v2602 = vsub.f32 %v2538, %v2570
  %v2603 = vsub.f32 %v2539, %v2571
  %v2604 = vsub.f32 %v2540, %v2572
  %v2605 = vsub.f32 %v2541, %v2573
  %v2606 = vsub.f32 %v2542, %v2574
  %v2607 = vsub.f32 %v2543, %v2575
  %v2608 = vsub.f32 %v2544, %v2576
  %v2609 = vsub.f32 %v2545, %v2577
  %v2610 = vsub.f32 %v2546, %v2578
  %v2611 = vsub.f32 %v2547, %v2579
  %v2612 = vsub.f32 %v2548, %v2580
  %v2613 = vsub.f32 %v2549, %v2581
  %v2614 = vsub.f32 %v2550, %v2582
  %v2615 = vsub.f32 %v2551, %v2583
  %v2616 = vsub.f32 %v2552, %v2584
  %v2617 = vsub.f32 %v2553, %v2585
  %v2618 = vsub.f32 %v2554, %v2586
  %v2619 = vsub.f32 %v2555, %v2587
  %v2620 = vsub.f32 %v2556, %v2588
  %v2621 = vsub.f32 %v2557, %v2589
  %v2622 = vsub.f32 %v2558, %v2590
  %v2623 = vsub.f32 %v2559, %v2591
  %v2624 = vsub.f32 %v2560, %v2592
  %v2625 = vsub.f32 %v2561, %v2593
  %v2626 = vsub.f32 %v2562, %v2594
  %v2627 = vsub.f32 %v2563, %v2595
  %v2628 = vsub.f32 %v2242, %v2372
  %v2629 = vsub.f32 %v2243, %v2373
  %v2630 = vsub.f32 %v2244, %v2374
  %v2631 = vsub.f32 %v2245, %v2375
  %v2632 = vsub.f32 %v2246, %v2376
  %v2633 = vsub.f32 %v2247, %v2377
  %v2634 = vsub.f32 %v2248, %v2378
  %v2635 = vsub.f32 %v2249, %v2379
  %v2636 = vsub.f32 %v2250, %v2380
  %v2637 = vsub.f32 %v2251, %v2381
  %v2638 = vsub.f32 %v2252, %v2382
  %v2639 = vsub.f32 %v2253, %v2383
  %v2640 = vsub.f32 %v2254, %v2384
  %v2641 = vsub.f32 %v2255, %v2385
  %v2642 = vsub.f32 %v2256, %v2386
  %v2643 = vsub.f32 %v2257, %v2387
  %v2644 = vsub.f32 %v2258, %v2388
  %v2645 = vsub.f32 %v2259, %v2389
  %v2646 = vsub.f32 %v2260, %v2390
  %v2647 = vsub.f32 %v2261, %v2391
  %v2648 = vsub.f32 %v2262, %v2392
  %v2649 = vsub.f32 %v2263, %v2393
  %v2650 = vsub.f32 %v2264, %v2394
  %v2651 = vsub.f32 %v2265, %v2395
  %v2652 = vsub.f32 %v2266, %v2396
  %v2653 = vsub.f32 %v2267, %v2397
  %v2654 = vsub.f32 %v2268, %v2398
  %v2655 = vsub.f32 %v2269, %v2399
  %v2656 = vsub.f32 %v2270, %v2400
  %v2657 = vsub.f32 %v2271, %v2401
  %v2658 = vsub.f32 %v2272, %v2402
  %v2659 = vsub.f32 %v2273, %v2403
  %v2660 = vadd.f32 %v2596, 1e-05
  %v2661 = vadd.f32 %v2597, 1e-05
  %v2662 = vadd.f32 %v2598, 1e-05
  %v2663 = vadd.f32 %v2599, 1e-05
  %v2664 = vadd.f32 %v2600, 1e-05
  %v2665 = vadd.f32 %v2601, 1e-05
  %v2666 = vadd.f32 %v2602, 1e-05
  %v2667 = vadd.f32 %v2603, 1e-05
  %v2668 = vadd.f32 %v2604, 1e-05
  %v2669 = vadd.f32 %v2605, 1e-05
  %v2670 = vadd.f32 %v2606, 1e-05
  %v2671 = vadd.f32 %v2607, 1e-05
  %v2672 = vadd.f32 %v2608, 1e-05
  %v2673 = vadd.f32 %v2609, 1e-05
  %v2674 = vadd.f32 %v2610, 1e-05
  %v2675 = vadd.f32 %v2611, 1e-05
  %v2676 = vadd.f32 %v2612, 1e-05
  %v2677 = vadd.f32 %v2613, 1e-05
  %v2678 = vadd.f32 %v2614, 1e-05
  %v2679 = vadd.f32 %v2615, 1e-05
  %v2680 = vadd.f32 %v2616, 1e-05
  %v2681 = vadd.f32 %v2617, 1e-05
  %v2682 = vadd.f32 %v2618, 1e-05
  %v2683 = vadd.f32 %v2619, 1e-05
  %v2684 = vadd.f32 %v2620, 1e-05
  %v2685 = vadd.f32 %v2621, 1e-05
  %v2686 = vadd.f32 %v2622, 1e-05
  %v2687 = vadd.f32 %v2623, 1e-05
  %v2688 = vadd.f32 %v2624, 1e-05
  %v2689 = vadd.f32 %v2625, 1e-05
  %v2690 = vadd.f32 %v2626, 1e-05
  %v2691 = vadd.f32 %v2627, 1e-05
  %v2692 = vrsqrt.pop %v2660
  %v2693 = vrsqrt.pop %v2661
  %v2694 = vrsqrt.pop %v2662
  %v2695 = vrsqrt.pop %v2663
  %v2696 = vrsqrt.pop %v2664
  %v2697 = vrsqrt.pop %v2665
  %v2698 = vrsqrt.pop %v2666
  %v2699 = vrsqrt.pop %v2667
  %v2700 = vrsqrt.pop %v2668
  %v2701 = vrsqrt.pop %v2669
  %v2702 = vrsqrt.pop %v2670
  %v2703 = vrsqrt.pop %v2671
  %v2704 = vrsqrt.pop %v2672
  %v2705 = vrsqrt.pop %v2673
  %v2706 = vrsqrt.pop %v2674
  %v2707 = vrsqrt.pop %v2675
  %v2708 = vrsqrt.pop %v2676
  %v2709 = vrsqrt.pop %v2677
  %v2710 = vrsqrt.pop %v2678
  %v2711 = vrsqrt.pop %v2679
  %v2712 = vrsqrt.pop %v2680
  %v2713 = vrsqrt.pop %v2681
  %v2714 = vrsqrt.pop %v2682
  %v2715 = vrsqrt.pop %v2683
  %v2716 = vrsqrt.pop %v2684
  %v2717 = vrsqrt.pop %v2685
  %v2718 = vrsqrt.pop %v2686
  %v2719 = vrsqrt.pop %v2687
  %v2720 = vrsqrt.pop %v2688
  %v2721 = vrsqrt.pop %v2689
  %v2722 = vrsqrt.pop %v2690
  %v2723 = vrsqrt.pop %v2691
  %v2724 = vmul.f32 %v2628, %v2692
  %v2725 = vmul.f32 %v2629, %v2693
  %v2726 = vmul.f32 %v2630, %v2694
  %v2727 = vmul.f32 %v2631, %v2695
  %v2728 = vmul.f32 %v2632, %v2696
  %v2729 = vmul.f32 %v2633, %v2697
  %v2730 = vmul.f32 %v2634, %v2698
  %v2731 = vmul.f32 %v2635, %v2699
  %v2732 = vmul.f32 %v2636, %v2700
  %v2733 = vmul.f32 %v2637, %v2701
  %v2734 = vmul.f32 %v2638, %v2702
  %v2735 = vmul.f32 %v2639, %v2703
  %v2736 = vmul.f32 %v2640, %v2704
  %v2737 = vmul.f32 %v2641, %v2705
  %v2738 = vmul.f32 %v2642, %v2706
  %v2739 = vmul.f32 %v2643, %v2707
  %v2740 = vmul.f32 %v2644, %v2708
  %v2741 = vmul.f32 %v2645, %v2709
  %v2742 = vmul.f32 %v2646, %v2710
  %v2743 = vmul.f32 %v2647, %v2711
  %v2744 = vmul.f32 %v2648, %v2712
  %v2745 = vmul.f32 %v2649, %v2713
  %v2746 = vmul.f32 %v2650, %v2714
  %v2747 = vmul.f32 %v2651, %v2715
  %v2748 = vmul.f32 %v2652, %v2716
  %v2749 = vmul.f32 %v2653, %v2717
  %v2750 = vmul.f32 %v2654, %v2718
  %v2751 = vmul.f32 %v2655, %v2719
  %v2752 = vmul.f32 %v2656, %v2720
  %v2753 = vmul.f32 %v2657, %v2721
  %v2754 = vmul.f32 %v2658, %v2722
  %v2755 = vmul.f32 %v2659, %v2723
  %v2757 = vlaneseq
  %v2758 = vshrl.u32 %v2757, 7
  %v2759 = vsub.s32 0, %v2758
  %v2760 = vrot.slane %v2274, %v2759
  %v2762 = vmul.f32 %v2724, %v2760
  %v2763 = vmul.f32 %v2725, %v2760
  %v2764 = vmul.f32 %v2726, %v2760
  %v2765 = vmul.f32 %v2727, %v2760
  %v2766 = vmul.f32 %v2728, %v2760
  %v2767 = vmul.f32 %v2729, %v2760
  %v2768 = vmul.f32 %v2730, %v2760
  %v2769 = vmul.f32 %v2731, %v2760
  %v2770 = vmul.f32 %v2732, %v2760
  %v2771 = vmul.f32 %v2733, %v2760
  %v2772 = vmul.f32 %v2734, %v2760
  %v2773 = vmul.f32 %v2735, %v2760
  %v2774 = vmul.f32 %v2736, %v2760
  %v2775 = vmul.f32 %v2737, %v2760
  %v2776 = vmul.f32 %v2738, %v2760
  %v2777 = vmul.f32 %v2739, %v2760
  %v2778 = vmul.f32 %v2740, %v2760
  %v2779 = vmul.f32 %v2741, %v2760
  %v2780 = vmul.f32 %v2742, %v2760
  %v2781 = vmul.f32 %v2743, %v2760
  %v2782 = vmul.f32 %v2744, %v2760
  %v2783 = vmul.f32 %v2745, %v2760
  %v2784 = vmul.f32 %v2746, %v2760
  %v2785 = vmul.f32 %v2747, %v2760
  %v2786 = vmul.f32 %v2748, %v2760
  %v2787 = vmul.f32 %v2749, %v2760
  %v2788 = vmul.f32 %v2750, %v2760
  %v2789 = vmul.f32 %v2751, %v2760
  %v2790 = vmul.f32 %v2752, %v2760
  %v2791 = vmul.f32 %v2753, %v2760
  %v2792 = vmul.f32 %v2754, %v2760
  %v2793 = vmul.f32 %v2755, %v2760
  %v2795 = vlaneseq
  %v2796 = vshrl.u32 %v2795, 7
  %v2797 = vsub.s32 0, %v2796
  %v2798 = vrot.slane %v2275, %v2797
  %v2800 = vadd.f32 %v2762, %v2798
  %v2801 = vadd.f32 %v2763, %v2798
  %v2802 = vadd.f32 %v2764, %v2798
  %v2803 = vadd.f32 %v2765, %v2798
  %v2804 = vadd.f32 %v2766, %v2798
  %v2805 = vadd.f32 %v2767, %v2798
  %v2806 = vadd.f32 %v2768, %v2798
  %v2807 = vadd.f32 %v2769, %v2798
  %v2808 = vadd.f32 %v2770, %v2798
  %v2809 = vadd.f32 %v2771, %v2798
  %v2810 = vadd.f32 %v2772, %v2798
  %v2811 = vadd.f32 %v2773, %v2798
  %v2812 = vadd.f32 %v2774, %v2798
  %v2813 = vadd.f32 %v2775, %v2798
  %v2814 = vadd.f32 %v2776, %v2798
  %v2815 = vadd.f32 %v2777, %v2798
  %v2816 = vadd.f32 %v2778, %v2798
  %v2817 = vadd.f32 %v2779, %v2798
  %v2818 = vadd.f32 %v2780, %v2798
  %v2819 = vadd.f32 %v2781, %v2798
  %v2820 = vadd.f32 %v2782, %v2798
  %v2821 = vadd.f32 %v2783, %v2798
  %v2822 = vadd.f32 %v2784, %v2798
  %v2823 = vadd.f32 %v2785, %v2798
  %v2824 = vadd.f32 %v2786, %v2798
  %v2825 = vadd.f32 %v2787, %v2798
  %v2826 = vadd.f32 %v2788, %v2798
  %v2827 = vadd.f32 %v2789, %v2798
  %v2828 = vadd.f32 %v2790, %v2798
  %v2829 = vadd.f32 %v2791, %v2798
  %v2830 = vadd.f32 %v2792, %v2798
  %v2831 = vadd.f32 %v2793, %v2798
  %v2832 = vmax.f32 %v2800, 0.0
  %v2833 = vmax.f32 %v2801, 0.0
  %v2834 = vmax.f32 %v2802, 0.0
  %v2835 = vmax.f32 %v2803, 0.0
  %v2836 = vmax.f32 %v2804, 0.0
  %v2837 = vmax.f32 %v2805, 0.0
  %v2838 = vmax.f32 %v2806, 0.0
  %v2839 = vmax.f32 %v2807, 0.0
  %v2840 = vmax.f32 %v2808, 0.0
  %v2841 = vmax.f32 %v2809, 0.0
  %v2842 = vmax.f32 %v2810, 0.0
  %v2843 = vmax.f32 %v2811, 0.0
  %v2844 = vmax.f32 %v2812, 0.0
  %v2845 = vmax.f32 %v2813, 0.0
  %v2846 = vmax.f32 %v2814, 0.0
  %v2847 = vmax.f32 %v2815, 0.0
  %v2848 = vmax.f32 %v2816, 0.0
  %v2849 = vmax.f32 %v2817, 0.0
  %v2850 = vmax.f32 %v2818, 0.0
  %v2851 = vmax.f32 %v2819, 0.0
  %v2852 = vmax.f32 %v2820, 0.0
  %v2853 = vmax.f32 %v2821, 0.0
  %v2854 = vmax.f32 %v2822, 0.0
  %v2855 = vmax.f32 %v2823, 0.0
  %v2856 = vmax.f32 %v2824, 0.0
  %v2857 = vmax.f32 %v2825, 0.0
  %v2858 = vmax.f32 %v2826, 0.0
  %v2859 = vmax.f32 %v2827, 0.0
  %v2860 = vmax.f32 %v2828, 0.0
  %v2861 = vmax.f32 %v2829, 0.0
  %v2862 = vmax.f32 %v2830, 0.0
  %v2863 = vmax.f32 %v2831, 0.0
  %v2864 = vpack.c.bf16 %v2833, %v2832
  %v2865 = vpack.c.bf16 %v2835, %v2834
  %v2866 = vpack.c.bf16 %v2837, %v2836
  %v2867 = vpack.c.bf16 %v2839, %v2838
  %v2868 = vpack.c.bf16 %v2841, %v2840
  %v2869 = vpack.c.bf16 %v2843, %v2842
  %v2870 = vpack.c.bf16 %v2845, %v2844
  %v2871 = vpack.c.bf16 %v2847, %v2846
  %v2872 = vpack.c.bf16 %v2849, %v2848
  %v2873 = vpack.c.bf16 %v2851, %v2850
  %v2874 = vpack.c.bf16 %v2853, %v2852
  %v2875 = vpack.c.bf16 %v2855, %v2854
  %v2876 = vpack.c.bf16 %v2857, %v2856
  %v2877 = vpack.c.bf16 %v2859, %v2858
  %v2878 = vpack.c.bf16 %v2861, %v2860
  %v2879 = vpack.c.bf16 %v2863, %v2862
  %v2880 = vld [vmem:[%s14] sm:$0xf]
  %v2881 = vld [vmem:[%s14 + $0x4] sm:$0xf]
  %v2882 = vld [vmem:[%s14 + $0x8] sm:$0xf]
  %v2883 = vld [vmem:[%s14 + $0xc] sm:$0xf]
  %v2884 = vld [vmem:[%s14 + $0x10] sm:$0xf]
  %v2885 = vld [vmem:[%s14 + $0x14] sm:$0xf]
  %v2886 = vld [vmem:[%s14 + $0x18] sm:$0xf]
  %v2887 = vld [vmem:[%s14 + $0x1c] sm:$0xf]
  %v2888 = vld [vmem:[%s15] sm:$0x1]
  %v2890 = vlaneseq
  %v2891 = vshrl.u32 %v2890, 7
  %v2892 = vsub.s32 0, %v2891
  %v2893 = vrot.slane %v2888, %v2892
  %v2903 = vunpack.c.l.b16 %v2880
  %v2904 = vunpack.c.l.b16 %v2881
  %v2905 = vunpack.c.l.b16 %v2882
  %v2906 = vunpack.c.l.b16 %v2883
  %v2907 = vunpack.c.l.b16 %v2884
  %v2908 = vunpack.c.l.b16 %v2885
  %v2909 = vunpack.c.l.b16 %v2886
  %v2910 = vunpack.c.l.b16 %v2887
  %v2911 = vpack.c.b16 %v2904, %v2903
  %v2912 = vpack.c.b16 %v2906, %v2905
  %v2913 = vpack.c.b16 %v2908, %v2907
  %v2914 = vpack.c.b16 %v2910, %v2909
  %v2920 = vsel %vm360, %v2864, 0
  %v2923 = vsel %vm360, %v2865, 0
  %v2926 = vsel %vm360, %v2866, 0
  %v2929 = vsel %vm360, %v2867, 0
  %v2932 = vsel %vm360, %v2868, 0
  %v2935 = vsel %vm360, %v2869, 0
  %v2938 = vsel %vm360, %v2870, 0
  %v2941 = vsel %vm360, %v2871, 0
  %v2944 = vsel %vm360, %v2872, 0
  %v2947 = vsel %vm360, %v2873, 0
  %v2950 = vsel %vm360, %v2874, 0
  %v2953 = vsel %vm360, %v2875, 0
  %v2956 = vsel %vm360, %v2876, 0
  %v2959 = vsel %vm360, %v2877, 0
  %v2962 = vsel %vm360, %v2878, 0
  %v2965 = vsel %vm360, %v2879, 0
  %2967 = vmatprep.subr.bf16.mxu0 0
  %2968 = vmatpush1.bf16.msra.mxu0 %v2911
  %2969 = vmatprep.subr.bf16.mxu0 0
  %2970 = vmatpush1.bf16.msra.mxu0 %v2912
  %2971 = vmatprep.subr.bf16.mxu0 0
  %2972 = vmatpush1.bf16.msra.mxu0 %v2913
  %2973 = vmatprep.subr.bf16.mxu0 0
  %2974 = vmatpush1.bf16.msra.mxu0 %v2914
  %2975 = vmatprep.subr.bf16.mxu0 0
  %2976 = vmatpush1.bf16.msra.mxu0 0
  %2977 = vmatprep.subr.bf16.mxu0 0
  %2978 = vmatpush1.bf16.msra.mxu0 0
  %2979 = vmatprep.subr.bf16.mxu0 0
  %2980 = vmatpush1.bf16.msra.mxu0 0
  %2981 = vmatprep.subr.bf16.mxu0 0
  %2982 = vmatpush1.bf16.msra.mxu0 0
  %2983 = vmatprep.subr.bf16.mxu0 0
  %2984 = vmatpush1.bf16.msra.mxu0 0
  %2985 = vmatprep.subr.bf16.mxu0 0
  %2986 = vmatpush1.bf16.msra.mxu0 0
  %2987 = vmatprep.subr.bf16.mxu0 0
  %2988 = vmatpush1.bf16.msra.mxu0 0
  %2989 = vmatprep.subr.bf16.mxu0 0
  %2990 = vmatpush1.bf16.msra.mxu0 0
  %2991 = vmatprep.subr.bf16.mxu0 0
  %2992 = vmatpush1.bf16.msra.mxu0 0
  %2993 = vmatprep.subr.bf16.mxu0 0
  %2994 = vmatpush1.bf16.msra.mxu0 0
  %2995 = vmatprep.subr.bf16.mxu0 0
  %2996 = vmatpush1.bf16.msra.mxu0 0
  %2997 = vmatprep.subr.bf16.mxu0 0
  %2998 = vmatpush1.bf16.msra.mxu0 0
  %2999 = vmatprep.mubr.bf16.mxu0 0
  %3000 = vmatmul.mubr.bf16.gmra.mrb[0].mxu0 %v2920
  %v3001 = vpop.f32.mrb[0].mxu0
  %v3002 = vadd.f32 %v2893, %v3001
  %v3003 = vpop.f32.mrb[0].mxu0
  %v3004 = vpop.f32.mrb[0].mxu0
  %v3005 = vadd.f32 %v2893, %v3004
  %v3006 = vpop.f32.mrb[0].mxu0
  %3007 = vmatprep.mubr.bf16.mxu0 0
  %3008 = vmatmul.mubr.bf16.gmra.mrb[0].mxu0 %v2923
  %v3009 = vpop.f32.mrb[0].mxu0
  %v3010 = vadd.f32 %v2893, %v3009
  %v3011 = vpop.f32.mrb[0].mxu0
  %v3012 = vpop.f32.mrb[0].mxu0
  %v3013 = vadd.f32 %v2893, %v3012
  %v3014 = vpop.f32.mrb[0].mxu0
  %3015 = vmatprep.mubr.bf16.mxu0 0
  %3016 = vmatmul.mubr.bf16.gmra.mrb[0].mxu0 %v2926
  %v3017 = vpop.f32.mrb[0].mxu0
  %v3018 = vadd.f32 %v2893, %v3017
  %v3019 = vpop.f32.mrb[0].mxu0
  %v3020 = vpop.f32.mrb[0].mxu0
  %v3021 = vadd.f32 %v2893, %v3020
  %v3022 = vpop.f32.mrb[0].mxu0
  %3023 = vmatprep.mubr.bf16.mxu0 0
  %3024 = vmatmul.mubr.bf16.gmra.mrb[0].mxu0 %v2929
  %v3025 = vpop.f32.mrb[0].mxu0
  %v3026 = vadd.f32 %v2893, %v3025
  %v3027 = vpop.f32.mrb[0].mxu0
  %v3028 = vpop.f32.mrb[0].mxu0
  %v3029 = vadd.f32 %v2893, %v3028
  %v3030 = vpop.f32.mrb[0].mxu0
  %3031 = vmatprep.mubr.bf16.mxu0 0
  %3032 = vmatmul.mubr.bf16.gmra.mrb[0].mxu0 %v2932
  %v3033 = vpop.f32.mrb[0].mxu0
  %v3034 = vadd.f32 %v2893, %v3033
  %v3035 = vpop.f32.mrb[0].mxu0
  %v3036 = vpop.f32.mrb[0].mxu0
  %v3037 = vadd.f32 %v2893, %v3036
  %v3038 = vpop.f32.mrb[0].mxu0
  %3039 = vmatprep.mubr.bf16.mxu0 0
  %3040 = vmatmul.mubr.bf16.gmra.mrb[0].mxu0 %v2935
  %v3041 = vpop.f32.mrb[0].mxu0
  %v3042 = vadd.f32 %v2893, %v3041
  %v3043 = vpop.f32.mrb[0].mxu0
  %v3044 = vpop.f32.mrb[0].mxu0
  %v3045 = vadd.f32 %v2893, %v3044
  %v3046 = vpop.f32.mrb[0].mxu0
  %3047 = vmatprep.mubr.bf16.mxu0 0
  %3048 = vmatmul.mubr.bf16.gmra.mrb[0].mxu0 %v2938
  %v3049 = vpop.f32.mrb[0].mxu0
  %v3050 = vadd.f32 %v2893, %v3049
  %v3051 = vpop.f32.mrb[0].mxu0
  %v3052 = vpop.f32.mrb[0].mxu0
  %v3053 = vadd.f32 %v2893, %v3052
  %v3054 = vpop.f32.mrb[0].mxu0
  %3055 = vmatprep.mubr.bf16.mxu0 0
  %3056 = vmatmul.mubr.bf16.gmra.mrb[0].mxu0 %v2941
  %v3057 = vpop.f32.mrb[0].mxu0
  %v3058 = vadd.f32 %v2893, %v3057
  %v3059 = vpop.f32.mrb[0].mxu0
  %v3060 = vpop.f32.mrb[0].mxu0
  %v3061 = vadd.f32 %v2893, %v3060
  %v3062 = vpop.f32.mrb[0].mxu0
  %3063 = vmatprep.mubr.bf16.mxu0 0
  %3064 = vmatmul.mubr.bf16.gmra.mrb[0].mxu0 %v2944
  %v3065 = vpop.f32.mrb[0].mxu0
  %v3066 = vadd.f32 %v2893, %v3065
  %v3067 = vpop.f32.mrb[0].mxu0
  %v3068 = vpop.f32.mrb[0].mxu0
  %v3069 = vadd.f32 %v2893, %v3068
  %v3070 = vpop.f32.mrb[0].mxu0
  %3071 = vmatprep.mubr.bf16.mxu0 0
  %3072 = vmatmul.mubr.bf16.gmra.mrb[0].mxu0 %v2947
  %v3073 = vpop.f32.mrb[0].mxu0
  %v3074 = vadd.f32 %v2893, %v3073
  %v3075 = vpop.f32.mrb[0].mxu0
  %v3076 = vpop.f32.mrb[0].mxu0
  %v3077 = vadd.f32 %v2893, %v3076
  %v3078 = vpop.f32.mrb[0].mxu0
  %3079 = vmatprep.mubr.bf16.mxu0 0
  %3080 = vmatmul.mubr.bf16.gmra.mrb[0].mxu0 %v2950
  %v3081 = vpop.f32.mrb[0].mxu0
  %v3082 = vadd.f32 %v2893, %v3081
  %v3083 = vpop.f32.mrb[0].mxu0
  %v3084 = vpop.f32.mrb[0].mxu0
  %v3085 = vadd.f32 %v2893, %v3084
  %v3086 = vpop.f32.mrb[0].mxu0
  %3087 = vmatprep.mubr.bf16.mxu0 0
  %3088 = vmatmul.mubr.bf16.gmra.mrb[0].mxu0 %v2953
  %v3089 = vpop.f32.mrb[0].mxu0
  %v3090 = vadd.f32 %v2893, %v3089
  %v3091 = vpop.f32.mrb[0].mxu0
  %v3092 = vpop.f32.mrb[0].mxu0
  %v3093 = vadd.f32 %v2893, %v3092
  %v3094 = vpop.f32.mrb[0].mxu0
  %3095 = vmatprep.mubr.bf16.mxu0 0
  %3096 = vmatmul.mubr.bf16.gmra.mrb[0].mxu0 %v2956
  %v3097 = vpop.f32.mrb[0].mxu0
  %v3098 = vadd.f32 %v2893, %v3097
  %v3099 = vpop.f32.mrb[0].mxu0
  %v3100 = vpop.f32.mrb[0].mxu0
  %v3101 = vadd.f32 %v2893, %v3100
  %v3102 = vpop.f32.mrb[0].mxu0
  %3103 = vmatprep.mubr.bf16.mxu0 0
  %3104 = vmatmul.mubr.bf16.gmra.mrb[0].mxu0 %v2959
  %v3105 = vpop.f32.mrb[0].mxu0
  %v3106 = vadd.f32 %v2893, %v3105
  %v3107 = vpop.f32.mrb[0].mxu0
  %v3108 = vpop.f32.mrb[0].mxu0
  %v3109 = vadd.f32 %v2893, %v3108
  %v3110 = vpop.f32.mrb[0].mxu0
  %3111 = vmatprep.mubr.bf16.mxu0 0
  %3112 = vmatmul.mubr.bf16.gmra.mrb[0].mxu0 %v2962
  %v3113 = vpop.f32.mrb[0].mxu0
  %v3114 = vadd.f32 %v2893, %v3113
  %v3115 = vpop.f32.mrb[0].mxu0
  %v3116 = vpop.f32.mrb[0].mxu0
  %v3117 = vadd.f32 %v2893, %v3116
  %v3118 = vpop.f32.mrb[0].mxu0
  %3119 = vmatprep.mubr.bf16.mxu0 0
  %3120 = vmatmul.mubr.bf16.gmra.mrb[0].mxu0 %v2965
  %v3121 = vpop.f32.mrb[0].mxu0
  %v3122 = vadd.f32 %v2893, %v3121
  %v3123 = vpop.f32.mrb[0].mxu0
  %v3124 = vpop.f32.mrb[0].mxu0
  %v3125 = vadd.f32 %v2893, %v3124
  %v3126 = vpop.f32.mrb[0].mxu0
  %3127 = vdwg.mxu0
  %v3128 = vld [vmem:[%s16] sm:$0x1]
  %v3129 = vld [vmem:[%s17] sm:$0x1]
  %v3130 = vsel %vm360, %v3002, 0.0
  %3131 = vadd.xlane.f32.xlu0 %v3130
  %v3132 = vpop.xlane.xlu0 %3131
  %v3133 = vsel %vm360, %v3005, 0.0
  %3134 = vadd.xlane.f32.xlu0 %v3133
  %v3135 = vpop.xlane.xlu0 %3134
  %v3136 = vsel %vm360, %v3010, 0.0
  %3137 = vadd.xlane.f32.xlu0 %v3136
  %v3138 = vpop.xlane.xlu0 %3137
  %v3139 = vsel %vm360, %v3013, 0.0
  %3140 = vadd.xlane.f32.xlu0 %v3139
  %v3141 = vpop.xlane.xlu0 %3140
  %v3142 = vsel %vm360, %v3018, 0.0
  %3143 = vadd.xlane.f32.xlu0 %v3142
  %v3144 = vpop.xlane.xlu0 %3143
  %v3145 = vsel %vm360, %v3021, 0.0
  %3146 = vadd.xlane.f32.xlu0 %v3145
  %v3147 = vpop.xlane.xlu0 %3146
  %v3148 = vsel %vm360, %v3026, 0.0
  %3149 = vadd.xlane.f32.xlu0 %v3148
  %v3150 = vpop.xlane.xlu0 %3149
  %v3151 = vsel %vm360, %v3029, 0.0
  %3152 = vadd.xlane.f32.xlu0 %v3151
  %v3153 = vpop.xlane.xlu0 %3152
  %v3154 = vsel %vm360, %v3034, 0.0
  %3155 = vadd.xlane.f32.xlu0 %v3154
  %v3156 = vpop.xlane.xlu0 %3155
  %v3157 = vsel %vm360, %v3037, 0.0
  %3158 = vadd.xlane.f32.xlu0 %v3157
  %v3159 = vpop.xlane.xlu0 %3158
  %v3160 = vsel %vm360, %v3042, 0.0
  %3161 = vadd.xlane.f32.xlu0 %v3160
  %v3162 = vpop.xlane.xlu0 %3161
  %v3163 = vsel %vm360, %v3045, 0.0
  %3164 = vadd.xlane.f32.xlu0 %v3163
  %v3165 = vpop.xlane.xlu0 %3164
  %v3166 = vsel %vm360, %v3050, 0.0
  %3167 = vadd.xlane.f32.xlu0 %v3166
  %v3168 = vpop.xlane.xlu0 %3167
  %v3169 = vsel %vm360, %v3053, 0.0
  %3170 = vadd.xlane.f32.xlu0 %v3169
  %v3171 = vpop.xlane.xlu0 %3170
  %v3172 = vsel %vm360, %v3058, 0.0
  %3173 = vadd.xlane.f32.xlu0 %v3172
  %v3174 = vpop.xlane.xlu0 %3173
  %v3175 = vsel %vm360, %v3061, 0.0
  %3176 = vadd.xlane.f32.xlu0 %v3175
  %v3177 = vpop.xlane.xlu0 %3176
  %v3178 = vsel %vm360, %v3066, 0.0
  %3179 = vadd.xlane.f32.xlu0 %v3178
  %v3180 = vpop.xlane.xlu0 %3179
  %v3181 = vsel %vm360, %v3069, 0.0
  %3182 = vadd.xlane.f32.xlu0 %v3181
  %v3183 = vpop.xlane.xlu0 %3182
  %v3184 = vsel %vm360, %v3074, 0.0
  %3185 = vadd.xlane.f32.xlu0 %v3184
  %v3186 = vpop.xlane.xlu0 %3185
  %v3187 = vsel %vm360, %v3077, 0.0
  %3188 = vadd.xlane.f32.xlu0 %v3187
  %v3189 = vpop.xlane.xlu0 %3188
  %v3190 = vsel %vm360, %v3082, 0.0
  %3191 = vadd.xlane.f32.xlu0 %v3190
  %v3192 = vpop.xlane.xlu0 %3191
  %v3193 = vsel %vm360, %v3085, 0.0
  %3194 = vadd.xlane.f32.xlu0 %v3193
  %v3195 = vpop.xlane.xlu0 %3194
  %v3196 = vsel %vm360, %v3090, 0.0
  %3197 = vadd.xlane.f32.xlu0 %v3196
  %v3198 = vpop.xlane.xlu0 %3197
  %v3199 = vsel %vm360, %v3093, 0.0
  %3200 = vadd.xlane.f32.xlu0 %v3199
  %v3201 = vpop.xlane.xlu0 %3200
  %v3202 = vsel %vm360, %v3098, 0.0
  %3203 = vadd.xlane.f32.xlu0 %v3202
  %v3204 = vpop.xlane.xlu0 %3203
  %v3205 = vsel %vm360, %v3101, 0.0
  %3206 = vadd.xlane.f32.xlu0 %v3205
  %v3207 = vpop.xlane.xlu0 %3206
  %v3208 = vsel %vm360, %v3106, 0.0
  %3209 = vadd.xlane.f32.xlu0 %v3208
  %v3210 = vpop.xlane.xlu0 %3209
  %v3211 = vsel %vm360, %v3109, 0.0
  %3212 = vadd.xlane.f32.xlu0 %v3211
  %v3213 = vpop.xlane.xlu0 %3212
  %v3214 = vsel %vm360, %v3114, 0.0
  %3215 = vadd.xlane.f32.xlu0 %v3214
  %v3216 = vpop.xlane.xlu0 %3215
  %v3217 = vsel %vm360, %v3117, 0.0
  %3218 = vadd.xlane.f32.xlu0 %v3217
  %v3219 = vpop.xlane.xlu0 %3218
  %v3220 = vsel %vm360, %v3122, 0.0
  %3221 = vadd.xlane.f32.xlu0 %v3220
  %v3222 = vpop.xlane.xlu0 %3221
  %v3223 = vsel %vm360, %v3125, 0.0
  %3224 = vadd.xlane.f32.xlu0 %v3223
  %v3225 = vpop.xlane.xlu0 %3224
  %v3226 = vmul.f32 %v3132, 0.015625
  %v3227 = vmul.f32 %v3135, 0.015625
  %v3228 = vmul.f32 %v3138, 0.015625
  %v3229 = vmul.f32 %v3141, 0.015625
  %v3230 = vmul.f32 %v3144, 0.015625
  %v3231 = vmul.f32 %v3147, 0.015625
  %v3232 = vmul.f32 %v3150, 0.015625
  %v3233 = vmul.f32 %v3153, 0.015625
  %v3234 = vmul.f32 %v3156, 0.015625
  %v3235 = vmul.f32 %v3159, 0.015625
  %v3236 = vmul.f32 %v3162, 0.015625
  %v3237 = vmul.f32 %v3165, 0.015625
  %v3238 = vmul.f32 %v3168, 0.015625
  %v3239 = vmul.f32 %v3171, 0.015625
  %v3240 = vmul.f32 %v3174, 0.015625
  %v3241 = vmul.f32 %v3177, 0.015625
  %v3242 = vmul.f32 %v3180, 0.015625
  %v3243 = vmul.f32 %v3183, 0.015625
  %v3244 = vmul.f32 %v3186, 0.015625
  %v3245 = vmul.f32 %v3189, 0.015625
  %v3246 = vmul.f32 %v3192, 0.015625
  %v3247 = vmul.f32 %v3195, 0.015625
  %v3248 = vmul.f32 %v3198, 0.015625
  %v3249 = vmul.f32 %v3201, 0.015625
  %v3250 = vmul.f32 %v3204, 0.015625
  %v3251 = vmul.f32 %v3207, 0.015625
  %v3252 = vmul.f32 %v3210, 0.015625
  %v3253 = vmul.f32 %v3213, 0.015625
  %v3254 = vmul.f32 %v3216, 0.015625
  %v3255 = vmul.f32 %v3219, 0.015625
  %v3256 = vmul.f32 %v3222, 0.015625
  %v3257 = vmul.f32 %v3225, 0.015625
  %v3258 = vmul.f32 %v3002, %v3002
  %v3259 = vmul.f32 %v3005, %v3005
  %v3260 = vmul.f32 %v3010, %v3010
  %v3261 = vmul.f32 %v3013, %v3013
  %v3262 = vmul.f32 %v3018, %v3018
  %v3263 = vmul.f32 %v3021, %v3021
  %v3264 = vmul.f32 %v3026, %v3026
  %v3265 = vmul.f32 %v3029, %v3029
  %v3266 = vmul.f32 %v3034, %v3034
  %v3267 = vmul.f32 %v3037, %v3037
  %v3268 = vmul.f32 %v3042, %v3042
  %v3269 = vmul.f32 %v3045, %v3045
  %v3270 = vmul.f32 %v3050, %v3050
  %v3271 = vmul.f32 %v3053, %v3053
  %v3272 = vmul.f32 %v3058, %v3058
  %v3273 = vmul.f32 %v3061, %v3061
  %v3274 = vmul.f32 %v3066, %v3066
  %v3275 = vmul.f32 %v3069, %v3069
  %v3276 = vmul.f32 %v3074, %v3074
  %v3277 = vmul.f32 %v3077, %v3077
  %v3278 = vmul.f32 %v3082, %v3082
  %v3279 = vmul.f32 %v3085, %v3085
  %v3280 = vmul.f32 %v3090, %v3090
  %v3281 = vmul.f32 %v3093, %v3093
  %v3282 = vmul.f32 %v3098, %v3098
  %v3283 = vmul.f32 %v3101, %v3101
  %v3284 = vmul.f32 %v3106, %v3106
  %v3285 = vmul.f32 %v3109, %v3109
  %v3286 = vmul.f32 %v3114, %v3114
  %v3287 = vmul.f32 %v3117, %v3117
  %v3288 = vmul.f32 %v3122, %v3122
  %v3289 = vmul.f32 %v3125, %v3125
  %v3290 = vsel %vm360, %v3258, 0.0
  %3291 = vadd.xlane.f32.xlu0 %v3290
  %v3292 = vpop.xlane.xlu0 %3291
  %v3293 = vsel %vm360, %v3259, 0.0
  %3294 = vadd.xlane.f32.xlu0 %v3293
  %v3295 = vpop.xlane.xlu0 %3294
  %v3296 = vsel %vm360, %v3260, 0.0
  %3297 = vadd.xlane.f32.xlu0 %v3296
  %v3298 = vpop.xlane.xlu0 %3297
  %v3299 = vsel %vm360, %v3261, 0.0
  %3300 = vadd.xlane.f32.xlu0 %v3299
  %v3301 = vpop.xlane.xlu0 %3300
  %v3302 = vsel %vm360, %v3262, 0.0
  %3303 = vadd.xlane.f32.xlu0 %v3302
  %v3304 = vpop.xlane.xlu0 %3303
  %v3305 = vsel %vm360, %v3263, 0.0
  %3306 = vadd.xlane.f32.xlu0 %v3305
  %v3307 = vpop.xlane.xlu0 %3306
  %v3308 = vsel %vm360, %v3264, 0.0
  %3309 = vadd.xlane.f32.xlu0 %v3308
  %v3310 = vpop.xlane.xlu0 %3309
  %v3311 = vsel %vm360, %v3265, 0.0
  %3312 = vadd.xlane.f32.xlu0 %v3311
  %v3313 = vpop.xlane.xlu0 %3312
  %v3314 = vsel %vm360, %v3266, 0.0
  %3315 = vadd.xlane.f32.xlu0 %v3314
  %v3316 = vpop.xlane.xlu0 %3315
  %v3317 = vsel %vm360, %v3267, 0.0
  %3318 = vadd.xlane.f32.xlu0 %v3317
  %v3319 = vpop.xlane.xlu0 %3318
  %v3320 = vsel %vm360, %v3268, 0.0
  %3321 = vadd.xlane.f32.xlu0 %v3320
  %v3322 = vpop.xlane.xlu0 %3321
  %v3323 = vsel %vm360, %v3269, 0.0
  %3324 = vadd.xlane.f32.xlu0 %v3323
  %v3325 = vpop.xlane.xlu0 %3324
  %v3326 = vsel %vm360, %v3270, 0.0
  %3327 = vadd.xlane.f32.xlu0 %v3326
  %v3328 = vpop.xlane.xlu0 %3327
  %v3329 = vsel %vm360, %v3271, 0.0
  %3330 = vadd.xlane.f32.xlu0 %v3329
  %v3331 = vpop.xlane.xlu0 %3330
  %v3332 = vsel %vm360, %v3272, 0.0
  %3333 = vadd.xlane.f32.xlu0 %v3332
  %v3334 = vpop.xlane.xlu0 %3333
  %v3335 = vsel %vm360, %v3273, 0.0
  %3336 = vadd.xlane.f32.xlu0 %v3335
  %v3337 = vpop.xlane.xlu0 %3336
  %v3338 = vsel %vm360, %v3274, 0.0
  %3339 = vadd.xlane.f32.xlu0 %v3338
  %v3340 = vpop.xlane.xlu0 %3339
  %v3341 = vsel %vm360, %v3275, 0.0
  %3342 = vadd.xlane.f32.xlu0 %v3341
  %v3343 = vpop.xlane.xlu0 %3342
  %v3344 = vsel %vm360, %v3276, 0.0
  %3345 = vadd.xlane.f32.xlu0 %v3344
  %v3346 = vpop.xlane.xlu0 %3345
  %v3347 = vsel %vm360, %v3277, 0.0
  %3348 = vadd.xlane.f32.xlu0 %v3347
  %v3349 = vpop.xlane.xlu0 %3348
  %v3350 = vsel %vm360, %v3278, 0.0
  %3351 = vadd.xlane.f32.xlu0 %v3350
  %v3352 = vpop.xlane.xlu0 %3351
  %v3353 = vsel %vm360, %v3279, 0.0
  %3354 = vadd.xlane.f32.xlu0 %v3353
  %v3355 = vpop.xlane.xlu0 %3354
  %v3356 = vsel %vm360, %v3280, 0.0
  %3357 = vadd.xlane.f32.xlu0 %v3356
  %v3358 = vpop.xlane.xlu0 %3357
  %v3359 = vsel %vm360, %v3281, 0.0
  %3360 = vadd.xlane.f32.xlu0 %v3359
  %v3361 = vpop.xlane.xlu0 %3360
  %v3362 = vsel %vm360, %v3282, 0.0
  %3363 = vadd.xlane.f32.xlu0 %v3362
  %v3364 = vpop.xlane.xlu0 %3363
  %v3365 = vsel %vm360, %v3283, 0.0
  %3366 = vadd.xlane.f32.xlu0 %v3365
  %v3367 = vpop.xlane.xlu0 %3366
  %v3368 = vsel %vm360, %v3284, 0.0
  %3369 = vadd.xlane.f32.xlu0 %v3368
  %v3370 = vpop.xlane.xlu0 %3369
  %v3371 = vsel %vm360, %v3285, 0.0
  %3372 = vadd.xlane.f32.xlu0 %v3371
  %v3373 = vpop.xlane.xlu0 %3372
  %v3374 = vsel %vm360, %v3286, 0.0
  %3375 = vadd.xlane.f32.xlu0 %v3374
  %v3376 = vpop.xlane.xlu0 %3375
  %v3377 = vsel %vm360, %v3287, 0.0
  %3378 = vadd.xlane.f32.xlu0 %v3377
  %v3379 = vpop.xlane.xlu0 %3378
  %v3380 = vsel %vm360, %v3288, 0.0
  %3381 = vadd.xlane.f32.xlu0 %v3380
  %v3382 = vpop.xlane.xlu0 %3381
  %v3383 = vsel %vm360, %v3289, 0.0
  %3384 = vadd.xlane.f32.xlu0 %v3383
  %v3385 = vpop.xlane.xlu0 %3384
  %v3386 = vmul.f32 %v3292, 0.015625
  %v3387 = vmul.f32 %v3295, 0.015625
  %v3388 = vmul.f32 %v3298, 0.015625
  %v3389 = vmul.f32 %v3301, 0.015625
  %v3390 = vmul.f32 %v3304, 0.015625
  %v3391 = vmul.f32 %v3307, 0.015625
  %v3392 = vmul.f32 %v3310, 0.015625
  %v3393 = vmul.f32 %v3313, 0.015625
  %v3394 = vmul.f32 %v3316, 0.015625
  %v3395 = vmul.f32 %v3319, 0.015625
  %v3396 = vmul.f32 %v3322, 0.015625
  %v3397 = vmul.f32 %v3325, 0.015625
  %v3398 = vmul.f32 %v3328, 0.015625
  %v3399 = vmul.f32 %v3331, 0.015625
  %v3400 = vmul.f32 %v3334, 0.015625
  %v3401 = vmul.f32 %v3337, 0.015625
  %v3402 = vmul.f32 %v3340, 0.015625
  %v3403 = vmul.f32 %v3343, 0.015625
  %v3404 = vmul.f32 %v3346, 0.015625
  %v3405 = vmul.f32 %v3349, 0.015625
  %v3406 = vmul.f32 %v3352, 0.015625
  %v3407 = vmul.f32 %v3355, 0.015625
  %v3408 = vmul.f32 %v3358, 0.015625
  %v3409 = vmul.f32 %v3361, 0.015625
  %v3410 = vmul.f32 %v3364, 0.015625
  %v3411 = vmul.f32 %v3367, 0.015625
  %v3412 = vmul.f32 %v3370, 0.015625
  %v3413 = vmul.f32 %v3373, 0.015625
  %v3414 = vmul.f32 %v3376, 0.015625
  %v3415 = vmul.f32 %v3379, 0.015625
  %v3416 = vmul.f32 %v3382, 0.015625
  %v3417 = vmul.f32 %v3385, 0.015625
  %v3418 = vmul.f32 %v3226, %v3226
  %v3419 = vmul.f32 %v3227, %v3227
  %v3420 = vmul.f32 %v3228, %v3228
  %v3421 = vmul.f32 %v3229, %v3229
  %v3422 = vmul.f32 %v3230, %v3230
  %v3423 = vmul.f32 %v3231, %v3231
  %v3424 = vmul.f32 %v3232, %v3232
  %v3425 = vmul.f32 %v3233, %v3233
  %v3426 = vmul.f32 %v3234, %v3234
  %v3427 = vmul.f32 %v3235, %v3235
  %v3428 = vmul.f32 %v3236, %v3236
  %v3429 = vmul.f32 %v3237, %v3237
  %v3430 = vmul.f32 %v3238, %v3238
  %v3431 = vmul.f32 %v3239, %v3239
  %v3432 = vmul.f32 %v3240, %v3240
  %v3433 = vmul.f32 %v3241, %v3241
  %v3434 = vmul.f32 %v3242, %v3242
  %v3435 = vmul.f32 %v3243, %v3243
  %v3436 = vmul.f32 %v3244, %v3244
  %v3437 = vmul.f32 %v3245, %v3245
  %v3438 = vmul.f32 %v3246, %v3246
  %v3439 = vmul.f32 %v3247, %v3247
  %v3440 = vmul.f32 %v3248, %v3248
  %v3441 = vmul.f32 %v3249, %v3249
  %v3442 = vmul.f32 %v3250, %v3250
  %v3443 = vmul.f32 %v3251, %v3251
  %v3444 = vmul.f32 %v3252, %v3252
  %v3445 = vmul.f32 %v3253, %v3253
  %v3446 = vmul.f32 %v3254, %v3254
  %v3447 = vmul.f32 %v3255, %v3255
  %v3448 = vmul.f32 %v3256, %v3256
  %v3449 = vmul.f32 %v3257, %v3257
  %v3450 = vsub.f32 %v3386, %v3418
  %v3451 = vsub.f32 %v3387, %v3419
  %v3452 = vsub.f32 %v3388, %v3420
  %v3453 = vsub.f32 %v3389, %v3421
  %v3454 = vsub.f32 %v3390, %v3422
  %v3455 = vsub.f32 %v3391, %v3423
  %v3456 = vsub.f32 %v3392, %v3424
  %v3457 = vsub.f32 %v3393, %v3425
  %v3458 = vsub.f32 %v3394, %v3426
  %v3459 = vsub.f32 %v3395, %v3427
  %v3460 = vsub.f32 %v3396, %v3428
  %v3461 = vsub.f32 %v3397, %v3429
  %v3462 = vsub.f32 %v3398, %v3430
  %v3463 = vsub.f32 %v3399, %v3431
  %v3464 = vsub.f32 %v3400, %v3432
  %v3465 = vsub.f32 %v3401, %v3433
  %v3466 = vsub.f32 %v3402, %v3434
  %v3467 = vsub.f32 %v3403, %v3435
  %v3468 = vsub.f32 %v3404, %v3436
  %v3469 = vsub.f32 %v3405, %v3437
  %v3470 = vsub.f32 %v3406, %v3438
  %v3471 = vsub.f32 %v3407, %v3439
  %v3472 = vsub.f32 %v3408, %v3440
  %v3473 = vsub.f32 %v3409, %v3441
  %v3474 = vsub.f32 %v3410, %v3442
  %v3475 = vsub.f32 %v3411, %v3443
  %v3476 = vsub.f32 %v3412, %v3444
  %v3477 = vsub.f32 %v3413, %v3445
  %v3478 = vsub.f32 %v3414, %v3446
  %v3479 = vsub.f32 %v3415, %v3447
  %v3480 = vsub.f32 %v3416, %v3448
  %v3481 = vsub.f32 %v3417, %v3449
  %v3482 = vsub.f32 %v3002, %v3226
  %v3483 = vsub.f32 %v3005, %v3227
  %v3484 = vsub.f32 %v3010, %v3228
  %v3485 = vsub.f32 %v3013, %v3229
  %v3486 = vsub.f32 %v3018, %v3230
  %v3487 = vsub.f32 %v3021, %v3231
  %v3488 = vsub.f32 %v3026, %v3232
  %v3489 = vsub.f32 %v3029, %v3233
  %v3490 = vsub.f32 %v3034, %v3234
  %v3491 = vsub.f32 %v3037, %v3235
  %v3492 = vsub.f32 %v3042, %v3236
  %v3493 = vsub.f32 %v3045, %v3237
  %v3494 = vsub.f32 %v3050, %v3238
  %v3495 = vsub.f32 %v3053, %v3239
  %v3496 = vsub.f32 %v3058, %v3240
  %v3497 = vsub.f32 %v3061, %v3241
  %v3498 = vsub.f32 %v3066, %v3242
  %v3499 = vsub.f32 %v3069, %v3243
  %v3500 = vsub.f32 %v3074, %v3244
  %v3501 = vsub.f32 %v3077, %v3245
  %v3502 = vsub.f32 %v3082, %v3246
  %v3503 = vsub.f32 %v3085, %v3247
  %v3504 = vsub.f32 %v3090, %v3248
  %v3505 = vsub.f32 %v3093, %v3249
  %v3506 = vsub.f32 %v3098, %v3250
  %v3507 = vsub.f32 %v3101, %v3251
  %v3508 = vsub.f32 %v3106, %v3252
  %v3509 = vsub.f32 %v3109, %v3253
  %v3510 = vsub.f32 %v3114, %v3254
  %v3511 = vsub.f32 %v3117, %v3255
  %v3512 = vsub.f32 %v3122, %v3256
  %v3513 = vsub.f32 %v3125, %v3257
  %v3514 = vadd.f32 %v3450, 1e-05
  %v3515 = vadd.f32 %v3451, 1e-05
  %v3516 = vadd.f32 %v3452, 1e-05
  %v3517 = vadd.f32 %v3453, 1e-05
  %v3518 = vadd.f32 %v3454, 1e-05
  %v3519 = vadd.f32 %v3455, 1e-05
  %v3520 = vadd.f32 %v3456, 1e-05
  %v3521 = vadd.f32 %v3457, 1e-05
  %v3522 = vadd.f32 %v3458, 1e-05
  %v3523 = vadd.f32 %v3459, 1e-05
  %v3524 = vadd.f32 %v3460, 1e-05
  %v3525 = vadd.f32 %v3461, 1e-05
  %v3526 = vadd.f32 %v3462, 1e-05
  %v3527 = vadd.f32 %v3463, 1e-05
  %v3528 = vadd.f32 %v3464, 1e-05
  %v3529 = vadd.f32 %v3465, 1e-05
  %v3530 = vadd.f32 %v3466, 1e-05
  %v3531 = vadd.f32 %v3467, 1e-05
  %v3532 = vadd.f32 %v3468, 1e-05
  %v3533 = vadd.f32 %v3469, 1e-05
  %v3534 = vadd.f32 %v3470, 1e-05
  %v3535 = vadd.f32 %v3471, 1e-05
  %v3536 = vadd.f32 %v3472, 1e-05
  %v3537 = vadd.f32 %v3473, 1e-05
  %v3538 = vadd.f32 %v3474, 1e-05
  %v3539 = vadd.f32 %v3475, 1e-05
  %v3540 = vadd.f32 %v3476, 1e-05
  %v3541 = vadd.f32 %v3477, 1e-05
  %v3542 = vadd.f32 %v3478, 1e-05
  %v3543 = vadd.f32 %v3479, 1e-05
  %v3544 = vadd.f32 %v3480, 1e-05
  %v3545 = vadd.f32 %v3481, 1e-05
  %v3546 = vrsqrt.pop %v3514
  %v3547 = vrsqrt.pop %v3515
  %v3548 = vrsqrt.pop %v3516
  %v3549 = vrsqrt.pop %v3517
  %v3550 = vrsqrt.pop %v3518
  %v3551 = vrsqrt.pop %v3519
  %v3552 = vrsqrt.pop %v3520
  %v3553 = vrsqrt.pop %v3521
  %v3554 = vrsqrt.pop %v3522
  %v3555 = vrsqrt.pop %v3523
  %v3556 = vrsqrt.pop %v3524
  %v3557 = vrsqrt.pop %v3525
  %v3558 = vrsqrt.pop %v3526
  %v3559 = vrsqrt.pop %v3527
  %v3560 = vrsqrt.pop %v3528
  %v3561 = vrsqrt.pop %v3529
  %v3562 = vrsqrt.pop %v3530
  %v3563 = vrsqrt.pop %v3531
  %v3564 = vrsqrt.pop %v3532
  %v3565 = vrsqrt.pop %v3533
  %v3566 = vrsqrt.pop %v3534
  %v3567 = vrsqrt.pop %v3535
  %v3568 = vrsqrt.pop %v3536
  %v3569 = vrsqrt.pop %v3537
  %v3570 = vrsqrt.pop %v3538
  %v3571 = vrsqrt.pop %v3539
  %v3572 = vrsqrt.pop %v3540
  %v3573 = vrsqrt.pop %v3541
  %v3574 = vrsqrt.pop %v3542
  %v3575 = vrsqrt.pop %v3543
  %v3576 = vrsqrt.pop %v3544
  %v3577 = vrsqrt.pop %v3545
  %v3578 = vmul.f32 %v3482, %v3546
  %v3579 = vmul.f32 %v3483, %v3547
  %v3580 = vmul.f32 %v3484, %v3548
  %v3581 = vmul.f32 %v3485, %v3549
  %v3582 = vmul.f32 %v3486, %v3550
  %v3583 = vmul.f32 %v3487, %v3551
  %v3584 = vmul.f32 %v3488, %v3552
  %v3585 = vmul.f32 %v3489, %v3553
  %v3586 = vmul.f32 %v3490, %v3554
  %v3587 = vmul.f32 %v3491, %v3555
  %v3588 = vmul.f32 %v3492, %v3556
  %v3589 = vmul.f32 %v3493, %v3557
  %v3590 = vmul.f32 %v3494, %v3558
  %v3591 = vmul.f32 %v3495, %v3559
  %v3592 = vmul.f32 %v3496, %v3560
  %v3593 = vmul.f32 %v3497, %v3561
  %v3594 = vmul.f32 %v3498, %v3562
  %v3595 = vmul.f32 %v3499, %v3563
  %v3596 = vmul.f32 %v3500, %v3564
  %v3597 = vmul.f32 %v3501, %v3565
  %v3598 = vmul.f32 %v3502, %v3566
  %v3599 = vmul.f32 %v3503, %v3567
  %v3600 = vmul.f32 %v3504, %v3568
  %v3601 = vmul.f32 %v3505, %v3569
  %v3602 = vmul.f32 %v3506, %v3570
  %v3603 = vmul.f32 %v3507, %v3571
  %v3604 = vmul.f32 %v3508, %v3572
  %v3605 = vmul.f32 %v3509, %v3573
  %v3606 = vmul.f32 %v3510, %v3574
  %v3607 = vmul.f32 %v3511, %v3575
  %v3608 = vmul.f32 %v3512, %v3576
  %v3609 = vmul.f32 %v3513, %v3577
  %v3611 = vlaneseq
  %v3612 = vshrl.u32 %v3611, 7
  %v3613 = vsub.s32 0, %v3612
  %v3614 = vrot.slane %v3128, %v3613
  %v3616 = vmul.f32 %v3578, %v3614
  %v3617 = vmul.f32 %v3579, %v3614
  %v3618 = vmul.f32 %v3580, %v3614
  %v3619 = vmul.f32 %v3581, %v3614
  %v3620 = vmul.f32 %v3582, %v3614
  %v3621 = vmul.f32 %v3583, %v3614
  %v3622 = vmul.f32 %v3584, %v3614
  %v3623 = vmul.f32 %v3585, %v3614
  %v3624 = vmul.f32 %v3586, %v3614
  %v3625 = vmul.f32 %v3587, %v3614
  %v3626 = vmul.f32 %v3588, %v3614
  %v3627 = vmul.f32 %v3589, %v3614
  %v3628 = vmul.f32 %v3590, %v3614
  %v3629 = vmul.f32 %v3591, %v3614
  %v3630 = vmul.f32 %v3592, %v3614
  %v3631 = vmul.f32 %v3593, %v3614
  %v3632 = vmul.f32 %v3594, %v3614
  %v3633 = vmul.f32 %v3595, %v3614
  %v3634 = vmul.f32 %v3596, %v3614
  %v3635 = vmul.f32 %v3597, %v3614
  %v3636 = vmul.f32 %v3598, %v3614
  %v3637 = vmul.f32 %v3599, %v3614
  %v3638 = vmul.f32 %v3600, %v3614
  %v3639 = vmul.f32 %v3601, %v3614
  %v3640 = vmul.f32 %v3602, %v3614
  %v3641 = vmul.f32 %v3603, %v3614
  %v3642 = vmul.f32 %v3604, %v3614
  %v3643 = vmul.f32 %v3605, %v3614
  %v3644 = vmul.f32 %v3606, %v3614
  %v3645 = vmul.f32 %v3607, %v3614
  %v3646 = vmul.f32 %v3608, %v3614
  %v3647 = vmul.f32 %v3609, %v3614
  %v3649 = vlaneseq
  %v3650 = vshrl.u32 %v3649, 7
  %v3651 = vsub.s32 0, %v3650
  %v3652 = vrot.slane %v3129, %v3651
  %v3654 = vadd.f32 %v3616, %v3652
  %v3655 = vadd.f32 %v3617, %v3652
  %v3656 = vadd.f32 %v3618, %v3652
  %v3657 = vadd.f32 %v3619, %v3652
  %v3658 = vadd.f32 %v3620, %v3652
  %v3659 = vadd.f32 %v3621, %v3652
  %v3660 = vadd.f32 %v3622, %v3652
  %v3661 = vadd.f32 %v3623, %v3652
  %v3662 = vadd.f32 %v3624, %v3652
  %v3663 = vadd.f32 %v3625, %v3652
  %v3664 = vadd.f32 %v3626, %v3652
  %v3665 = vadd.f32 %v3627, %v3652
  %v3666 = vadd.f32 %v3628, %v3652
  %v3667 = vadd.f32 %v3629, %v3652
  %v3668 = vadd.f32 %v3630, %v3652
  %v3669 = vadd.f32 %v3631, %v3652
  %v3670 = vadd.f32 %v3632, %v3652
  %v3671 = vadd.f32 %v3633, %v3652
  %v3672 = vadd.f32 %v3634, %v3652
  %v3673 = vadd.f32 %v3635, %v3652
  %v3674 = vadd.f32 %v3636, %v3652
  %v3675 = vadd.f32 %v3637, %v3652
  %v3676 = vadd.f32 %v3638, %v3652
  %v3677 = vadd.f32 %v3639, %v3652
  %v3678 = vadd.f32 %v3640, %v3652
  %v3679 = vadd.f32 %v3641, %v3652
  %v3680 = vadd.f32 %v3642, %v3652
  %v3681 = vadd.f32 %v3643, %v3652
  %v3682 = vadd.f32 %v3644, %v3652
  %v3683 = vadd.f32 %v3645, %v3652
  %v3684 = vadd.f32 %v3646, %v3652
  %v3685 = vadd.f32 %v3647, %v3652
  %v3686 = vmax.f32 %v3654, 0.0
  %v3687 = vmax.f32 %v3655, 0.0
  %v3688 = vmax.f32 %v3656, 0.0
  %v3689 = vmax.f32 %v3657, 0.0
  %v3690 = vmax.f32 %v3658, 0.0
  %v3691 = vmax.f32 %v3659, 0.0
  %v3692 = vmax.f32 %v3660, 0.0
  %v3693 = vmax.f32 %v3661, 0.0
  %v3694 = vmax.f32 %v3662, 0.0
  %v3695 = vmax.f32 %v3663, 0.0
  %v3696 = vmax.f32 %v3664, 0.0
  %v3697 = vmax.f32 %v3665, 0.0
  %v3698 = vmax.f32 %v3666, 0.0
  %v3699 = vmax.f32 %v3667, 0.0
  %v3700 = vmax.f32 %v3668, 0.0
  %v3701 = vmax.f32 %v3669, 0.0
  %v3702 = vmax.f32 %v3670, 0.0
  %v3703 = vmax.f32 %v3671, 0.0
  %v3704 = vmax.f32 %v3672, 0.0
  %v3705 = vmax.f32 %v3673, 0.0
  %v3706 = vmax.f32 %v3674, 0.0
  %v3707 = vmax.f32 %v3675, 0.0
  %v3708 = vmax.f32 %v3676, 0.0
  %v3709 = vmax.f32 %v3677, 0.0
  %v3710 = vmax.f32 %v3678, 0.0
  %v3711 = vmax.f32 %v3679, 0.0
  %v3712 = vmax.f32 %v3680, 0.0
  %v3713 = vmax.f32 %v3681, 0.0
  %v3714 = vmax.f32 %v3682, 0.0
  %v3715 = vmax.f32 %v3683, 0.0
  %v3716 = vmax.f32 %v3684, 0.0
  %v3717 = vmax.f32 %v3685, 0.0
  %v3718 = vpack.c.bf16 %v3687, %v3686
  %v3719 = vpack.c.bf16 %v3689, %v3688
  %v3720 = vpack.c.bf16 %v3691, %v3690
  %v3721 = vpack.c.bf16 %v3693, %v3692
  %v3722 = vpack.c.bf16 %v3695, %v3694
  %v3723 = vpack.c.bf16 %v3697, %v3696
  %v3724 = vpack.c.bf16 %v3699, %v3698
  %v3725 = vpack.c.bf16 %v3701, %v3700
  %v3726 = vpack.c.bf16 %v3703, %v3702
  %v3727 = vpack.c.bf16 %v3705, %v3704
  %v3728 = vpack.c.bf16 %v3707, %v3706
  %v3729 = vpack.c.bf16 %v3709, %v3708
  %v3730 = vpack.c.bf16 %v3711, %v3710
  %v3731 = vpack.c.bf16 %v3713, %v3712
  %v3732 = vpack.c.bf16 %v3715, %v3714
  %v3733 = vpack.c.bf16 %v3717, %v3716
  %v3734 = vld [vmem:[%s18] sm:$0xf]
  %v3735 = vld [vmem:[%s18 + $0x4] sm:$0xf]
  %v3736 = vld [vmem:[%s18 + $0x8] sm:$0xf]
  %v3737 = vld [vmem:[%s18 + $0xc] sm:$0xf]
  %v3738 = vld [vmem:[%s18 + $0x10] sm:$0xf]
  %v3739 = vld [vmem:[%s18 + $0x14] sm:$0xf]
  %v3740 = vld [vmem:[%s18 + $0x18] sm:$0xf]
  %v3741 = vld [vmem:[%s18 + $0x1c] sm:$0xf]
  %v3742 = vld [vmem:[%s19] sm:$0x1]
  %v3744 = vlaneseq
  %v3745 = vshrl.u32 %v3744, 7
  %v3746 = vsub.s32 0, %v3745
  %v3747 = vrot.slane %v3742, %v3746
  %v3757 = vunpack.c.l.b16 %v3734
  %v3758 = vunpack.c.l.b16 %v3735
  %v3759 = vunpack.c.l.b16 %v3736
  %v3760 = vunpack.c.l.b16 %v3737
  %v3761 = vunpack.c.l.b16 %v3738
  %v3762 = vunpack.c.l.b16 %v3739
  %v3763 = vunpack.c.l.b16 %v3740
  %v3764 = vunpack.c.l.b16 %v3741
  %v3765 = vpack.c.b16 %v3758, %v3757
  %v3766 = vpack.c.b16 %v3760, %v3759
  %v3767 = vpack.c.b16 %v3762, %v3761
  %v3768 = vpack.c.b16 %v3764, %v3763
  %v3774 = vsel %vm360, %v3718, 0
  %v3777 = vsel %vm360, %v3719, 0
  %v3780 = vsel %vm360, %v3720, 0
  %v3783 = vsel %vm360, %v3721, 0
  %v3786 = vsel %vm360, %v3722, 0
  %v3789 = vsel %vm360, %v3723, 0
  %v3792 = vsel %vm360, %v3724, 0
  %v3795 = vsel %vm360, %v3725, 0
  %v3798 = vsel %vm360, %v3726, 0
  %v3801 = vsel %vm360, %v3727, 0
  %v3804 = vsel %vm360, %v3728, 0
  %v3807 = vsel %vm360, %v3729, 0
  %v3810 = vsel %vm360, %v3730, 0
  %v3813 = vsel %vm360, %v3731, 0
  %v3816 = vsel %vm360, %v3732, 0
  %v3819 = vsel %vm360, %v3733, 0
  %3821 = vmatprep.subr.bf16.mxu0 0
  %3822 = vmatpush1.bf16.msra.mxu0 %v3765
  %3823 = vmatprep.subr.bf16.mxu0 0
  %3824 = vmatpush1.bf16.msra.mxu0 %v3766
  %3825 = vmatprep.subr.bf16.mxu0 0
  %3826 = vmatpush1.bf16.msra.mxu0 %v3767
  %3827 = vmatprep.subr.bf16.mxu0 0
  %3828 = vmatpush1.bf16.msra.mxu0 %v3768
  %3829 = vmatprep.subr.bf16.mxu0 0
  %3830 = vmatpush1.bf16.msra.mxu0 0
  %3831 = vmatprep.subr.bf16.mxu0 0
  %3832 = vmatpush1.bf16.msra.mxu0 0
  %3833 = vmatprep.subr.bf16.mxu0 0
  %3834 = vmatpush1.bf16.msra.mxu0 0
  %3835 = vmatprep.subr.bf16.mxu0 0
  %3836 = vmatpush1.bf16.msra.mxu0 0
  %3837 = vmatprep.subr.bf16.mxu0 0
  %3838 = vmatpush1.bf16.msra.mxu0 0
  %3839 = vmatprep.subr.bf16.mxu0 0
  %3840 = vmatpush1.bf16.msra.mxu0 0
  %3841 = vmatprep.subr.bf16.mxu0 0
  %3842 = vmatpush1.bf16.msra.mxu0 0
  %3843 = vmatprep.subr.bf16.mxu0 0
  %3844 = vmatpush1.bf16.msra.mxu0 0
  %3845 = vmatprep.subr.bf16.mxu0 0
  %3846 = vmatpush1.bf16.msra.mxu0 0
  %3847 = vmatprep.subr.bf16.mxu0 0
  %3848 = vmatpush1.bf16.msra.mxu0 0
  %3849 = vmatprep.subr.bf16.mxu0 0
  %3850 = vmatpush1.bf16.msra.mxu0 0
  %3851 = vmatprep.subr.bf16.mxu0 0
  %3852 = vmatpush1.bf16.msra.mxu0 0
  %3853 = vmatprep.mubr.bf16.mxu0 0
  %3854 = vmatmul.mubr.bf16.gmra.mrb[0].mxu0 %v3774
  %v3855 = vpop.f32.mrb[0].mxu0
  %v3856 = vadd.f32 %v3747, %v3855
  %v3857 = vpop.f32.mrb[0].mxu0
  %v3858 = vpop.f32.mrb[0].mxu0
  %v3859 = vadd.f32 %v3747, %v3858
  %v3860 = vpop.f32.mrb[0].mxu0
  %3861 = vmatprep.mubr.bf16.mxu0 0
  %3862 = vmatmul.mubr.bf16.gmra.mrb[0].mxu0 %v3777
  %v3863 = vpop.f32.mrb[0].mxu0
  %v3864 = vadd.f32 %v3747, %v3863
  %v3865 = vpop.f32.mrb[0].mxu0
  %v3866 = vpop.f32.mrb[0].mxu0
  %v3867 = vadd.f32 %v3747, %v3866
  %v3868 = vpop.f32.mrb[0].mxu0
  %3869 = vmatprep.mubr.bf16.mxu0 0
  %3870 = vmatmul.mubr.bf16.gmra.mrb[0].mxu0 %v3780
  %v3871 = vpop.f32.mrb[0].mxu0
  %v3872 = vadd.f32 %v3747, %v3871
  %v3873 = vpop.f32.mrb[0].mxu0
  %v3874 = vpop.f32.mrb[0].mxu0
  %v3875 = vadd.f32 %v3747, %v3874
  %v3876 = vpop.f32.mrb[0].mxu0
  %3877 = vmatprep.mubr.bf16.mxu0 0
  %3878 = vmatmul.mubr.bf16.gmra.mrb[0].mxu0 %v3783
  %v3879 = vpop.f32.mrb[0].mxu0
  %v3880 = vadd.f32 %v3747, %v3879
  %v3881 = vpop.f32.mrb[0].mxu0
  %v3882 = vpop.f32.mrb[0].mxu0
  %v3883 = vadd.f32 %v3747, %v3882
  %v3884 = vpop.f32.mrb[0].mxu0
  %3885 = vmatprep.mubr.bf16.mxu0 0
  %3886 = vmatmul.mubr.bf16.gmra.mrb[0].mxu0 %v3786
  %v3887 = vpop.f32.mrb[0].mxu0
  %v3888 = vadd.f32 %v3747, %v3887
  %v3889 = vpop.f32.mrb[0].mxu0
  %v3890 = vpop.f32.mrb[0].mxu0
  %v3891 = vadd.f32 %v3747, %v3890
  %v3892 = vpop.f32.mrb[0].mxu0
  %3893 = vmatprep.mubr.bf16.mxu0 0
  %3894 = vmatmul.mubr.bf16.gmra.mrb[0].mxu0 %v3789
  %v3895 = vpop.f32.mrb[0].mxu0
  %v3896 = vadd.f32 %v3747, %v3895
  %v3897 = vpop.f32.mrb[0].mxu0
  %v3898 = vpop.f32.mrb[0].mxu0
  %v3899 = vadd.f32 %v3747, %v3898
  %v3900 = vpop.f32.mrb[0].mxu0
  %3901 = vmatprep.mubr.bf16.mxu0 0
  %3902 = vmatmul.mubr.bf16.gmra.mrb[0].mxu0 %v3792
  %v3903 = vpop.f32.mrb[0].mxu0
  %v3904 = vadd.f32 %v3747, %v3903
  %v3905 = vpop.f32.mrb[0].mxu0
  %v3906 = vpop.f32.mrb[0].mxu0
  %v3907 = vadd.f32 %v3747, %v3906
  %v3908 = vpop.f32.mrb[0].mxu0
  %3909 = vmatprep.mubr.bf16.mxu0 0
  %3910 = vmatmul.mubr.bf16.gmra.mrb[0].mxu0 %v3795
  %v3911 = vpop.f32.mrb[0].mxu0
  %v3912 = vadd.f32 %v3747, %v3911
  %v3913 = vpop.f32.mrb[0].mxu0
  %v3914 = vpop.f32.mrb[0].mxu0
  %v3915 = vadd.f32 %v3747, %v3914
  %v3916 = vpop.f32.mrb[0].mxu0
  %3917 = vmatprep.mubr.bf16.mxu0 0
  %3918 = vmatmul.mubr.bf16.gmra.mrb[0].mxu0 %v3798
  %v3919 = vpop.f32.mrb[0].mxu0
  %v3920 = vadd.f32 %v3747, %v3919
  %v3921 = vpop.f32.mrb[0].mxu0
  %v3922 = vpop.f32.mrb[0].mxu0
  %v3923 = vadd.f32 %v3747, %v3922
  %v3924 = vpop.f32.mrb[0].mxu0
  %3925 = vmatprep.mubr.bf16.mxu0 0
  %3926 = vmatmul.mubr.bf16.gmra.mrb[0].mxu0 %v3801
  %v3927 = vpop.f32.mrb[0].mxu0
  %v3928 = vadd.f32 %v3747, %v3927
  %v3929 = vpop.f32.mrb[0].mxu0
  %v3930 = vpop.f32.mrb[0].mxu0
  %v3931 = vadd.f32 %v3747, %v3930
  %v3932 = vpop.f32.mrb[0].mxu0
  %3933 = vmatprep.mubr.bf16.mxu0 0
  %3934 = vmatmul.mubr.bf16.gmra.mrb[0].mxu0 %v3804
  %v3935 = vpop.f32.mrb[0].mxu0
  %v3936 = vadd.f32 %v3747, %v3935
  %v3937 = vpop.f32.mrb[0].mxu0
  %v3938 = vpop.f32.mrb[0].mxu0
  %v3939 = vadd.f32 %v3747, %v3938
  %v3940 = vpop.f32.mrb[0].mxu0
  %3941 = vmatprep.mubr.bf16.mxu0 0
  %3942 = vmatmul.mubr.bf16.gmra.mrb[0].mxu0 %v3807
  %v3943 = vpop.f32.mrb[0].mxu0
  %v3944 = vadd.f32 %v3747, %v3943
  %v3945 = vpop.f32.mrb[0].mxu0
  %v3946 = vpop.f32.mrb[0].mxu0
  %v3947 = vadd.f32 %v3747, %v3946
  %v3948 = vpop.f32.mrb[0].mxu0
  %3949 = vmatprep.mubr.bf16.mxu0 0
  %3950 = vmatmul.mubr.bf16.gmra.mrb[0].mxu0 %v3810
  %v3951 = vpop.f32.mrb[0].mxu0
  %v3952 = vadd.f32 %v3747, %v3951
  %v3953 = vpop.f32.mrb[0].mxu0
  %v3954 = vpop.f32.mrb[0].mxu0
  %v3955 = vadd.f32 %v3747, %v3954
  %v3956 = vpop.f32.mrb[0].mxu0
  %3957 = vmatprep.mubr.bf16.mxu0 0
  %3958 = vmatmul.mubr.bf16.gmra.mrb[0].mxu0 %v3813
  %v3959 = vpop.f32.mrb[0].mxu0
  %v3960 = vadd.f32 %v3747, %v3959
  %v3961 = vpop.f32.mrb[0].mxu0
  %v3962 = vpop.f32.mrb[0].mxu0
  %v3963 = vadd.f32 %v3747, %v3962
  %v3964 = vpop.f32.mrb[0].mxu0
  %3965 = vmatprep.mubr.bf16.mxu0 0
  %3966 = vmatmul.mubr.bf16.gmra.mrb[0].mxu0 %v3816
  %v3967 = vpop.f32.mrb[0].mxu0
  %v3968 = vadd.f32 %v3747, %v3967
  %v3969 = vpop.f32.mrb[0].mxu0
  %v3970 = vpop.f32.mrb[0].mxu0
  %v3971 = vadd.f32 %v3747, %v3970
  %v3972 = vpop.f32.mrb[0].mxu0
  %3973 = vmatprep.mubr.bf16.mxu0 0
  %3974 = vmatmul.mubr.bf16.gmra.mrb[0].mxu0 %v3819
  %v3975 = vpop.f32.mrb[0].mxu0
  %v3976 = vadd.f32 %v3747, %v3975
  %v3977 = vpop.f32.mrb[0].mxu0
  %v3978 = vpop.f32.mrb[0].mxu0
  %v3979 = vadd.f32 %v3747, %v3978
  %v3980 = vpop.f32.mrb[0].mxu0
  %3981 = vdwg.mxu0
  %v3982 = vlaneseq
  %v3983 = vand.u32 %v3982, 127
  %v3984 = vtanh.pop %v3856
  %v3985 = vtanh.pop %v3859
  %v3986 = vtanh.pop %v3864
  %v3987 = vtanh.pop %v3867
  %v3988 = vtanh.pop %v3872
  %v3989 = vtanh.pop %v3875
  %v3990 = vtanh.pop %v3880
  %v3991 = vtanh.pop %v3883
  %v3992 = vtanh.pop %v3888
  %v3993 = vtanh.pop %v3891
  %v3994 = vtanh.pop %v3896
  %v3995 = vtanh.pop %v3899
  %v3996 = vtanh.pop %v3904
  %v3997 = vtanh.pop %v3907
  %v3998 = vtanh.pop %v3912
  %v3999 = vtanh.pop %v3915
  %v4000 = vtanh.pop %v3920
  %v4001 = vtanh.pop %v3923
  %v4002 = vtanh.pop %v3928
  %v4003 = vtanh.pop %v3931
  %v4004 = vtanh.pop %v3936
  %v4005 = vtanh.pop %v3939
  %v4006 = vtanh.pop %v3944
  %v4007 = vtanh.pop %v3947
  %v4008 = vtanh.pop %v3952
  %v4009 = vtanh.pop %v3955
  %v4010 = vtanh.pop %v3960
  %v4011 = vtanh.pop %v3963
  %v4012 = vtanh.pop %v3968
  %v4013 = vtanh.pop %v3971
  %v4014 = vtanh.pop %v3976
  %v4015 = vtanh.pop %v3979
  %vm4016 = vcmp.lt.s32.totalorder %v3983, 2
  %v4017 = vsel %vm4016, %v3984, %v3856
  %v4018 = vsel %vm4016, %v3985, %v3859
  %v4019 = vsel %vm4016, %v3986, %v3864
  %v4020 = vsel %vm4016, %v3987, %v3867
  %v4021 = vsel %vm4016, %v3988, %v3872
  %v4022 = vsel %vm4016, %v3989, %v3875
  %v4023 = vsel %vm4016, %v3990, %v3880
  %v4024 = vsel %vm4016, %v3991, %v3883
  %v4025 = vsel %vm4016, %v3992, %v3888
  %v4026 = vsel %vm4016, %v3993, %v3891
  %v4027 = vsel %vm4016, %v3994, %v3896
  %v4028 = vsel %vm4016, %v3995, %v3899
  %v4029 = vsel %vm4016, %v3996, %v3904
  %v4030 = vsel %vm4016, %v3997, %v3907
  %v4031 = vsel %vm4016, %v3998, %v3912
  %v4032 = vsel %vm4016, %v3999, %v3915
  %v4033 = vsel %vm4016, %v4000, %v3920
  %v4034 = vsel %vm4016, %v4001, %v3923
  %v4035 = vsel %vm4016, %v4002, %v3928
  %v4036 = vsel %vm4016, %v4003, %v3931
  %v4037 = vsel %vm4016, %v4004, %v3936
  %v4038 = vsel %vm4016, %v4005, %v3939
  %v4039 = vsel %vm4016, %v4006, %v3944
  %v4040 = vsel %vm4016, %v4007, %v3947
  %v4041 = vsel %vm4016, %v4008, %v3952
  %v4042 = vsel %vm4016, %v4009, %v3955
  %v4043 = vsel %vm4016, %v4010, %v3960
  %v4044 = vsel %vm4016, %v4011, %v3963
  %v4045 = vsel %vm4016, %v4012, %v3968
  %v4046 = vsel %vm4016, %v4013, %v3971
  %v4047 = vsel %vm4016, %v4014, %v3976
  %v4048 = vsel %vm4016, %v4015, %v3979
  %v4049 = vpack.c.bf16 %v4018, %v4017
  %v4050 = vpack.c.bf16 %v4020, %v4019
  %v4051 = vpack.c.bf16 %v4022, %v4021
  %v4052 = vpack.c.bf16 %v4024, %v4023
  %v4053 = vpack.c.bf16 %v4026, %v4025
  %v4054 = vpack.c.bf16 %v4028, %v4027
  %v4055 = vpack.c.bf16 %v4030, %v4029
  %v4056 = vpack.c.bf16 %v4032, %v4031
  %v4057 = vpack.c.bf16 %v4034, %v4033
  %v4058 = vpack.c.bf16 %v4036, %v4035
  %v4059 = vpack.c.bf16 %v4038, %v4037
  %v4060 = vpack.c.bf16 %v4040, %v4039
  %v4061 = vpack.c.bf16 %v4042, %v4041
  %v4062 = vpack.c.bf16 %v4044, %v4043
  %v4063 = vpack.c.bf16 %v4046, %v4045
  %v4064 = vpack.c.bf16 %v4048, %v4047
  %v4081 = vunpack.c.l.b16 %v4049
  %v4082 = vunpack.c.h.b16 %v4049
  %v4083 = vunpack.c.l.b16 %v4050
  %v4084 = vunpack.c.h.b16 %v4050
  %v4085 = vunpack.c.l.b16 %v4051
  %v4086 = vunpack.c.h.b16 %v4051
  %v4087 = vunpack.c.l.b16 %v4052
  %v4088 = vunpack.c.h.b16 %v4052
  %v4089 = vunpack.c.l.b16 %v4053
  %v4090 = vunpack.c.h.b16 %v4053
  %v4091 = vunpack.c.l.b16 %v4054
  %v4092 = vunpack.c.h.b16 %v4054
  %v4093 = vunpack.c.l.b16 %v4055
  %v4094 = vunpack.c.h.b16 %v4055
  %v4095 = vunpack.c.l.b16 %v4056
  %v4096 = vunpack.c.h.b16 %v4056
  %v4097 = vunpack.c.l.b16 %v4057
  %v4098 = vunpack.c.h.b16 %v4057
  %v4099 = vunpack.c.l.b16 %v4058
  %v4100 = vunpack.c.h.b16 %v4058
  %v4101 = vunpack.c.l.b16 %v4059
  %v4102 = vunpack.c.h.b16 %v4059
  %v4103 = vunpack.c.l.b16 %v4060
  %v4104 = vunpack.c.h.b16 %v4060
  %v4105 = vunpack.c.l.b16 %v4061
  %v4106 = vunpack.c.h.b16 %v4061
  %v4107 = vunpack.c.l.b16 %v4062
  %v4108 = vunpack.c.h.b16 %v4062
  %v4109 = vunpack.c.l.b16 %v4063
  %v4110 = vunpack.c.h.b16 %v4063
  %v4111 = vunpack.c.l.b16 %v4064
  %v4112 = vunpack.c.h.b16 %v4064
  %v4113 = vpack.c.b16 %v4081, %v4081
  %v4114 = vpack.c.b16 %v4082, %v4082
  %v4115 = vpack.c.b16 %v4083, %v4083
  %v4116 = vpack.c.b16 %v4084, %v4084
  %v4117 = vpack.c.b16 %v4085, %v4085
  %v4118 = vpack.c.b16 %v4086, %v4086
  %v4119 = vpack.c.b16 %v4087, %v4087
  %v4120 = vpack.c.b16 %v4088, %v4088
  %v4121 = vpack.c.b16 %v4089, %v4089
  %v4122 = vpack.c.b16 %v4090, %v4090
  %v4123 = vpack.c.b16 %v4091, %v4091
  %v4124 = vpack.c.b16 %v4092, %v4092
  %v4125 = vpack.c.b16 %v4093, %v4093
  %v4126 = vpack.c.b16 %v4094, %v4094
  %v4127 = vpack.c.b16 %v4095, %v4095
  %v4128 = vpack.c.b16 %v4096, %v4096
  %v4129 = vpack.c.b16 %v4097, %v4097
  %v4130 = vpack.c.b16 %v4098, %v4098
  %v4131 = vpack.c.b16 %v4099, %v4099
  %v4132 = vpack.c.b16 %v4100, %v4100
  %v4133 = vpack.c.b16 %v4101, %v4101
  %v4134 = vpack.c.b16 %v4102, %v4102
  %v4135 = vpack.c.b16 %v4103, %v4103
  %v4136 = vpack.c.b16 %v4104, %v4104
  %v4137 = vpack.c.b16 %v4105, %v4105
  %v4138 = vpack.c.b16 %v4106, %v4106
  %v4139 = vpack.c.b16 %v4107, %v4107
  %v4140 = vpack.c.b16 %v4108, %v4108
  %v4141 = vpack.c.b16 %v4109, %v4109
  %v4142 = vpack.c.b16 %v4110, %v4110
  %v4143 = vpack.c.b16 %v4111, %v4111
  %v4144 = vpack.c.b16 %v4112, %v4112
  %4177 = vst [vmem:[%s20] sm:$0xf] %v4113
  %4178 = vst [vmem:[%s20 + $0x4] sm:$0xf] %v4114
  %4179 = vst [vmem:[%s20 + $0x8] sm:$0xf] %v4115
  %4180 = vst [vmem:[%s20 + $0xc] sm:$0xf] %v4116
  %4181 = vst [vmem:[%s20 + $0x10] sm:$0xf] %v4117
  %4182 = vst [vmem:[%s20 + $0x14] sm:$0xf] %v4118
  %4183 = vst [vmem:[%s20 + $0x18] sm:$0xf] %v4119
  %4184 = vst [vmem:[%s20 + $0x1c] sm:$0xf] %v4120
  %4185 = vst [vmem:[%s20 + $0x20] sm:$0xf] %v4121
  %4186 = vst [vmem:[%s20 + $0x24] sm:$0xf] %v4122
  %4187 = vst [vmem:[%s20 + $0x28] sm:$0xf] %v4123
  %4188 = vst [vmem:[%s20 + $0x2c] sm:$0xf] %v4124
  %4189 = vst [vmem:[%s20 + $0x30] sm:$0xf] %v4125
  %4190 = vst [vmem:[%s20 + $0x34] sm:$0xf] %v4126
  %4191 = vst [vmem:[%s20 + $0x38] sm:$0xf] %v4127
  %4192 = vst [vmem:[%s20 + $0x3c] sm:$0xf] %v4128
  %4193 = vst [vmem:[%s20 + $0x40] sm:$0xf] %v4129
  %4194 = vst [vmem:[%s20 + $0x44] sm:$0xf] %v4130
  %4195 = vst [vmem:[%s20 + $0x48] sm:$0xf] %v4131
  %4196 = vst [vmem:[%s20 + $0x4c] sm:$0xf] %v4132
  %4197 = vst [vmem:[%s20 + $0x50] sm:$0xf] %v4133
  %4198 = vst [vmem:[%s20 + $0x54] sm:$0xf] %v4134
  %4199 = vst [vmem:[%s20 + $0x58] sm:$0xf] %v4135
  %4200 = vst [vmem:[%s20 + $0x5c] sm:$0xf] %v4136
  %4201 = vst [vmem:[%s20 + $0x60] sm:$0xf] %v4137
  %4202 = vst [vmem:[%s20 + $0x64] sm:$0xf] %v4138
  %4203 = vst [vmem:[%s20 + $0x68] sm:$0xf] %v4139
  %4204 = vst [vmem:[%s20 + $0x6c] sm:$0xf] %v4140
  %4205 = vst [vmem:[%s20 + $0x70] sm:$0xf] %v4141
  %4206 = vst [vmem:[%s20 + $0x74] sm:$0xf] %v4142
  %4207 = vst [vmem:[%s20 + $0x78] sm:$0xf] %v4143
  %4208 = vst [vmem:[%s20 + $0x7c] sm:$0xf] %v4144
  // Predicated region
  $region82: #{combined_decoder_forward.1} parent=0 // pred_check
    _
  $region83: #{combined_decoder_forward.1} parent=0 // pred_check_branch
    %4210 = sbr.rel (0) target = $region85
  $region84: #{combined_decoder_forward.1} parent=0 // pred_region
    _
  $region85: #{combined_decoder_forward.1} parent=0 // pred_fallthru
    _
  // Predicated region
  $region86: #{combined_decoder_forward.1} parent=0 // pred_check
    _
  $region87: #{combined_decoder_forward.1} parent=0 // pred_check_branch
    %4212 = sbr.rel (0) target = $region89
  $region88: #{combined_decoder_forward.1} parent=0 // pred_region
    _
  $region89: #{combined_decoder_forward.1} parent=0 // pred_fallthru
    _

</llo_original>
